<compile_context>
chip_gen: v7x
topology: tpu7x:2x2x1
jax: 0.10.0
libtpu: 0.0.40
codegen_flags: <defaults>
</compile_context>

<pallas_src>
import jax
import jax.numpy as jnp
from jax.experimental import pallas as pl
from jax.experimental.pallas import tpu as pltpu


def _round_up(x, m):
    return ((x + m - 1) // m) * m


# -----------------------------------------------------------------------------
# Single fused kernel: folded Scalar2Vec + all LSTM layers + fc, one pallas_call.
# -----------------------------------------------------------------------------
def _make_fused_kernel(num_layers, seq_len, b_pad, hidden):
    four_h = 4 * hidden

    def kernel(*refs):
        # Inputs:  x_col (T*Bp, 1), v0 (1, 4H), k0 (1, 4H), whh0 (H, 4H),
        #          [wih_l (H, 4H), bias_l (1, 4H), whh_l (H, 4H)] for l = 1..L-1,
        #          fc_w (H, O), fc_b (1, O)
        # Output:  logits (Bp, O)
        # Scratch: gx (T*Bp, 4H) f32, hseq (T*Bp, H) f32, h (Bp, H) f32, c (Bp, H) f32
        n_in = 3 * num_layers + 3
        in_refs = refs[:n_in]
        o_ref = refs[n_in]
        gx, hseq, h_scr, c_scr = refs[n_in + 1:]

        x_ref, v0_ref, k0_ref = in_refs[:3]
        whh_refs = [in_refs[3]]
        wih_refs = [None]
        bias_refs = [None]
        p = 4
        for _ in range(num_layers - 1):
            wih_refs.append(in_refs[p])
            bias_refs.append(in_refs[p + 1])
            whh_refs.append(in_refs[p + 2])
            p += 3
        fcw_ref, fcb_ref = in_refs[p], in_refs[p + 1]

        # Layer-0 input gates with Scalar2Vec folded in (pure VPU broadcast-FMA):
        #   gx0[t*Bp + b, :] = x[t, b] * (s2v_w^T @ Wih0) + (s2v_b^T @ Wih0 + bias0)
        x_col = x_ref[...].astype(jnp.float32)                          # (T*Bp, 1)
        gx[...] = (jnp.broadcast_to(x_col, (seq_len * b_pad, four_h)) * v0_ref[...]
                   + k0_ref[...])

        # (h, c) chained across layers, exactly like the PyTorch module:
        #   out, (h0, c0) = lstm_layers[2*i](out, (h0, c0))
        h_scr[...] = jnp.zeros_like(h_scr)
        c_scr[...] = jnp.zeros_like(c_scr)

        for layer in range(num_layers):
            whh = whh_refs[layer][...]                 # (H, 4H) resident, loaded once/layer
            last_layer = layer == num_layers - 1
            for t in range(seq_len):                   # unrolled recurrence (small static T)
                r0 = t * b_pad                         # sublane-aligned (Bp multiple of 8)
                gates = (gx[pl.ds(r0, b_pad), :]
                         + jnp.dot(h_scr[...].astype(whh.dtype), whh,
                                   preferred_element_type=jnp.float32))
                i_g = jax.nn.sigmoid(gates[:, 0 * hidden:1 * hidden])
                f_g = jax.nn.sigmoid(gates[:, 1 * hidden:2 * hidden])
                g_g = jnp.tanh(gates[:, 2 * hidden:3 * hidden])
                o_g = jax.nn.sigmoid(gates[:, 3 * hidden:4 * hidden])
                c_new = f_g * c_scr[...] + i_g * g_g
                h_new = o_g * jnp.tanh(c_new)
                h_scr[...] = h_new
                c_scr[...] = c_new
                if not last_layer:                     # last layer's h_seq never materialized
                    hseq[pl.ds(r0, b_pad), :] = h_new
            if not last_layer:
                # Hoist the next layer's input projection off the serial critical path:
                # one (T*Bp, H) @ (H, 4H) matmul instead of one small dot per timestep.
                # nn.Dropout(0.2) between layers is the identity in eval mode.
                # TODO(synk): training-mode dropout (random mask + 1/(1-p) scaling).
                wih = wih_refs[layer + 1]
                gx[...] = (jnp.dot(hseq[...].astype(wih.dtype), wih[...],
                                   preferred_element_type=jnp.float32)
                           + bias_refs[layer + 1][...].astype(jnp.float32))

        # fc on the final hidden state (== out[:, -1, :]) straight from VMEM scratch.
        o_ref[...] = (jnp.dot(h_scr[...].astype(fcw_ref.dtype), fcw_ref[...],
                              preferred_element_type=jnp.float32)
                      + fcb_ref[...].astype(jnp.float32)).astype(o_ref.dtype)

    return kernel


# -----------------------------------------------------------------------------
# Full forward pass of LSTMWithScalar2Vec (eval mode), one pallas_call.
# -----------------------------------------------------------------------------
def lstm_with_scalar2vec_forward(params, x):
    """x: (batch, seq) of scalar features -> (batch, output_size) logits."""
    B, T = x.shape
    num_layers = len(params["lstm"])
    H = params["lstm"][0]["whh_t"].shape[0]
    O = params["fc_w_t"].shape[1]
    dt = x.dtype

    b_pad = _round_up(B, 8)                            # sublane-aligned batch tile
    hi = jax.lax.Precision.HIGHEST

    # Fold Scalar2Vec (nn.Linear(1, E)) into layer 0's input projection (tiny XLA matmuls).
    w_row = params["s2v_w"][:, 0][None, :].astype(jnp.float32)               # (1, E)
    b_row = params["s2v_b"][None, :].astype(jnp.float32)                     # (1, E)
    wih0 = params["lstm"][0]["wih_t"].astype(jnp.float32)                    # (E, 4H)
    v0 = jnp.dot(w_row, wih0, precision=hi)                                  # (1, 4H)
    k0 = jnp.dot(b_row, wih0, precision=hi) + params["lstm"][0]["bias"].astype(jnp.float32)

    # Time-major scalar column, batch padded to a sublane multiple (padded rows are inert).
    x_tm = jnp.transpose(x, (1, 0))                                          # (T, B)
    if b_pad != B:
        x_tm = jnp.pad(x_tm, ((0, 0), (0, b_pad - B)))
    x_col = jnp.reshape(x_tm, (T * b_pad, 1))

    def resident(shape):                               # whole-array, VMEM-resident block
        return pl.BlockSpec(shape, lambda i: (0, 0))

    args = [x_col, v0, k0, params["lstm"][0]["whh_t"]]
    in_specs = [resident((T * b_pad, 1)), resident((1, 4 * H)),
                resident((1, 4 * H)), resident((H, 4 * H))]
    for layer in params["lstm"][1:]:
        args += [layer["wih_t"], layer["bias"], layer["whh_t"]]
        in_specs += [resident((H, 4 * H)), resident((1, 4 * H)), resident((H, 4 * H))]
    args += [params["fc_w_t"], params["fc_b"]]
    in_specs += [resident((H, O)), resident((1, O))]

    out = pl.pallas_call(
        _make_fused_kernel(num_layers, T, b_pad, H),
        out_shape=jax.ShapeDtypeStruct((b_pad, O), dt),
        grid_spec=pltpu.PrefetchScalarGridSpec(
            num_scalar_prefetch=0,
            grid=(1,),
            in_specs=in_specs,
            out_specs=resident((b_pad, O)),
            scratch_shapes=[
                pltpu.VMEM((T * b_pad, 4 * H), jnp.float32),   # hoisted input gates
                pltpu.VMEM((T * b_pad, H), jnp.float32),       # hidden sequence -> next layer
                pltpu.VMEM((b_pad, H), jnp.float32),           # h carry (chained across layers)
                pltpu.VMEM((b_pad, H), jnp.float32),           # c carry
            ],
        ),
        # Single resident step.  For large batches, add a leading "parallel" batch-tile
        # grid axis so v7x's two TensorCores split the recurrence; for large T, chunk the
        # hoisted gate buffer over an outer "arbitrary" time axis to respect VMEM.
        compiler_params=pltpu.CompilerParams(dimension_semantics=("arbitrary",)),
    )(*args)
    return out[:B] if b_pad != B else out


# -----------------------------------------------------------------------------
# Pure-JAX reference (mirrors the PyTorch module) for the correctness check.
# -----------------------------------------------------------------------------
def _reference_forward(params, x):
    hi = jax.lax.Precision.HIGHEST
    H = params["lstm"][0]["whh_t"].shape[0]
    emb = x[..., None] * params["s2v_w"][:, 0] + params["s2v_b"]     # (B, T, E)
    B, T, _ = emb.shape
    h = jnp.zeros((B, H), dtype=x.dtype)
    c = jnp.zeros((B, H), dtype=x.dtype)
    out = emb
    for layer in params["lstm"]:
        hs = []
        for t in range(T):
            gates = (jnp.dot(out[:, t, :], layer["wih_t"], precision=hi)
                     + jnp.dot(h, layer["whh_t"], precision=hi)
                     + layer["bias"][0])
            i_g = jax.nn.sigmoid(gates[:, 0 * H:1 * H])
            f_g = jax.nn.sigmoid(gates[:, 1 * H:2 * H])
            g_g = jnp.tanh(gates[:, 2 * H:3 * H])
            o_g = jax.nn.sigmoid(gates[:, 3 * H:4 * H])
            c = f_g * c + i_g * g_g
            h = o_g * jnp.tanh(c)
            hs.append(h)
        out = jnp.stack(hs, axis=1)
    return jnp.dot(out[:, -1, :], params["fc_w_t"], precision=hi) + params["fc_b"][0]


if __name__ == "__main__":
    batch, seq = 4, 16
    embed_dim, hidden_size, num_layers, output_size = 32, 32, 2, 8

    key = jax.random.PRNGKey(0)
    keys = jax.random.split(key, 3 + 4 * num_layers + 2)

    x = jax.random.normal(keys[0], (batch, seq), dtype=jnp.float32)

    def uni(k, shape, bound):
        return jax.random.uniform(k, shape, jnp.float32, -bound, bound)

    params = {
        "s2v_w": uni(keys[1], (embed_dim, 1), 1.0),    # nn.Linear(1, E): fan_in = 1
        "s2v_b": uni(keys[2], (embed_dim,), 1.0),
        "lstm": [],
    }
    bound = 1.0 / (hidden_size ** 0.5)
    for li in range(num_layers):
        in_size = embed_dim if li == 0 else hidden_size
        k0, k1, k2, k3 = keys[3 + 4 * li: 3 + 4 * li + 4]
        w_ih = uni(k0, (4 * hidden_size, in_size), bound)
        w_hh = uni(k1, (4 * hidden_size, hidden_size), bound)
        b_ih = uni(k2, (4 * hidden_size,), bound)
        b_hh = uni(k3, (4 * hidden_size,), bound)
        params["lstm"].append({
            "wih_t": jnp.transpose(w_ih),              # (in, 4H)
            "whh_t": jnp.transpose(w_hh),              # (H, 4H)
            "bias": (b_ih + b_hh)[None, :],            # (1, 4H)
        })
    fc_w = uni(keys[3 + 4 * num_layers], (output_size, hidden_size), bound)
    fc_b = uni(keys[3 + 4 * num_layers + 1], (output_size,), bound)
    params["fc_w_t"] = jnp.transpose(fc_w)             # (H, O)
    params["fc_b"] = fc_b[None, :]                     # (1, O)

    fwd = jax.jit(lstm_with_scalar2vec_forward)
    out = jax.block_until_ready(fwd(params, x))

    ref = _reference_forward(params, x)
    assert out.shape == (batch, output_size), out.shape
    # Tightened vs. the previous 1e-2: differences come only from MXU f32 emulation /
    # EUP transcendental approximations, which are far below this bound.
    err = float(jnp.max(jnp.abs(out - ref)))
    assert jnp.allclose(out, ref, atol=5e-3, rtol=5e-3), err

    print("KERNEL_OK")
</pallas_src>

<mosaic_0001>
module attributes {stable_mosaic.version = 11 : i64} {
  func.func @kernel(%arg0: i32, %arg1: memref<128x1xf32, #tpu.memory_space<vmem>>, %arg2: memref<1x128xf32, #tpu.memory_space<vmem>>, %arg3: memref<1x128xf32, #tpu.memory_space<vmem>>, %arg4: memref<32x128xf32, #tpu.memory_space<vmem>>, %arg5: memref<32x128xf32, #tpu.memory_space<vmem>>, %arg6: memref<1x128xf32, #tpu.memory_space<vmem>>, %arg7: memref<32x128xf32, #tpu.memory_space<vmem>>, %arg8: memref<32x8xf32, #tpu.memory_space<vmem>>, %arg9: memref<1x8xf32, #tpu.memory_space<vmem>>, %arg10: memref<8x8xf32, #tpu.memory_space<vmem>>, %arg11: memref<128x128xf32, #tpu.memory_space<vmem>>, %arg12: memref<128x32xf32, #tpu.memory_space<vmem>>, %arg13: memref<8x32xf32, #tpu.memory_space<vmem>>, %arg14: memref<8x32xf32, #tpu.memory_space<vmem>>) attributes {dimension_semantics = [#tpu.dimension_semantics<arbitrary>], iteration_bounds = array<i64: 1>, scalar_prefetch = 0 : i64, scratch_operands = 4 : i64, tpu.core_type = #tpu.core_type<tc>, window_params = [{pipeline_mode = #tpu.pipeline_mode<synchronous>, transform_indices = @transform_0, window_bounds = array<i64: 128, 1>}, {pipeline_mode = #tpu.pipeline_mode<synchronous>, transform_indices = @transform_1, window_bounds = array<i64: 1, 128>}, {pipeline_mode = #tpu.pipeline_mode<synchronous>, transform_indices = @transform_2, window_bounds = array<i64: 1, 128>}, {pipeline_mode = #tpu.pipeline_mode<synchronous>, transform_indices = @transform_3, window_bounds = array<i64: 32, 128>}, {pipeline_mode = #tpu.pipeline_mode<synchronous>, transform_indices = @transform_4, window_bounds = array<i64: 32, 128>}, {pipeline_mode = #tpu.pipeline_mode<synchronous>, transform_indices = @transform_5, window_bounds = array<i64: 1, 128>}, {pipeline_mode = #tpu.pipeline_mode<synchronous>, transform_indices = @transform_6, window_bounds = array<i64: 32, 128>}, {pipeline_mode = #tpu.pipeline_mode<synchronous>, transform_indices = @transform_7, window_bounds = array<i64: 32, 8>}, {pipeline_mode = #tpu.pipeline_mode<synchronous>, transform_indices = @transform_8, window_bounds = array<i64: 1, 8>}, {pipeline_mode = #tpu.pipeline_mode<synchronous>, transform_indices = @transform_9, window_bounds = array<i64: 8, 8>}]} {
    %c0 = arith.constant 0 : index
    %c0_0 = arith.constant 0 : index
    %0 = vector.load %arg1[%c0, %c0_0] : memref<128x1xf32, #tpu.memory_space<vmem>>, vector<128x1xf32>
    %1 = vector.shape_cast %0 : vector<128x1xf32> to vector<128x1xf32>
    %2 = vector.broadcast %1 : vector<128x1xf32> to vector<128x128xf32>
    %c0_1 = arith.constant 0 : index
    %c0_2 = arith.constant 0 : index
    %3 = vector.load %arg2[%c0_1, %c0_2] : memref<1x128xf32, #tpu.memory_space<vmem>>, vector<1x128xf32>
    %4 = vector.broadcast %3 : vector<1x128xf32> to vector<128x128xf32>
    %5 = arith.mulf %2, %4 : vector<128x128xf32>
    %c0_3 = arith.constant 0 : index
    %c0_4 = arith.constant 0 : index
    %6 = vector.load %arg3[%c0_3, %c0_4] : memref<1x128xf32, #tpu.memory_space<vmem>>, vector<1x128xf32>
    %7 = vector.broadcast %6 : vector<1x128xf32> to vector<128x128xf32>
    %8 = arith.addf %5, %7 : vector<128x128xf32>
    %c0_5 = arith.constant 0 : index
    %c0_6 = arith.constant 0 : index
    %9 = vector.load %arg11[%c0_5, %c0_6] : memref<128x128xf32, #tpu.memory_space<vmem>>, vector<128x128xf32>
    tpu.vector_store %arg11[%c0_5, %c0_6], %8 {strides = array<i32>} : memref<128x128xf32, #tpu.memory_space<vmem>>, vector<128x128xf32>,
    %cst = arith.constant 0.000000e+00 : f32
    %10 = vector.broadcast %cst : f32 to vector<8x32xf32>
    %c0_7 = arith.constant 0 : index
    %c0_8 = arith.constant 0 : index
    %11 = vector.load %arg13[%c0_7, %c0_8] : memref<8x32xf32, #tpu.memory_space<vmem>>, vector<8x32xf32>
    tpu.vector_store %arg13[%c0_7, %c0_8], %10 {strides = array<i32>} : memref<8x32xf32, #tpu.memory_space<vmem>>, vector<8x32xf32>,
    %cst_9 = arith.constant 0.000000e+00 : f32
    %12 = vector.broadcast %cst_9 : f32 to vector<8x32xf32>
    %c0_10 = arith.constant 0 : index
    %c0_11 = arith.constant 0 : index
    %13 = vector.load %arg14[%c0_10, %c0_11] : memref<8x32xf32, #tpu.memory_space<vmem>>, vector<8x32xf32>
    tpu.vector_store %arg14[%c0_10, %c0_11], %12 {strides = array<i32>} : memref<8x32xf32, #tpu.memory_space<vmem>>, vector<8x32xf32>,
    %c0_12 = arith.constant 0 : index
    %c0_13 = arith.constant 0 : index
    %14 = vector.load %arg4[%c0_12, %c0_13] : memref<32x128xf32, #tpu.memory_space<vmem>>, vector<32x128xf32>
    %c0_14 = arith.constant 0 : index
    %c0_15 = arith.constant 0 : index
    %15 = vector.load %arg11[%c0_14, %c0_15] : memref<128x128xf32, #tpu.memory_space<vmem>>, vector<8x128xf32>
    %c0_16 = arith.constant 0 : index
    %c0_17 = arith.constant 0 : index
    %16 = vector.load %arg13[%c0_16, %c0_17] : memref<8x32xf32, #tpu.memory_space<vmem>>, vector<8x32xf32>
    %cst_18 = arith.constant dense<0.000000e+00> : vector<8x128xf32>
    %17 = tpu.matmul %16, %14, %cst_18 {dimension_numbers = #tpu.dot_dimension_numbers<[1], [0], [0], [1], [0, 0, 1, 1], [], []>} : vector<8x32xf32>, vector<32x128xf32>, vector<8x128xf32> -> vector<8x128xf32>
    %18 = arith.addf %15, %17 : vector<8x128xf32>
    %19 = vector.extract_strided_slice %18 {offsets = [0, 0], sizes = [8, 32], strides = [1, 1]} : vector<8x128xf32> to vector<8x32xf32>
    %20 = arith.negf %19 : vector<8x32xf32>
    %21 = math.exp %20 : vector<8x32xf32>
    %cst_19 = arith.constant 1.000000e+00 : f32
    %22 = vector.broadcast %cst_19 : f32 to vector<8x32xf32>
    %23 = arith.addf %22, %21 : vector<8x32xf32>
    %24 = arith.divf %22, %23 : vector<8x32xf32>
    %25 = vector.extract_strided_slice %18 {offsets = [0, 32], sizes = [8, 32], strides = [1, 1]} : vector<8x128xf32> to vector<8x32xf32>
    %26 = arith.negf %25 : vector<8x32xf32>
    %27 = math.exp %26 : vector<8x32xf32>
    %cst_20 = arith.constant 1.000000e+00 : f32
    %28 = vector.broadcast %cst_20 : f32 to vector<8x32xf32>
    %29 = arith.addf %28, %27 : vector<8x32xf32>
    %30 = arith.divf %28, %29 : vector<8x32xf32>
    %31 = vector.extract_strided_slice %18 {offsets = [0, 64], sizes = [8, 32], strides = [1, 1]} : vector<8x128xf32> to vector<8x32xf32>
    %32 = math.tanh %31 : vector<8x32xf32>
    %33 = vector.extract_strided_slice %18 {offsets = [0, 96], sizes = [8, 32], strides = [1, 1]} : vector<8x128xf32> to vector<8x32xf32>
    %34 = arith.negf %33 : vector<8x32xf32>
    %35 = math.exp %34 : vector<8x32xf32>
    %cst_21 = arith.constant 1.000000e+00 : f32
    %36 = vector.broadcast %cst_21 : f32 to vector<8x32xf32>
    %37 = arith.addf %36, %35 : vector<8x32xf32>
    %38 = arith.divf %36, %37 : vector<8x32xf32>
    %c0_22 = arith.constant 0 : index
    %c0_23 = arith.constant 0 : index
    %39 = vector.load %arg14[%c0_22, %c0_23] : memref<8x32xf32, #tpu.memory_space<vmem>>, vector<8x32xf32>
    %40 = arith.mulf %30, %39 : vector<8x32xf32>
    %41 = arith.mulf %24, %32 : vector<8x32xf32>
    %42 = arith.addf %40, %41 : vector<8x32xf32>
    %43 = math.tanh %42 : vector<8x32xf32>
    %44 = arith.mulf %38, %43 : vector<8x32xf32>
    %c0_24 = arith.constant 0 : index
    %c0_25 = arith.constant 0 : index
    %45 = vector.load %arg13[%c0_24, %c0_25] : memref<8x32xf32, #tpu.memory_space<vmem>>, vector<8x32xf32>
    tpu.vector_store %arg13[%c0_24, %c0_25], %44 {strides = array<i32>} : memref<8x32xf32, #tpu.memory_space<vmem>>, vector<8x32xf32>,
    %c0_26 = arith.constant 0 : index
    %c0_27 = arith.constant 0 : index
    %46 = vector.load %arg14[%c0_26, %c0_27] : memref<8x32xf32, #tpu.memory_space<vmem>>, vector<8x32xf32>
    tpu.vector_store %arg14[%c0_26, %c0_27], %42 {strides = array<i32>} : memref<8x32xf32, #tpu.memory_space<vmem>>, vector<8x32xf32>,
    %c0_28 = arith.constant 0 : index
    %c0_29 = arith.constant 0 : index
    %47 = vector.load %arg12[%c0_28, %c0_29] : memref<128x32xf32, #tpu.memory_space<vmem>>, vector<8x32xf32>
    tpu.vector_store %arg12[%c0_28, %c0_29], %44 {strides = array<i32>} : memref<128x32xf32, #tpu.memory_space<vmem>>, vector<8x32xf32>,
    %c8 = arith.constant 8 : index
    %c0_30 = arith.constant 0 : index
    %48 = vector.load %arg11[%c8, %c0_30] : memref<128x128xf32, #tpu.memory_space<vmem>>, vector<8x128xf32>
    %c0_31 = arith.constant 0 : index
    %c0_32 = arith.constant 0 : index
    %49 = vector.load %arg13[%c0_31, %c0_32] : memref<8x32xf32, #tpu.memory_space<vmem>>, vector<8x32xf32>
    %cst_33 = arith.constant dense<0.000000e+00> : vector<8x128xf32>
    %50 = tpu.matmul %49, %14, %cst_33 {dimension_numbers = #tpu.dot_dimension_numbers<[1], [0], [0], [1], [0, 0, 1, 1], [], []>} : vector<8x32xf32>, vector<32x128xf32>, vector<8x128xf32> -> vector<8x128xf32>
    %51 = arith.addf %48, %50 : vector<8x128xf32>
    %52 = vector.extract_strided_slice %51 {offsets = [0, 0], sizes = [8, 32], strides = [1, 1]} : vector<8x128xf32> to vector<8x32xf32>
    %53 = arith.negf %52 : vector<8x32xf32>
    %54 = math.exp %53 : vector<8x32xf32>
    %cst_34 = arith.constant 1.000000e+00 : f32
    %55 = vector.broadcast %cst_34 : f32 to vector<8x32xf32>
    %56 = arith.addf %55, %54 : vector<8x32xf32>
    %57 = arith.divf %55, %56 : vector<8x32xf32>
    %58 = vector.extract_strided_slice %51 {offsets = [0, 32], sizes = [8, 32], strides = [1, 1]} : vector<8x128xf32> to vector<8x32xf32>
    %59 = arith.negf %58 : vector<8x32xf32>
    %60 = math.exp %59 : vector<8x32xf32>
    %cst_35 = arith.constant 1.000000e+00 : f32
    %61 = vector.broadcast %cst_35 : f32 to vector<8x32xf32>
    %62 = arith.addf %61, %60 : vector<8x32xf32>
    %63 = arith.divf %61, %62 : vector<8x32xf32>
    %64 = vector.extract_strided_slice %51 {offsets = [0, 64], sizes = [8, 32], strides = [1, 1]} : vector<8x128xf32> to vector<8x32xf32>
    %65 = math.tanh %64 : vector<8x32xf32>
    %66 = vector.extract_strided_slice %51 {offsets = [0, 96], sizes = [8, 32], strides = [1, 1]} : vector<8x128xf32> to vector<8x32xf32>
    %67 = arith.negf %66 : vector<8x32xf32>
    %68 = math.exp %67 : vector<8x32xf32>
    %cst_36 = arith.constant 1.000000e+00 : f32
    %69 = vector.broadcast %cst_36 : f32 to vector<8x32xf32>
    %70 = arith.addf %69, %68 : vector<8x32xf32>
    %71 = arith.divf %69, %70 : vector<8x32xf32>
    %c0_37 = arith.constant 0 : index
    %c0_38 = arith.constant 0 : index
    %72 = vector.load %arg14[%c0_37, %c0_38] : memref<8x32xf32, #tpu.memory_space<vmem>>, vector<8x32xf32>
    %73 = arith.mulf %63, %72 : vector<8x32xf32>
    %74 = arith.mulf %57, %65 : vector<8x32xf32>
    %75 = arith.addf %73, %74 : vector<8x32xf32>
    %76 = math.tanh %75 : vector<8x32xf32>
    %77 = arith.mulf %71, %76 : vector<8x32xf32>
    %c0_39 = arith.constant 0 : index
    %c0_40 = arith.constant 0 : index
    %78 = vector.load %arg13[%c0_39, %c0_40] : memref<8x32xf32, #tpu.memory_space<vmem>>, vector<8x32xf32>
    tpu.vector_store %arg13[%c0_39, %c0_40], %77 {strides = array<i32>} : memref<8x32xf32, #tpu.memory_space<vmem>>, vector<8x32xf32>,
    %c0_41 = arith.constant 0 : index
    %c0_42 = arith.constant 0 : index
    %79 = vector.load %arg14[%c0_41, %c0_42] : memref<8x32xf32, #tpu.memory_space<vmem>>, vector<8x32xf32>
    tpu.vector_store %arg14[%c0_41, %c0_42], %75 {strides = array<i32>} : memref<8x32xf32, #tpu.memory_space<vmem>>, vector<8x32xf32>,
    %c8_43 = arith.constant 8 : index
    %c0_44 = arith.constant 0 : index
    %80 = vector.load %arg12[%c8_43, %c0_44] : memref<128x32xf32, #tpu.memory_space<vmem>>, vector<8x32xf32>
    tpu.vector_store %arg12[%c8_43, %c0_44], %77 {strides = array<i32>} : memref<128x32xf32, #tpu.memory_space<vmem>>, vector<8x32xf32>,
    %c16 = arith.constant 16 : index
    %c0_45 = arith.constant 0 : index
    %81 = vector.load %arg11[%c16, %c0_45] : memref<128x128xf32, #tpu.memory_space<vmem>>, vector<8x128xf32>
    %c0_46 = arith.constant 0 : index
    %c0_47 = arith.constant 0 : index
    %82 = vector.load %arg13[%c0_46, %c0_47] : memref<8x32xf32, #tpu.memory_space<vmem>>, vector<8x32xf32>
    %cst_48 = arith.constant dense<0.000000e+00> : vector<8x128xf32>
    %83 = tpu.matmul %82, %14, %cst_48 {dimension_numbers = #tpu.dot_dimension_numbers<[1], [0], [0], [1], [0, 0, 1, 1], [], []>} : vector<8x32xf32>, vector<32x128xf32>, vector<8x128xf32> -> vector<8x128xf32>
    %84 = arith.addf %81, %83 : vector<8x128xf32>
    %85 = vector.extract_strided_slice %84 {offsets = [0, 0], sizes = [8, 32], strides = [1, 1]} : vector<8x128xf32> to vector<8x32xf32>
    %86 = arith.negf %85 : vector<8x32xf32>
    %87 = math.exp %86 : vector<8x32xf32>
    %cst_49 = arith.constant 1.000000e+00 : f32
    %88 = vector.broadcast %cst_49 : f32 to vector<8x32xf32>
    %89 = arith.addf %88, %87 : vector<8x32xf32>
    %90 = arith.divf %88, %89 : vector<8x32xf32>
    %91 = vector.extract_strided_slice %84 {offsets = [0, 32], sizes = [8, 32], strides = [1, 1]} : vector<8x128xf32> to vector<8x32xf32>
    %92 = arith.negf %91 : vector<8x32xf32>
    %93 = math.exp %92 : vector<8x32xf32>
    %cst_50 = arith.constant 1.000000e+00 : f32
    %94 = vector.broadcast %cst_50 : f32 to vector<8x32xf32>
    %95 = arith.addf %94, %93 : vector<8x32xf32>
    %96 = arith.divf %94, %95 : vector<8x32xf32>
    %97 = vector.extract_strided_slice %84 {offsets = [0, 64], sizes = [8, 32], strides = [1, 1]} : vector<8x128xf32> to vector<8x32xf32>
    %98 = math.tanh %97 : vector<8x32xf32>
    %99 = vector.extract_strided_slice %84 {offsets = [0, 96], sizes = [8, 32], strides = [1, 1]} : vector<8x128xf32> to vector<8x32xf32>
    %100 = arith.negf %99 : vector<8x32xf32>
    %101 = math.exp %100 : vector<8x32xf32>
    %cst_51 = arith.constant 1.000000e+00 : f32
    %102 = vector.broadcast %cst_51 : f32 to vector<8x32xf32>
    %103 = arith.addf %102, %101 : vector<8x32xf32>
    %104 = arith.divf %102, %103 : vector<8x32xf32>
    %c0_52 = arith.constant 0 : index
    %c0_53 = arith.constant 0 : index
    %105 = vector.load %arg14[%c0_52, %c0_53] : memref<8x32xf32, #tpu.memory_space<vmem>>, vector<8x32xf32>
    %106 = arith.mulf %96, %105 : vector<8x32xf32>
    %107 = arith.mulf %90, %98 : vector<8x32xf32>
    %108 = arith.addf %106, %107 : vector<8x32xf32>
    %109 = math.tanh %108 : vector<8x32xf32>
    %110 = arith.mulf %104, %109 : vector<8x32xf32>
    %c0_54 = arith.constant 0 : index
    %c0_55 = arith.constant 0 : index
    %111 = vector.load %arg13[%c0_54, %c0_55] : memref<8x32xf32, #tpu.memory_space<vmem>>, vector<8x32xf32>
    tpu.vector_store %arg13[%c0_54, %c0_55], %110 {strides = array<i32>} : memref<8x32xf32, #tpu.memory_space<vmem>>, vector<8x32xf32>,
    %c0_56 = arith.constant 0 : index
    %c0_57 = arith.constant 0 : index
    %112 = vector.load %arg14[%c0_56, %c0_57] : memref<8x32xf32, #tpu.memory_space<vmem>>, vector<8x32xf32>
    tpu.vector_store %arg14[%c0_56, %c0_57], %108 {strides = array<i32>} : memref<8x32xf32, #tpu.memory_space<vmem>>, vector<8x32xf32>,
    %c16_58 = arith.constant 16 : index
    %c0_59 = arith.constant 0 : index
    %113 = vector.load %arg12[%c16_58, %c0_59] : memref<128x32xf32, #tpu.memory_space<vmem>>, vector<8x32xf32>
    tpu.vector_store %arg12[%c16_58, %c0_59], %110 {strides = array<i32>} : memref<128x32xf32, #tpu.memory_space<vmem>>, vector<8x32xf32>,
    %c24 = arith.constant 24 : index
    %c0_60 = arith.constant 0 : index
    %114 = vector.load %arg11[%c24, %c0_60] : memref<128x128xf32, #tpu.memory_space<vmem>>, vector<8x128xf32>
    %c0_61 = arith.constant 0 : index
    %c0_62 = arith.constant 0 : index
    %115 = vector.load %arg13[%c0_61, %c0_62] : memref<8x32xf32, #tpu.memory_space<vmem>>, vector<8x32xf32>
    %cst_63 = arith.constant dense<0.000000e+00> : vector<8x128xf32>
    %116 = tpu.matmul %115, %14, %cst_63 {dimension_numbers = #tpu.dot_dimension_numbers<[1], [0], [0], [1], [0, 0, 1, 1], [], []>} : vector<8x32xf32>, vector<32x128xf32>, vector<8x128xf32> -> vector<8x128xf32>
    %117 = arith.addf %114, %116 : vector<8x128xf32>
    %118 = vector.extract_strided_slice %117 {offsets = [0, 0], sizes = [8, 32], strides = [1, 1]} : vector<8x128xf32> to vector<8x32xf32>
    %119 = arith.negf %118 : vector<8x32xf32>
    %120 = math.exp %119 : vector<8x32xf32>
    %cst_64 = arith.constant 1.000000e+00 : f32
    %121 = vector.broadcast %cst_64 : f32 to vector<8x32xf32>
    %122 = arith.addf %121, %120 : vector<8x32xf32>
    %123 = arith.divf %121, %122 : vector<8x32xf32>
    %124 = vector.extract_strided_slice %117 {offsets = [0, 32], sizes = [8, 32], strides = [1, 1]} : vector<8x128xf32> to vector<8x32xf32>
    %125 = arith.negf %124 : vector<8x32xf32>
    %126 = math.exp %125 : vector<8x32xf32>
    %cst_65 = arith.constant 1.000000e+00 : f32
    %127 = vector.broadcast %cst_65 : f32 to vector<8x32xf32>
    %128 = arith.addf %127, %126 : vector<8x32xf32>
    %129 = arith.divf %127, %128 : vector<8x32xf32>
    %130 = vector.extract_strided_slice %117 {offsets = [0, 64], sizes = [8, 32], strides = [1, 1]} : vector<8x128xf32> to vector<8x32xf32>
    %131 = math.tanh %130 : vector<8x32xf32>
    %132 = vector.extract_strided_slice %117 {offsets = [0, 96], sizes = [8, 32], strides = [1, 1]} : vector<8x128xf32> to vector<8x32xf32>
    %133 = arith.negf %132 : vector<8x32xf32>
    %134 = math.exp %133 : vector<8x32xf32>
    %cst_66 = arith.constant 1.000000e+00 : f32
    %135 = vector.broadcast %cst_66 : f32 to vector<8x32xf32>
    %136 = arith.addf %135, %134 : vector<8x32xf32>
    %137 = arith.divf %135, %136 : vector<8x32xf32>
    %c0_67 = arith.constant 0 : index
    %c0_68 = arith.constant 0 : index
    %138 = vector.load %arg14[%c0_67, %c0_68] : memref<8x32xf32, #tpu.memory_space<vmem>>, vector<8x32xf32>
    %139 = arith.mulf %129, %138 : vector<8x32xf32>
    %140 = arith.mulf %123, %131 : vector<8x32xf32>
    %141 = arith.addf %139, %140 : vector<8x32xf32>
    %142 = math.tanh %141 : vector<8x32xf32>
    %143 = arith.mulf %137, %142 : vector<8x32xf32>
    %c0_69 = arith.constant 0 : index
    %c0_70 = arith.constant 0 : index
    %144 = vector.load %arg13[%c0_69, %c0_70] : memref<8x32xf32, #tpu.memory_space<vmem>>, vector<8x32xf32>
    tpu.vector_store %arg13[%c0_69, %c0_70], %143 {strides = array<i32>} : memref<8x32xf32, #tpu.memory_space<vmem>>, vector<8x32xf32>,
    %c0_71 = arith.constant 0 : index
    %c0_72 = arith.constant 0 : index
    %145 = vector.load %arg14[%c0_71, %c0_72] : memref<8x32xf32, #tpu.memory_space<vmem>>, vector<8x32xf32>
    tpu.vector_store %arg14[%c0_71, %c0_72], %141 {strides = array<i32>} : memref<8x32xf32, #tpu.memory_space<vmem>>, vector<8x32xf32>,
    %c24_73 = arith.constant 24 : index
    %c0_74 = arith.constant 0 : index
    %146 = vector.load %arg12[%c24_73, %c0_74] : memref<128x32xf32, #tpu.memory_space<vmem>>, vector<8x32xf32>
    tpu.vector_store %arg12[%c24_73, %c0_74], %143 {strides = array<i32>} : memref<128x32xf32, #tpu.memory_space<vmem>>, vector<8x32xf32>,
    %c32 = arith.constant 32 : index
    %c0_75 = arith.constant 0 : index
    %147 = vector.load %arg11[%c32, %c0_75] : memref<128x128xf32, #tpu.memory_space<vmem>>, vector<8x128xf32>
    %c0_76 = arith.constant 0 : index
    %c0_77 = arith.constant 0 : index
    %148 = vector.load %arg13[%c0_76, %c0_77] : memref<8x32xf32, #tpu.memory_space<vmem>>, vector<8x32xf32>
    %cst_78 = arith.constant dense<0.000000e+00> : vector<8x128xf32>
    %149 = tpu.matmul %148, %14, %cst_78 {dimension_numbers = #tpu.dot_dimension_numbers<[1], [0], [0], [1], [0, 0, 1, 1], [], []>} : vector<8x32xf32>, vector<32x128xf32>, vector<8x128xf32> -> vector<8x128xf32>
    %150 = arith.addf %147, %149 : vector<8x128xf32>
    %151 = vector.extract_strided_slice %150 {offsets = [0, 0], sizes = [8, 32], strides = [1, 1]} : vector<8x128xf32> to vector<8x32xf32>
    %152 = arith.negf %151 : vector<8x32xf32>
    %153 = math.exp %152 : vector<8x32xf32>
    %cst_79 = arith.constant 1.000000e+00 : f32
    %154 = vector.broadcast %cst_79 : f32 to vector<8x32xf32>
    %155 = arith.addf %154, %153 : vector<8x32xf32>
    %156 = arith.divf %154, %155 : vector<8x32xf32>
    %157 = vector.extract_strided_slice %150 {offsets = [0, 32], sizes = [8, 32], strides = [1, 1]} : vector<8x128xf32> to vector<8x32xf32>
    %158 = arith.negf %157 : vector<8x32xf32>
    %159 = math.exp %158 : vector<8x32xf32>
    %cst_80 = arith.constant 1.000000e+00 : f32
    %160 = vector.broadcast %cst_80 : f32 to vector<8x32xf32>
    %161 = arith.addf %160, %159 : vector<8x32xf32>
    %162 = arith.divf %160, %161 : vector<8x32xf32>
    %163 = vector.extract_strided_slice %150 {offsets = [0, 64], sizes = [8, 32], strides = [1, 1]} : vector<8x128xf32> to vector<8x32xf32>
    %164 = math.tanh %163 : vector<8x32xf32>
    %165 = vector.extract_strided_slice %150 {offsets = [0, 96], sizes = [8, 32], strides = [1, 1]} : vector<8x128xf32> to vector<8x32xf32>
    %166 = arith.negf %165 : vector<8x32xf32>
    %167 = math.exp %166 : vector<8x32xf32>
    %cst_81 = arith.constant 1.000000e+00 : f32
    %168 = vector.broadcast %cst_81 : f32 to vector<8x32xf32>
    %169 = arith.addf %168, %167 : vector<8x32xf32>
    %170 = arith.divf %168, %169 : vector<8x32xf32>
    %c0_82 = arith.constant 0 : index
    %c0_83 = arith.constant 0 : index
    %171 = vector.load %arg14[%c0_82, %c0_83] : memref<8x32xf32, #tpu.memory_space<vmem>>, vector<8x32xf32>
    %172 = arith.mulf %162, %171 : vector<8x32xf32>
    %173 = arith.mulf %156, %164 : vector<8x32xf32>
    %174 = arith.addf %172, %173 : vector<8x32xf32>
    %175 = math.tanh %174 : vector<8x32xf32>
    %176 = arith.mulf %170, %175 : vector<8x32xf32>
    %c0_84 = arith.constant 0 : index
    %c0_85 = arith.constant 0 : index
    %177 = vector.load %arg13[%c0_84, %c0_85] : memref<8x32xf32, #tpu.memory_space<vmem>>, vector<8x32xf32>
    tpu.vector_store %arg13[%c0_84, %c0_85], %176 {strides = array<i32>} : memref<8x32xf32, #tpu.memory_space<vmem>>, vector<8x32xf32>,
    %c0_86 = arith.constant 0 : index
    %c0_87 = arith.constant 0 : index
    %178 = vector.load %arg14[%c0_86, %c0_87] : memref<8x32xf32, #tpu.memory_space<vmem>>, vector<8x32xf32>
    tpu.vector_store %arg14[%c0_86, %c0_87], %174 {strides = array<i32>} : memref<8x32xf32, #tpu.memory_space<vmem>>, vector<8x32xf32>,
    %c32_88 = arith.constant 32 : index
    %c0_89 = arith.constant 0 : index
    %179 = vector.load %arg12[%c32_88, %c0_89] : memref<128x32xf32, #tpu.memory_space<vmem>>, vector<8x32xf32>
    tpu.vector_store %arg12[%c32_88, %c0_89], %176 {strides = array<i32>} : memref<128x32xf32, #tpu.memory_space<vmem>>, vector<8x32xf32>,
    %c40 = arith.constant 40 : index
    %c0_90 = arith.constant 0 : index
    %180 = vector.load %arg11[%c40, %c0_90] : memref<128x128xf32, #tpu.memory_space<vmem>>, vector<8x128xf32>
    %c0_91 = arith.constant 0 : index
    %c0_92 = arith.constant 0 : index
    %181 = vector.load %arg13[%c0_91, %c0_92] : memref<8x32xf32, #tpu.memory_space<vmem>>, vector<8x32xf32>
    %cst_93 = arith.constant dense<0.000000e+00> : vector<8x128xf32>
    %182 = tpu.matmul %181, %14, %cst_93 {dimension_numbers = #tpu.dot_dimension_numbers<[1], [0], [0], [1], [0, 0, 1, 1], [], []>} : vector<8x32xf32>, vector<32x128xf32>, vector<8x128xf32> -> vector<8x128xf32>
    %183 = arith.addf %180, %182 : vector<8x128xf32>
    %184 = vector.extract_strided_slice %183 {offsets = [0, 0], sizes = [8, 32], strides = [1, 1]} : vector<8x128xf32> to vector<8x32xf32>
    %185 = arith.negf %184 : vector<8x32xf32>
    %186 = math.exp %185 : vector<8x32xf32>
    %cst_94 = arith.constant 1.000000e+00 : f32
    %187 = vector.broadcast %cst_94 : f32 to vector<8x32xf32>
    %188 = arith.addf %187, %186 : vector<8x32xf32>
    %189 = arith.divf %187, %188 : vector<8x32xf32>
    %190 = vector.extract_strided_slice %183 {offsets = [0, 32], sizes = [8, 32], strides = [1, 1]} : vector<8x128xf32> to vector<8x32xf32>
    %191 = arith.negf %190 : vector<8x32xf32>
    %192 = math.exp %191 : vector<8x32xf32>
    %cst_95 = arith.constant 1.000000e+00 : f32
    %193 = vector.broadcast %cst_95 : f32 to vector<8x32xf32>
    %194 = arith.addf %193, %192 : vector<8x32xf32>
    %195 = arith.divf %193, %194 : vector<8x32xf32>
    %196 = vector.extract_strided_slice %183 {offsets = [0, 64], sizes = [8, 32], strides = [1, 1]} : vector<8x128xf32> to vector<8x32xf32>
    %197 = math.tanh %196 : vector<8x32xf32>
    %198 = vector.extract_strided_slice %183 {offsets = [0, 96], sizes = [8, 32], strides = [1, 1]} : vector<8x128xf32> to vector<8x32xf32>
    %199 = arith.negf %198 : vector<8x32xf32>
    %200 = math.exp %199 : vector<8x32xf32>
    %cst_96 = arith.constant 1.000000e+00 : f32
    %201 = vector.broadcast %cst_96 : f32 to vector<8x32xf32>
    %202 = arith.addf %201, %200 : vector<8x32xf32>
    %203 = arith.divf %201, %202 : vector<8x32xf32>
    %c0_97 = arith.constant 0 : index
    %c0_98 = arith.constant 0 : index
    %204 = vector.load %arg14[%c0_97, %c0_98] : memref<8x32xf32, #tpu.memory_space<vmem>>, vector<8x32xf32>
    %205 = arith.mulf %195, %204 : vector<8x32xf32>
    %206 = arith.mulf %189, %197 : vector<8x32xf32>
    %207 = arith.addf %205, %206 : vector<8x32xf32>
    %208 = math.tanh %207 : vector<8x32xf32>
    %209 = arith.mulf %203, %208 : vector<8x32xf32>
    %c0_99 = arith.constant 0 : index
    %c0_100 = arith.constant 0 : index
    %210 = vector.load %arg13[%c0_99, %c0_100] : memref<8x32xf32, #tpu.memory_space<vmem>>, vector<8x32xf32>
    tpu.vector_store %arg13[%c0_99, %c0_100], %209 {strides = array<i32>} : memref<8x32xf32, #tpu.memory_space<vmem>>, vector<8x32xf32>,
    %c0_101 = arith.constant 0 : index
    %c0_102 = arith.constant 0 : index
    %211 = vector.load %arg14[%c0_101, %c0_102] : memref<8x32xf32, #tpu.memory_space<vmem>>, vector<8x32xf32>
    tpu.vector_store %arg14[%c0_101, %c0_102], %207 {strides = array<i32>} : memref<8x32xf32, #tpu.memory_space<vmem>>, vector<8x32xf32>,
    %c40_103 = arith.constant 40 : index
    %c0_104 = arith.constant 0 : index
    %212 = vector.load %arg12[%c40_103, %c0_104] : memref<128x32xf32, #tpu.memory_space<vmem>>, vector<8x32xf32>
    tpu.vector_store %arg12[%c40_103, %c0_104], %209 {strides = array<i32>} : memref<128x32xf32, #tpu.memory_space<vmem>>, vector<8x32xf32>,
    %c48 = arith.constant 48 : index
    %c0_105 = arith.constant 0 : index
    %213 = vector.load %arg11[%c48, %c0_105] : memref<128x128xf32, #tpu.memory_space<vmem>>, vector<8x128xf32>
    %c0_106 = arith.constant 0 : index
    %c0_107 = arith.constant 0 : index
    %214 = vector.load %arg13[%c0_106, %c0_107] : memref<8x32xf32, #tpu.memory_space<vmem>>, vector<8x32xf32>
    %cst_108 = arith.constant dense<0.000000e+00> : vector<8x128xf32>
    %215 = tpu.matmul %214, %14, %cst_108 {dimension_numbers = #tpu.dot_dimension_numbers<[1], [0], [0], [1], [0, 0, 1, 1], [], []>} : vector<8x32xf32>, vector<32x128xf32>, vector<8x128xf32> -> vector<8x128xf32>
    %216 = arith.addf %213, %215 : vector<8x128xf32>
    %217 = vector.extract_strided_slice %216 {offsets = [0, 0], sizes = [8, 32], strides = [1, 1]} : vector<8x128xf32> to vector<8x32xf32>
    %218 = arith.negf %217 : vector<8x32xf32>
    %219 = math.exp %218 : vector<8x32xf32>
    %cst_109 = arith.constant 1.000000e+00 : f32
    %220 = vector.broadcast %cst_109 : f32 to vector<8x32xf32>
    %221 = arith.addf %220, %219 : vector<8x32xf32>
    %222 = arith.divf %220, %221 : vector<8x32xf32>
    %223 = vector.extract_strided_slice %216 {offsets = [0, 32], sizes = [8, 32], strides = [1, 1]} : vector<8x128xf32> to vector<8x32xf32>
    %224 = arith.negf %223 : vector<8x32xf32>
    %225 = math.exp %224 : vector<8x32xf32>
    %cst_110 = arith.constant 1.000000e+00 : f32
    %226 = vector.broadcast %cst_110 : f32 to vector<8x32xf32>
    %227 = arith.addf %226, %225 : vector<8x32xf32>
    %228 = arith.divf %226, %227 : vector<8x32xf32>
    %229 = vector.extract_strided_slice %216 {offsets = [0, 64], sizes = [8, 32], strides = [1, 1]} : vector<8x128xf32> to vector<8x32xf32>
    %230 = math.tanh %229 : vector<8x32xf32>
    %231 = vector.extract_strided_slice %216 {offsets = [0, 96], sizes = [8, 32], strides = [1, 1]} : vector<8x128xf32> to vector<8x32xf32>
    %232 = arith.negf %231 : vector<8x32xf32>
    %233 = math.exp %232 : vector<8x32xf32>
    %cst_111 = arith.constant 1.000000e+00 : f32
    %234 = vector.broadcast %cst_111 : f32 to vector<8x32xf32>
    %235 = arith.addf %234, %233 : vector<8x32xf32>
    %236 = arith.divf %234, %235 : vector<8x32xf32>
    %c0_112 = arith.constant 0 : index
    %c0_113 = arith.constant 0 : index
    %237 = vector.load %arg14[%c0_112, %c0_113] : memref<8x32xf32, #tpu.memory_space<vmem>>, vector<8x32xf32>
    %238 = arith.mulf %228, %237 : vector<8x32xf32>
    %239 = arith.mulf %222, %230 : vector<8x32xf32>
    %240 = arith.addf %238, %239 : vector<8x32xf32>
    %241 = math.tanh %240 : vector<8x32xf32>
    %242 = arith.mulf %236, %241 : vector<8x32xf32>
    %c0_114 = arith.constant 0 : index
    %c0_115 = arith.constant 0 : index
    %243 = vector.load %arg13[%c0_114, %c0_115] : memref<8x32xf32, #tpu.memory_space<vmem>>, vector<8x32xf32>
    tpu.vector_store %arg13[%c0_114, %c0_115], %242 {strides = array<i32>} : memref<8x32xf32, #tpu.memory_space<vmem>>, vector<8x32xf32>,
    %c0_116 = arith.constant 0 : index
    %c0_117 = arith.constant 0 : index
    %244 = vector.load %arg14[%c0_116, %c0_117] : memref<8x32xf32, #tpu.memory_space<vmem>>, vector<8x32xf32>
    tpu.vector_store %arg14[%c0_116, %c0_117], %240 {strides = array<i32>} : memref<8x32xf32, #tpu.memory_space<vmem>>, vector<8x32xf32>,
    %c48_118 = arith.constant 48 : index
    %c0_119 = arith.constant 0 : index
    %245 = vector.load %arg12[%c48_118, %c0_119] : memref<128x32xf32, #tpu.memory_space<vmem>>, vector<8x32xf32>
    tpu.vector_store %arg12[%c48_118, %c0_119], %242 {strides = array<i32>} : memref<128x32xf32, #tpu.memory_space<vmem>>, vector<8x32xf32>,
    %c56 = arith.constant 56 : index
    %c0_120 = arith.constant 0 : index
    %246 = vector.load %arg11[%c56, %c0_120] : memref<128x128xf32, #tpu.memory_space<vmem>>, vector<8x128xf32>
    %c0_121 = arith.constant 0 : index
    %c0_122 = arith.constant 0 : index
    %247 = vector.load %arg13[%c0_121, %c0_122] : memref<8x32xf32, #tpu.memory_space<vmem>>, vector<8x32xf32>
    %cst_123 = arith.constant dense<0.000000e+00> : vector<8x128xf32>
    %248 = tpu.matmul %247, %14, %cst_123 {dimension_numbers = #tpu.dot_dimension_numbers<[1], [0], [0], [1], [0, 0, 1, 1], [], []>} : vector<8x32xf32>, vector<32x128xf32>, vector<8x128xf32> -> vector<8x128xf32>
    %249 = arith.addf %246, %248 : vector<8x128xf32>
    %250 = vector.extract_strided_slice %249 {offsets = [0, 0], sizes = [8, 32], strides = [1, 1]} : vector<8x128xf32> to vector<8x32xf32>
    %251 = arith.negf %250 : vector<8x32xf32>
    %252 = math.exp %251 : vector<8x32xf32>
    %cst_124 = arith.constant 1.000000e+00 : f32
    %253 = vector.broadcast %cst_124 : f32 to vector<8x32xf32>
    %254 = arith.addf %253, %252 : vector<8x32xf32>
    %255 = arith.divf %253, %254 : vector<8x32xf32>
    %256 = vector.extract_strided_slice %249 {offsets = [0, 32], sizes = [8, 32], strides = [1, 1]} : vector<8x128xf32> to vector<8x32xf32>
    %257 = arith.negf %256 : vector<8x32xf32>
    %258 = math.exp %257 : vector<8x32xf32>
    %cst_125 = arith.constant 1.000000e+00 : f32
    %259 = vector.broadcast %cst_125 : f32 to vector<8x32xf32>
    %260 = arith.addf %259, %258 : vector<8x32xf32>
    %261 = arith.divf %259, %260 : vector<8x32xf32>
    %262 = vector.extract_strided_slice %249 {offsets = [0, 64], sizes = [8, 32], strides = [1, 1]} : vector<8x128xf32> to vector<8x32xf32>
    %263 = math.tanh %262 : vector<8x32xf32>
    %264 = vector.extract_strided_slice %249 {offsets = [0, 96], sizes = [8, 32], strides = [1, 1]} : vector<8x128xf32> to vector<8x32xf32>
    %265 = arith.negf %264 : vector<8x32xf32>
    %266 = math.exp %265 : vector<8x32xf32>
    %cst_126 = arith.constant 1.000000e+00 : f32
    %267 = vector.broadcast %cst_126 : f32 to vector<8x32xf32>
    %268 = arith.addf %267, %266 : vector<8x32xf32>
    %269 = arith.divf %267, %268 : vector<8x32xf32>
    %c0_127 = arith.constant 0 : index
    %c0_128 = arith.constant 0 : index
    %270 = vector.load %arg14[%c0_127, %c0_128] : memref<8x32xf32, #tpu.memory_space<vmem>>, vector<8x32xf32>
    %271 = arith.mulf %261, %270 : vector<8x32xf32>
    %272 = arith.mulf %255, %263 : vector<8x32xf32>
    %273 = arith.addf %271, %272 : vector<8x32xf32>
    %274 = math.tanh %273 : vector<8x32xf32>
    %275 = arith.mulf %269, %274 : vector<8x32xf32>
    %c0_129 = arith.constant 0 : index
    %c0_130 = arith.constant 0 : index
    %276 = vector.load %arg13[%c0_129, %c0_130] : memref<8x32xf32, #tpu.memory_space<vmem>>, vector<8x32xf32>
    tpu.vector_store %arg13[%c0_129, %c0_130], %275 {strides = array<i32>} : memref<8x32xf32, #tpu.memory_space<vmem>>, vector<8x32xf32>,
    %c0_131 = arith.constant 0 : index
    %c0_132 = arith.constant 0 : index
    %277 = vector.load %arg14[%c0_131, %c0_132] : memref<8x32xf32, #tpu.memory_space<vmem>>, vector<8x32xf32>
    tpu.vector_store %arg14[%c0_131, %c0_132], %273 {strides = array<i32>} : memref<8x32xf32, #tpu.memory_space<vmem>>, vector<8x32xf32>,
    %c56_133 = arith.constant 56 : index
    %c0_134 = arith.constant 0 : index
    %278 = vector.load %arg12[%c56_133, %c0_134] : memref<128x32xf32, #tpu.memory_space<vmem>>, vector<8x32xf32>
    tpu.vector_store %arg12[%c56_133, %c0_134], %275 {strides = array<i32>} : memref<128x32xf32, #tpu.memory_space<vmem>>, vector<8x32xf32>,
    %c64 = arith.constant 64 : index
    %c0_135 = arith.constant 0 : index
    %279 = vector.load %arg11[%c64, %c0_135] : memref<128x128xf32, #tpu.memory_space<vmem>>, vector<8x128xf32>
    %c0_136 = arith.constant 0 : index
    %c0_137 = arith.constant 0 : index
    %280 = vector.load %arg13[%c0_136, %c0_137] : memref<8x32xf32, #tpu.memory_space<vmem>>, vector<8x32xf32>
    %cst_138 = arith.constant dense<0.000000e+00> : vector<8x128xf32>
    %281 = tpu.matmul %280, %14, %cst_138 {dimension_numbers = #tpu.dot_dimension_numbers<[1], [0], [0], [1], [0, 0, 1, 1], [], []>} : vector<8x32xf32>, vector<32x128xf32>, vector<8x128xf32> -> vector<8x128xf32>
    %282 = arith.addf %279, %281 : vector<8x128xf32>
    %283 = vector.extract_strided_slice %282 {offsets = [0, 0], sizes = [8, 32], strides = [1, 1]} : vector<8x128xf32> to vector<8x32xf32>
    %284 = arith.negf %283 : vector<8x32xf32>
    %285 = math.exp %284 : vector<8x32xf32>
    %cst_139 = arith.constant 1.000000e+00 : f32
    %286 = vector.broadcast %cst_139 : f32 to vector<8x32xf32>
    %287 = arith.addf %286, %285 : vector<8x32xf32>
    %288 = arith.divf %286, %287 : vector<8x32xf32>
    %289 = vector.extract_strided_slice %282 {offsets = [0, 32], sizes = [8, 32], strides = [1, 1]} : vector<8x128xf32> to vector<8x32xf32>
    %290 = arith.negf %289 : vector<8x32xf32>
    %291 = math.exp %290 : vector<8x32xf32>
    %cst_140 = arith.constant 1.000000e+00 : f32
    %292 = vector.broadcast %cst_140 : f32 to vector<8x32xf32>
    %293 = arith.addf %292, %291 : vector<8x32xf32>
    %294 = arith.divf %292, %293 : vector<8x32xf32>
    %295 = vector.extract_strided_slice %282 {offsets = [0, 64], sizes = [8, 32], strides = [1, 1]} : vector<8x128xf32> to vector<8x32xf32>
    %296 = math.tanh %295 : vector<8x32xf32>
    %297 = vector.extract_strided_slice %282 {offsets = [0, 96], sizes = [8, 32], strides = [1, 1]} : vector<8x128xf32> to vector<8x32xf32>
    %298 = arith.negf %297 : vector<8x32xf32>
    %299 = math.exp %298 : vector<8x32xf32>
    %cst_141 = arith.constant 1.000000e+00 : f32
    %300 = vector.broadcast %cst_141 : f32 to vector<8x32xf32>
    %301 = arith.addf %300, %299 : vector<8x32xf32>
    %302 = arith.divf %300, %301 : vector<8x32xf32>
    %c0_142 = arith.constant 0 : index
    %c0_143 = arith.constant 0 : index
    %303 = vector.load %arg14[%c0_142, %c0_143] : memref<8x32xf32, #tpu.memory_space<vmem>>, vector<8x32xf32>
    %304 = arith.mulf %294, %303 : vector<8x32xf32>
    %305 = arith.mulf %288, %296 : vector<8x32xf32>
    %306 = arith.addf %304, %305 : vector<8x32xf32>
    %307 = math.tanh %306 : vector<8x32xf32>
    %308 = arith.mulf %302, %307 : vector<8x32xf32>
    %c0_144 = arith.constant 0 : index
    %c0_145 = arith.constant 0 : index
    %309 = vector.load %arg13[%c0_144, %c0_145] : memref<8x32xf32, #tpu.memory_space<vmem>>, vector<8x32xf32>
    tpu.vector_store %arg13[%c0_144, %c0_145], %308 {strides = array<i32>} : memref<8x32xf32, #tpu.memory_space<vmem>>, vector<8x32xf32>,
    %c0_146 = arith.constant 0 : index
    %c0_147 = arith.constant 0 : index
    %310 = vector.load %arg14[%c0_146, %c0_147] : memref<8x32xf32, #tpu.memory_space<vmem>>, vector<8x32xf32>
    tpu.vector_store %arg14[%c0_146, %c0_147], %306 {strides = array<i32>} : memref<8x32xf32, #tpu.memory_space<vmem>>, vector<8x32xf32>,
    %c64_148 = arith.constant 64 : index
    %c0_149 = arith.constant 0 : index
    %311 = vector.load %arg12[%c64_148, %c0_149] : memref<128x32xf32, #tpu.memory_space<vmem>>, vector<8x32xf32>
    tpu.vector_store %arg12[%c64_148, %c0_149], %308 {strides = array<i32>} : memref<128x32xf32, #tpu.memory_space<vmem>>, vector<8x32xf32>,
    %c72 = arith.constant 72 : index
    %c0_150 = arith.constant 0 : index
    %312 = vector.load %arg11[%c72, %c0_150] : memref<128x128xf32, #tpu.memory_space<vmem>>, vector<8x128xf32>
    %c0_151 = arith.constant 0 : index
    %c0_152 = arith.constant 0 : index
    %313 = vector.load %arg13[%c0_151, %c0_152] : memref<8x32xf32, #tpu.memory_space<vmem>>, vector<8x32xf32>
    %cst_153 = arith.constant dense<0.000000e+00> : vector<8x128xf32>
    %314 = tpu.matmul %313, %14, %cst_153 {dimension_numbers = #tpu.dot_dimension_numbers<[1], [0], [0], [1], [0, 0, 1, 1], [], []>} : vector<8x32xf32>, vector<32x128xf32>, vector<8x128xf32> -> vector<8x128xf32>
    %315 = arith.addf %312, %314 : vector<8x128xf32>
    %316 = vector.extract_strided_slice %315 {offsets = [0, 0], sizes = [8, 32], strides = [1, 1]} : vector<8x128xf32> to vector<8x32xf32>
    %317 = arith.negf %316 : vector<8x32xf32>
    %318 = math.exp %317 : vector<8x32xf32>
    %cst_154 = arith.constant 1.000000e+00 : f32
    %319 = vector.broadcast %cst_154 : f32 to vector<8x32xf32>
    %320 = arith.addf %319, %318 : vector<8x32xf32>
    %321 = arith.divf %319, %320 : vector<8x32xf32>
    %322 = vector.extract_strided_slice %315 {offsets = [0, 32], sizes = [8, 32], strides = [1, 1]} : vector<8x128xf32> to vector<8x32xf32>
    %323 = arith.negf %322 : vector<8x32xf32>
    %324 = math.exp %323 : vector<8x32xf32>
    %cst_155 = arith.constant 1.000000e+00 : f32
    %325 = vector.broadcast %cst_155 : f32 to vector<8x32xf32>
    %326 = arith.addf %325, %324 : vector<8x32xf32>
    %327 = arith.divf %325, %326 : vector<8x32xf32>
    %328 = vector.extract_strided_slice %315 {offsets = [0, 64], sizes = [8, 32], strides = [1, 1]} : vector<8x128xf32> to vector<8x32xf32>
    %329 = math.tanh %328 : vector<8x32xf32>
    %330 = vector.extract_strided_slice %315 {offsets = [0, 96], sizes = [8, 32], strides = [1, 1]} : vector<8x128xf32> to vector<8x32xf32>
    %331 = arith.negf %330 : vector<8x32xf32>
    %332 = math.exp %331 : vector<8x32xf32>
    %cst_156 = arith.constant 1.000000e+00 : f32
    %333 = vector.broadcast %cst_156 : f32 to vector<8x32xf32>
    %334 = arith.addf %333, %332 : vector<8x32xf32>
    %335 = arith.divf %333, %334 : vector<8x32xf32>
    %c0_157 = arith.constant 0 : index
    %c0_158 = arith.constant 0 : index
    %336 = vector.load %arg14[%c0_157, %c0_158] : memref<8x32xf32, #tpu.memory_space<vmem>>, vector<8x32xf32>
    %337 = arith.mulf %327, %336 : vector<8x32xf32>
    %338 = arith.mulf %321, %329 : vector<8x32xf32>
    %339 = arith.addf %337, %338 : vector<8x32xf32>
    %340 = math.tanh %339 : vector<8x32xf32>
    %341 = arith.mulf %335, %340 : vector<8x32xf32>
    %c0_159 = arith.constant 0 : index
    %c0_160 = arith.constant 0 : index
    %342 = vector.load %arg13[%c0_159, %c0_160] : memref<8x32xf32, #tpu.memory_space<vmem>>, vector<8x32xf32>
    tpu.vector_store %arg13[%c0_159, %c0_160], %341 {strides = array<i32>} : memref<8x32xf32, #tpu.memory_space<vmem>>, vector<8x32xf32>,
    %c0_161 = arith.constant 0 : index
    %c0_162 = arith.constant 0 : index
    %343 = vector.load %arg14[%c0_161, %c0_162] : memref<8x32xf32, #tpu.memory_space<vmem>>, vector<8x32xf32>
    tpu.vector_store %arg14[%c0_161, %c0_162], %339 {strides = array<i32>} : memref<8x32xf32, #tpu.memory_space<vmem>>, vector<8x32xf32>,
    %c72_163 = arith.constant 72 : index
    %c0_164 = arith.constant 0 : index
    %344 = vector.load %arg12[%c72_163, %c0_164] : memref<128x32xf32, #tpu.memory_space<vmem>>, vector<8x32xf32>
    tpu.vector_store %arg12[%c72_163, %c0_164], %341 {strides = array<i32>} : memref<128x32xf32, #tpu.memory_space<vmem>>, vector<8x32xf32>,
    %c80 = arith.constant 80 : index
    %c0_165 = arith.constant 0 : index
    %345 = vector.load %arg11[%c80, %c0_165] : memref<128x128xf32, #tpu.memory_space<vmem>>, vector<8x128xf32>
    %c0_166 = arith.constant 0 : index
    %c0_167 = arith.constant 0 : index
    %346 = vector.load %arg13[%c0_166, %c0_167] : memref<8x32xf32, #tpu.memory_space<vmem>>, vector<8x32xf32>
    %cst_168 = arith.constant dense<0.000000e+00> : vector<8x128xf32>
    %347 = tpu.matmul %346, %14, %cst_168 {dimension_numbers = #tpu.dot_dimension_numbers<[1], [0], [0], [1], [0, 0, 1, 1], [], []>} : vector<8x32xf32>, vector<32x128xf32>, vector<8x128xf32> -> vector<8x128xf32>
    %348 = arith.addf %345, %347 : vector<8x128xf32>
    %349 = vector.extract_strided_slice %348 {offsets = [0, 0], sizes = [8, 32], strides = [1, 1]} : vector<8x128xf32> to vector<8x32xf32>
    %350 = arith.negf %349 : vector<8x32xf32>
    %351 = math.exp %350 : vector<8x32xf32>
    %cst_169 = arith.constant 1.000000e+00 : f32
    %352 = vector.broadcast %cst_169 : f32 to vector<8x32xf32>
    %353 = arith.addf %352, %351 : vector<8x32xf32>
    %354 = arith.divf %352, %353 : vector<8x32xf32>
    %355 = vector.extract_strided_slice %348 {offsets = [0, 32], sizes = [8, 32], strides = [1, 1]} : vector<8x128xf32> to vector<8x32xf32>
    %356 = arith.negf %355 : vector<8x32xf32>
    %357 = math.exp %356 : vector<8x32xf32>
    %cst_170 = arith.constant 1.000000e+00 : f32
    %358 = vector.broadcast %cst_170 : f32 to vector<8x32xf32>
    %359 = arith.addf %358, %357 : vector<8x32xf32>
    %360 = arith.divf %358, %359 : vector<8x32xf32>
    %361 = vector.extract_strided_slice %348 {offsets = [0, 64], sizes = [8, 32], strides = [1, 1]} : vector<8x128xf32> to vector<8x32xf32>
    %362 = math.tanh %361 : vector<8x32xf32>
    %363 = vector.extract_strided_slice %348 {offsets = [0, 96], sizes = [8, 32], strides = [1, 1]} : vector<8x128xf32> to vector<8x32xf32>
    %364 = arith.negf %363 : vector<8x32xf32>
    %365 = math.exp %364 : vector<8x32xf32>
    %cst_171 = arith.constant 1.000000e+00 : f32
    %366 = vector.broadcast %cst_171 : f32 to vector<8x32xf32>
    %367 = arith.addf %366, %365 : vector<8x32xf32>
    %368 = arith.divf %366, %367 : vector<8x32xf32>
    %c0_172 = arith.constant 0 : index
    %c0_173 = arith.constant 0 : index
    %369 = vector.load %arg14[%c0_172, %c0_173] : memref<8x32xf32, #tpu.memory_space<vmem>>, vector<8x32xf32>
    %370 = arith.mulf %360, %369 : vector<8x32xf32>
    %371 = arith.mulf %354, %362 : vector<8x32xf32>
    %372 = arith.addf %370, %371 : vector<8x32xf32>
    %373 = math.tanh %372 : vector<8x32xf32>
    %374 = arith.mulf %368, %373 : vector<8x32xf32>
    %c0_174 = arith.constant 0 : index
    %c0_175 = arith.constant 0 : index
    %375 = vector.load %arg13[%c0_174, %c0_175] : memref<8x32xf32, #tpu.memory_space<vmem>>, vector<8x32xf32>
    tpu.vector_store %arg13[%c0_174, %c0_175], %374 {strides = array<i32>} : memref<8x32xf32, #tpu.memory_space<vmem>>, vector<8x32xf32>,
    %c0_176 = arith.constant 0 : index
    %c0_177 = arith.constant 0 : index
    %376 = vector.load %arg14[%c0_176, %c0_177] : memref<8x32xf32, #tpu.memory_space<vmem>>, vector<8x32xf32>
    tpu.vector_store %arg14[%c0_176, %c0_177], %372 {strides = array<i32>} : memref<8x32xf32, #tpu.memory_space<vmem>>, vector<8x32xf32>,
    %c80_178 = arith.constant 80 : index
    %c0_179 = arith.constant 0 : index
    %377 = vector.load %arg12[%c80_178, %c0_179] : memref<128x32xf32, #tpu.memory_space<vmem>>, vector<8x32xf32>
    tpu.vector_store %arg12[%c80_178, %c0_179], %374 {strides = array<i32>} : memref<128x32xf32, #tpu.memory_space<vmem>>, vector<8x32xf32>,
    %c88 = arith.constant 88 : index
    %c0_180 = arith.constant 0 : index
    %378 = vector.load %arg11[%c88, %c0_180] : memref<128x128xf32, #tpu.memory_space<vmem>>, vector<8x128xf32>
    %c0_181 = arith.constant 0 : index
    %c0_182 = arith.constant 0 : index
    %379 = vector.load %arg13[%c0_181, %c0_182] : memref<8x32xf32, #tpu.memory_space<vmem>>, vector<8x32xf32>
    %cst_183 = arith.constant dense<0.000000e+00> : vector<8x128xf32>
    %380 = tpu.matmul %379, %14, %cst_183 {dimension_numbers = #tpu.dot_dimension_numbers<[1], [0], [0], [1], [0, 0, 1, 1], [], []>} : vector<8x32xf32>, vector<32x128xf32>, vector<8x128xf32> -> vector<8x128xf32>
    %381 = arith.addf %378, %380 : vector<8x128xf32>
    %382 = vector.extract_strided_slice %381 {offsets = [0, 0], sizes = [8, 32], strides = [1, 1]} : vector<8x128xf32> to vector<8x32xf32>
    %383 = arith.negf %382 : vector<8x32xf32>
    %384 = math.exp %383 : vector<8x32xf32>
    %cst_184 = arith.constant 1.000000e+00 : f32
    %385 = vector.broadcast %cst_184 : f32 to vector<8x32xf32>
    %386 = arith.addf %385, %384 : vector<8x32xf32>
    %387 = arith.divf %385, %386 : vector<8x32xf32>
    %388 = vector.extract_strided_slice %381 {offsets = [0, 32], sizes = [8, 32], strides = [1, 1]} : vector<8x128xf32> to vector<8x32xf32>
    %389 = arith.negf %388 : vector<8x32xf32>
    %390 = math.exp %389 : vector<8x32xf32>
    %cst_185 = arith.constant 1.000000e+00 : f32
    %391 = vector.broadcast %cst_185 : f32 to vector<8x32xf32>
    %392 = arith.addf %391, %390 : vector<8x32xf32>
    %393 = arith.divf %391, %392 : vector<8x32xf32>
    %394 = vector.extract_strided_slice %381 {offsets = [0, 64], sizes = [8, 32], strides = [1, 1]} : vector<8x128xf32> to vector<8x32xf32>
    %395 = math.tanh %394 : vector<8x32xf32>
    %396 = vector.extract_strided_slice %381 {offsets = [0, 96], sizes = [8, 32], strides = [1, 1]} : vector<8x128xf32> to vector<8x32xf32>
    %397 = arith.negf %396 : vector<8x32xf32>
    %398 = math.exp %397 : vector<8x32xf32>
    %cst_186 = arith.constant 1.000000e+00 : f32
    %399 = vector.broadcast %cst_186 : f32 to vector<8x32xf32>
    %400 = arith.addf %399, %398 : vector<8x32xf32>
    %401 = arith.divf %399, %400 : vector<8x32xf32>
    %c0_187 = arith.constant 0 : index
    %c0_188 = arith.constant 0 : index
    %402 = vector.load %arg14[%c0_187, %c0_188] : memref<8x32xf32, #tpu.memory_space<vmem>>, vector<8x32xf32>
    %403 = arith.mulf %393, %402 : vector<8x32xf32>
    %404 = arith.mulf %387, %395 : vector<8x32xf32>
    %405 = arith.addf %403, %404 : vector<8x32xf32>
    %406 = math.tanh %405 : vector<8x32xf32>
    %407 = arith.mulf %401, %406 : vector<8x32xf32>
    %c0_189 = arith.constant 0 : index
    %c0_190 = arith.constant 0 : index
    %408 = vector.load %arg13[%c0_189, %c0_190] : memref<8x32xf32, #tpu.memory_space<vmem>>, vector<8x32xf32>
    tpu.vector_store %arg13[%c0_189, %c0_190], %407 {strides = array<i32>} : memref<8x32xf32, #tpu.memory_space<vmem>>, vector<8x32xf32>,
    %c0_191 = arith.constant 0 : index
    %c0_192 = arith.constant 0 : index
    %409 = vector.load %arg14[%c0_191, %c0_192] : memref<8x32xf32, #tpu.memory_space<vmem>>, vector<8x32xf32>
    tpu.vector_store %arg14[%c0_191, %c0_192], %405 {strides = array<i32>} : memref<8x32xf32, #tpu.memory_space<vmem>>, vector<8x32xf32>,
    %c88_193 = arith.constant 88 : index
    %c0_194 = arith.constant 0 : index
    %410 = vector.load %arg12[%c88_193, %c0_194] : memref<128x32xf32, #tpu.memory_space<vmem>>, vector<8x32xf32>
    tpu.vector_store %arg12[%c88_193, %c0_194], %407 {strides = array<i32>} : memref<128x32xf32, #tpu.memory_space<vmem>>, vector<8x32xf32>,
    %c96 = arith.constant 96 : index
    %c0_195 = arith.constant 0 : index
    %411 = vector.load %arg11[%c96, %c0_195] : memref<128x128xf32, #tpu.memory_space<vmem>>, vector<8x128xf32>
    %c0_196 = arith.constant 0 : index
    %c0_197 = arith.constant 0 : index
    %412 = vector.load %arg13[%c0_196, %c0_197] : memref<8x32xf32, #tpu.memory_space<vmem>>, vector<8x32xf32>
    %cst_198 = arith.constant dense<0.000000e+00> : vector<8x128xf32>
    %413 = tpu.matmul %412, %14, %cst_198 {dimension_numbers = #tpu.dot_dimension_numbers<[1], [0], [0], [1], [0, 0, 1, 1], [], []>} : vector<8x32xf32>, vector<32x128xf32>, vector<8x128xf32> -> vector<8x128xf32>
    %414 = arith.addf %411, %413 : vector<8x128xf32>
    %415 = vector.extract_strided_slice %414 {offsets = [0, 0], sizes = [8, 32], strides = [1, 1]} : vector<8x128xf32> to vector<8x32xf32>
    %416 = arith.negf %415 : vector<8x32xf32>
    %417 = math.exp %416 : vector<8x32xf32>
    %cst_199 = arith.constant 1.000000e+00 : f32
    %418 = vector.broadcast %cst_199 : f32 to vector<8x32xf32>
    %419 = arith.addf %418, %417 : vector<8x32xf32>
    %420 = arith.divf %418, %419 : vector<8x32xf32>
    %421 = vector.extract_strided_slice %414 {offsets = [0, 32], sizes = [8, 32], strides = [1, 1]} : vector<8x128xf32> to vector<8x32xf32>
    %422 = arith.negf %421 : vector<8x32xf32>
    %423 = math.exp %422 : vector<8x32xf32>
    %cst_200 = arith.constant 1.000000e+00 : f32
    %424 = vector.broadcast %cst_200 : f32 to vector<8x32xf32>
    %425 = arith.addf %424, %423 : vector<8x32xf32>
    %426 = arith.divf %424, %425 : vector<8x32xf32>
    %427 = vector.extract_strided_slice %414 {offsets = [0, 64], sizes = [8, 32], strides = [1, 1]} : vector<8x128xf32> to vector<8x32xf32>
    %428 = math.tanh %427 : vector<8x32xf32>
    %429 = vector.extract_strided_slice %414 {offsets = [0, 96], sizes = [8, 32], strides = [1, 1]} : vector<8x128xf32> to vector<8x32xf32>
    %430 = arith.negf %429 : vector<8x32xf32>
    %431 = math.exp %430 : vector<8x32xf32>
    %cst_201 = arith.constant 1.000000e+00 : f32
    %432 = vector.broadcast %cst_201 : f32 to vector<8x32xf32>
    %433 = arith.addf %432, %431 : vector<8x32xf32>
    %434 = arith.divf %432, %433 : vector<8x32xf32>
    %c0_202 = arith.constant 0 : index
    %c0_203 = arith.constant 0 : index
    %435 = vector.load %arg14[%c0_202, %c0_203] : memref<8x32xf32, #tpu.memory_space<vmem>>, vector<8x32xf32>
    %436 = arith.mulf %426, %435 : vector<8x32xf32>
    %437 = arith.mulf %420, %428 : vector<8x32xf32>
    %438 = arith.addf %436, %437 : vector<8x32xf32>
    %439 = math.tanh %438 : vector<8x32xf32>
    %440 = arith.mulf %434, %439 : vector<8x32xf32>
    %c0_204 = arith.constant 0 : index
    %c0_205 = arith.constant 0 : index
    %441 = vector.load %arg13[%c0_204, %c0_205] : memref<8x32xf32, #tpu.memory_space<vmem>>, vector<8x32xf32>
    tpu.vector_store %arg13[%c0_204, %c0_205], %440 {strides = array<i32>} : memref<8x32xf32, #tpu.memory_space<vmem>>, vector<8x32xf32>,
    %c0_206 = arith.constant 0 : index
    %c0_207 = arith.constant 0 : index
    %442 = vector.load %arg14[%c0_206, %c0_207] : memref<8x32xf32, #tpu.memory_space<vmem>>, vector<8x32xf32>
    tpu.vector_store %arg14[%c0_206, %c0_207], %438 {strides = array<i32>} : memref<8x32xf32, #tpu.memory_space<vmem>>, vector<8x32xf32>,
    %c96_208 = arith.constant 96 : index
    %c0_209 = arith.constant 0 : index
    %443 = vector.load %arg12[%c96_208, %c0_209] : memref<128x32xf32, #tpu.memory_space<vmem>>, vector<8x32xf32>
    tpu.vector_store %arg12[%c96_208, %c0_209], %440 {strides = array<i32>} : memref<128x32xf32, #tpu.memory_space<vmem>>, vector<8x32xf32>,
    %c104 = arith.constant 104 : index
    %c0_210 = arith.constant 0 : index
    %444 = vector.load %arg11[%c104, %c0_210] : memref<128x128xf32, #tpu.memory_space<vmem>>, vector<8x128xf32>
    %c0_211 = arith.constant 0 : index
    %c0_212 = arith.constant 0 : index
    %445 = vector.load %arg13[%c0_211, %c0_212] : memref<8x32xf32, #tpu.memory_space<vmem>>, vector<8x32xf32>
    %cst_213 = arith.constant dense<0.000000e+00> : vector<8x128xf32>
    %446 = tpu.matmul %445, %14, %cst_213 {dimension_numbers = #tpu.dot_dimension_numbers<[1], [0], [0], [1], [0, 0, 1, 1], [], []>} : vector<8x32xf32>, vector<32x128xf32>, vector<8x128xf32> -> vector<8x128xf32>
    %447 = arith.addf %444, %446 : vector<8x128xf32>
    %448 = vector.extract_strided_slice %447 {offsets = [0, 0], sizes = [8, 32], strides = [1, 1]} : vector<8x128xf32> to vector<8x32xf32>
    %449 = arith.negf %448 : vector<8x32xf32>
    %450 = math.exp %449 : vector<8x32xf32>
    %cst_214 = arith.constant 1.000000e+00 : f32
    %451 = vector.broadcast %cst_214 : f32 to vector<8x32xf32>
    %452 = arith.addf %451, %450 : vector<8x32xf32>
    %453 = arith.divf %451, %452 : vector<8x32xf32>
    %454 = vector.extract_strided_slice %447 {offsets = [0, 32], sizes = [8, 32], strides = [1, 1]} : vector<8x128xf32> to vector<8x32xf32>
    %455 = arith.negf %454 : vector<8x32xf32>
    %456 = math.exp %455 : vector<8x32xf32>
    %cst_215 = arith.constant 1.000000e+00 : f32
    %457 = vector.broadcast %cst_215 : f32 to vector<8x32xf32>
    %458 = arith.addf %457, %456 : vector<8x32xf32>
    %459 = arith.divf %457, %458 : vector<8x32xf32>
    %460 = vector.extract_strided_slice %447 {offsets = [0, 64], sizes = [8, 32], strides = [1, 1]} : vector<8x128xf32> to vector<8x32xf32>
    %461 = math.tanh %460 : vector<8x32xf32>
    %462 = vector.extract_strided_slice %447 {offsets = [0, 96], sizes = [8, 32], strides = [1, 1]} : vector<8x128xf32> to vector<8x32xf32>
    %463 = arith.negf %462 : vector<8x32xf32>
    %464 = math.exp %463 : vector<8x32xf32>
    %cst_216 = arith.constant 1.000000e+00 : f32
    %465 = vector.broadcast %cst_216 : f32 to vector<8x32xf32>
    %466 = arith.addf %465, %464 : vector<8x32xf32>
    %467 = arith.divf %465, %466 : vector<8x32xf32>
    %c0_217 = arith.constant 0 : index
    %c0_218 = arith.constant 0 : index
    %468 = vector.load %arg14[%c0_217, %c0_218] : memref<8x32xf32, #tpu.memory_space<vmem>>, vector<8x32xf32>
    %469 = arith.mulf %459, %468 : vector<8x32xf32>
    %470 = arith.mulf %453, %461 : vector<8x32xf32>
    %471 = arith.addf %469, %470 : vector<8x32xf32>
    %472 = math.tanh %471 : vector<8x32xf32>
    %473 = arith.mulf %467, %472 : vector<8x32xf32>
    %c0_219 = arith.constant 0 : index
    %c0_220 = arith.constant 0 : index
    %474 = vector.load %arg13[%c0_219, %c0_220] : memref<8x32xf32, #tpu.memory_space<vmem>>, vector<8x32xf32>
    tpu.vector_store %arg13[%c0_219, %c0_220], %473 {strides = array<i32>} : memref<8x32xf32, #tpu.memory_space<vmem>>, vector<8x32xf32>,
    %c0_221 = arith.constant 0 : index
    %c0_222 = arith.constant 0 : index
    %475 = vector.load %arg14[%c0_221, %c0_222] : memref<8x32xf32, #tpu.memory_space<vmem>>, vector<8x32xf32>
    tpu.vector_store %arg14[%c0_221, %c0_222], %471 {strides = array<i32>} : memref<8x32xf32, #tpu.memory_space<vmem>>, vector<8x32xf32>,
    %c104_223 = arith.constant 104 : index
    %c0_224 = arith.constant 0 : index
    %476 = vector.load %arg12[%c104_223, %c0_224] : memref<128x32xf32, #tpu.memory_space<vmem>>, vector<8x32xf32>
    tpu.vector_store %arg12[%c104_223, %c0_224], %473 {strides = array<i32>} : memref<128x32xf32, #tpu.memory_space<vmem>>, vector<8x32xf32>,
    %c112 = arith.constant 112 : index
    %c0_225 = arith.constant 0 : index
    %477 = vector.load %arg11[%c112, %c0_225] : memref<128x128xf32, #tpu.memory_space<vmem>>, vector<8x128xf32>
    %c0_226 = arith.constant 0 : index
    %c0_227 = arith.constant 0 : index
    %478 = vector.load %arg13[%c0_226, %c0_227] : memref<8x32xf32, #tpu.memory_space<vmem>>, vector<8x32xf32>
    %cst_228 = arith.constant dense<0.000000e+00> : vector<8x128xf32>
    %479 = tpu.matmul %478, %14, %cst_228 {dimension_numbers = #tpu.dot_dimension_numbers<[1], [0], [0], [1], [0, 0, 1, 1], [], []>} : vector<8x32xf32>, vector<32x128xf32>, vector<8x128xf32> -> vector<8x128xf32>
    %480 = arith.addf %477, %479 : vector<8x128xf32>
    %481 = vector.extract_strided_slice %480 {offsets = [0, 0], sizes = [8, 32], strides = [1, 1]} : vector<8x128xf32> to vector<8x32xf32>
    %482 = arith.negf %481 : vector<8x32xf32>
    %483 = math.exp %482 : vector<8x32xf32>
    %cst_229 = arith.constant 1.000000e+00 : f32
    %484 = vector.broadcast %cst_229 : f32 to vector<8x32xf32>
    %485 = arith.addf %484, %483 : vector<8x32xf32>
    %486 = arith.divf %484, %485 : vector<8x32xf32>
    %487 = vector.extract_strided_slice %480 {offsets = [0, 32], sizes = [8, 32], strides = [1, 1]} : vector<8x128xf32> to vector<8x32xf32>
    %488 = arith.negf %487 : vector<8x32xf32>
    %489 = math.exp %488 : vector<8x32xf32>
    %cst_230 = arith.constant 1.000000e+00 : f32
    %490 = vector.broadcast %cst_230 : f32 to vector<8x32xf32>
    %491 = arith.addf %490, %489 : vector<8x32xf32>
    %492 = arith.divf %490, %491 : vector<8x32xf32>
    %493 = vector.extract_strided_slice %480 {offsets = [0, 64], sizes = [8, 32], strides = [1, 1]} : vector<8x128xf32> to vector<8x32xf32>
    %494 = math.tanh %493 : vector<8x32xf32>
    %495 = vector.extract_strided_slice %480 {offsets = [0, 96], sizes = [8, 32], strides = [1, 1]} : vector<8x128xf32> to vector<8x32xf32>
    %496 = arith.negf %495 : vector<8x32xf32>
    %497 = math.exp %496 : vector<8x32xf32>
    %cst_231 = arith.constant 1.000000e+00 : f32
    %498 = vector.broadcast %cst_231 : f32 to vector<8x32xf32>
    %499 = arith.addf %498, %497 : vector<8x32xf32>
    %500 = arith.divf %498, %499 : vector<8x32xf32>
    %c0_232 = arith.constant 0 : index
    %c0_233 = arith.constant 0 : index
    %501 = vector.load %arg14[%c0_232, %c0_233] : memref<8x32xf32, #tpu.memory_space<vmem>>, vector<8x32xf32>
    %502 = arith.mulf %492, %501 : vector<8x32xf32>
    %503 = arith.mulf %486, %494 : vector<8x32xf32>
    %504 = arith.addf %502, %503 : vector<8x32xf32>
    %505 = math.tanh %504 : vector<8x32xf32>
    %506 = arith.mulf %500, %505 : vector<8x32xf32>
    %c0_234 = arith.constant 0 : index
    %c0_235 = arith.constant 0 : index
    %507 = vector.load %arg13[%c0_234, %c0_235] : memref<8x32xf32, #tpu.memory_space<vmem>>, vector<8x32xf32>
    tpu.vector_store %arg13[%c0_234, %c0_235], %506 {strides = array<i32>} : memref<8x32xf32, #tpu.memory_space<vmem>>, vector<8x32xf32>,
    %c0_236 = arith.constant 0 : index
    %c0_237 = arith.constant 0 : index
    %508 = vector.load %arg14[%c0_236, %c0_237] : memref<8x32xf32, #tpu.memory_space<vmem>>, vector<8x32xf32>
    tpu.vector_store %arg14[%c0_236, %c0_237], %504 {strides = array<i32>} : memref<8x32xf32, #tpu.memory_space<vmem>>, vector<8x32xf32>,
    %c112_238 = arith.constant 112 : index
    %c0_239 = arith.constant 0 : index
    %509 = vector.load %arg12[%c112_238, %c0_239] : memref<128x32xf32, #tpu.memory_space<vmem>>, vector<8x32xf32>
    tpu.vector_store %arg12[%c112_238, %c0_239], %506 {strides = array<i32>} : memref<128x32xf32, #tpu.memory_space<vmem>>, vector<8x32xf32>,
    %c120 = arith.constant 120 : index
    %c0_240 = arith.constant 0 : index
    %510 = vector.load %arg11[%c120, %c0_240] : memref<128x128xf32, #tpu.memory_space<vmem>>, vector<8x128xf32>
    %c0_241 = arith.constant 0 : index
    %c0_242 = arith.constant 0 : index
    %511 = vector.load %arg13[%c0_241, %c0_242] : memref<8x32xf32, #tpu.memory_space<vmem>>, vector<8x32xf32>
    %cst_243 = arith.constant dense<0.000000e+00> : vector<8x128xf32>
    %512 = tpu.matmul %511, %14, %cst_243 {dimension_numbers = #tpu.dot_dimension_numbers<[1], [0], [0], [1], [0, 0, 1, 1], [], []>} : vector<8x32xf32>, vector<32x128xf32>, vector<8x128xf32> -> vector<8x128xf32>
    %513 = arith.addf %510, %512 : vector<8x128xf32>
    %514 = vector.extract_strided_slice %513 {offsets = [0, 0], sizes = [8, 32], strides = [1, 1]} : vector<8x128xf32> to vector<8x32xf32>
    %515 = arith.negf %514 : vector<8x32xf32>
    %516 = math.exp %515 : vector<8x32xf32>
    %cst_244 = arith.constant 1.000000e+00 : f32
    %517 = vector.broadcast %cst_244 : f32 to vector<8x32xf32>
    %518 = arith.addf %517, %516 : vector<8x32xf32>
    %519 = arith.divf %517, %518 : vector<8x32xf32>
    %520 = vector.extract_strided_slice %513 {offsets = [0, 32], sizes = [8, 32], strides = [1, 1]} : vector<8x128xf32> to vector<8x32xf32>
    %521 = arith.negf %520 : vector<8x32xf32>
    %522 = math.exp %521 : vector<8x32xf32>
    %cst_245 = arith.constant 1.000000e+00 : f32
    %523 = vector.broadcast %cst_245 : f32 to vector<8x32xf32>
    %524 = arith.addf %523, %522 : vector<8x32xf32>
    %525 = arith.divf %523, %524 : vector<8x32xf32>
    %526 = vector.extract_strided_slice %513 {offsets = [0, 64], sizes = [8, 32], strides = [1, 1]} : vector<8x128xf32> to vector<8x32xf32>
    %527 = math.tanh %526 : vector<8x32xf32>
    %528 = vector.extract_strided_slice %513 {offsets = [0, 96], sizes = [8, 32], strides = [1, 1]} : vector<8x128xf32> to vector<8x32xf32>
    %529 = arith.negf %528 : vector<8x32xf32>
    %530 = math.exp %529 : vector<8x32xf32>
    %cst_246 = arith.constant 1.000000e+00 : f32
    %531 = vector.broadcast %cst_246 : f32 to vector<8x32xf32>
    %532 = arith.addf %531, %530 : vector<8x32xf32>
    %533 = arith.divf %531, %532 : vector<8x32xf32>
    %c0_247 = arith.constant 0 : index
    %c0_248 = arith.constant 0 : index
    %534 = vector.load %arg14[%c0_247, %c0_248] : memref<8x32xf32, #tpu.memory_space<vmem>>, vector<8x32xf32>
    %535 = arith.mulf %525, %534 : vector<8x32xf32>
    %536 = arith.mulf %519, %527 : vector<8x32xf32>
    %537 = arith.addf %535, %536 : vector<8x32xf32>
    %538 = math.tanh %537 : vector<8x32xf32>
    %539 = arith.mulf %533, %538 : vector<8x32xf32>
    %c0_249 = arith.constant 0 : index
    %c0_250 = arith.constant 0 : index
    %540 = vector.load %arg13[%c0_249, %c0_250] : memref<8x32xf32, #tpu.memory_space<vmem>>, vector<8x32xf32>
    tpu.vector_store %arg13[%c0_249, %c0_250], %539 {strides = array<i32>} : memref<8x32xf32, #tpu.memory_space<vmem>>, vector<8x32xf32>,
    %c0_251 = arith.constant 0 : index
    %c0_252 = arith.constant 0 : index
    %541 = vector.load %arg14[%c0_251, %c0_252] : memref<8x32xf32, #tpu.memory_space<vmem>>, vector<8x32xf32>
    tpu.vector_store %arg14[%c0_251, %c0_252], %537 {strides = array<i32>} : memref<8x32xf32, #tpu.memory_space<vmem>>, vector<8x32xf32>,
    %c120_253 = arith.constant 120 : index
    %c0_254 = arith.constant 0 : index
    %542 = vector.load %arg12[%c120_253, %c0_254] : memref<128x32xf32, #tpu.memory_space<vmem>>, vector<8x32xf32>
    tpu.vector_store %arg12[%c120_253, %c0_254], %539 {strides = array<i32>} : memref<128x32xf32, #tpu.memory_space<vmem>>, vector<8x32xf32>,
    %c0_255 = arith.constant 0 : index
    %c0_256 = arith.constant 0 : index
    %543 = vector.load %arg12[%c0_255, %c0_256] : memref<128x32xf32, #tpu.memory_space<vmem>>, vector<128x32xf32>
    %c0_257 = arith.constant 0 : index
    %c0_258 = arith.constant 0 : index
    %544 = vector.load %arg5[%c0_257, %c0_258] : memref<32x128xf32, #tpu.memory_space<vmem>>, vector<32x128xf32>
    %cst_259 = arith.constant dense<0.000000e+00> : vector<128x128xf32>
    %545 = tpu.matmul %543, %544, %cst_259 {dimension_numbers = #tpu.dot_dimension_numbers<[1], [0], [0], [1], [0, 0, 1, 1], [], []>} : vector<128x32xf32>, vector<32x128xf32>, vector<128x128xf32> -> vector<128x128xf32>
    %c0_260 = arith.constant 0 : index
    %c0_261 = arith.constant 0 : index
    %546 = vector.load %arg6[%c0_260, %c0_261] : memref<1x128xf32, #tpu.memory_space<vmem>>, vector<1x128xf32>
    %547 = vector.broadcast %546 : vector<1x128xf32> to vector<128x128xf32>
    %548 = arith.addf %545, %547 : vector<128x128xf32>
    %c0_262 = arith.constant 0 : index
    %c0_263 = arith.constant 0 : index
    %549 = vector.load %arg11[%c0_262, %c0_263] : memref<128x128xf32, #tpu.memory_space<vmem>>, vector<128x128xf32>
    tpu.vector_store %arg11[%c0_262, %c0_263], %548 {strides = array<i32>} : memref<128x128xf32, #tpu.memory_space<vmem>>, vector<128x128xf32>,
    %c0_264 = arith.constant 0 : index
    %c0_265 = arith.constant 0 : index
    %550 = vector.load %arg7[%c0_264, %c0_265] : memref<32x128xf32, #tpu.memory_space<vmem>>, vector<32x128xf32>
    %c0_266 = arith.constant 0 : index
    %c0_267 = arith.constant 0 : index
    %551 = vector.load %arg11[%c0_266, %c0_267] : memref<128x128xf32, #tpu.memory_space<vmem>>, vector<8x128xf32>
    %c0_268 = arith.constant 0 : index
    %c0_269 = arith.constant 0 : index
    %552 = vector.load %arg13[%c0_268, %c0_269] : memref<8x32xf32, #tpu.memory_space<vmem>>, vector<8x32xf32>
    %cst_270 = arith.constant dense<0.000000e+00> : vector<8x128xf32>
    %553 = tpu.matmul %552, %550, %cst_270 {dimension_numbers = #tpu.dot_dimension_numbers<[1], [0], [0], [1], [0, 0, 1, 1], [], []>} : vector<8x32xf32>, vector<32x128xf32>, vector<8x128xf32> -> vector<8x128xf32>
    %554 = arith.addf %551, %553 : vector<8x128xf32>
    %555 = vector.extract_strided_slice %554 {offsets = [0, 0], sizes = [8, 32], strides = [1, 1]} : vector<8x128xf32> to vector<8x32xf32>
    %556 = arith.negf %555 : vector<8x32xf32>
    %557 = math.exp %556 : vector<8x32xf32>
    %cst_271 = arith.constant 1.000000e+00 : f32
    %558 = vector.broadcast %cst_271 : f32 to vector<8x32xf32>
    %559 = arith.addf %558, %557 : vector<8x32xf32>
    %560 = arith.divf %558, %559 : vector<8x32xf32>
    %561 = vector.extract_strided_slice %554 {offsets = [0, 32], sizes = [8, 32], strides = [1, 1]} : vector<8x128xf32> to vector<8x32xf32>
    %562 = arith.negf %561 : vector<8x32xf32>
    %563 = math.exp %562 : vector<8x32xf32>
    %cst_272 = arith.constant 1.000000e+00 : f32
    %564 = vector.broadcast %cst_272 : f32 to vector<8x32xf32>
    %565 = arith.addf %564, %563 : vector<8x32xf32>
    %566 = arith.divf %564, %565 : vector<8x32xf32>
    %567 = vector.extract_strided_slice %554 {offsets = [0, 64], sizes = [8, 32], strides = [1, 1]} : vector<8x128xf32> to vector<8x32xf32>
    %568 = math.tanh %567 : vector<8x32xf32>
    %569 = vector.extract_strided_slice %554 {offsets = [0, 96], sizes = [8, 32], strides = [1, 1]} : vector<8x128xf32> to vector<8x32xf32>
    %570 = arith.negf %569 : vector<8x32xf32>
    %571 = math.exp %570 : vector<8x32xf32>
    %cst_273 = arith.constant 1.000000e+00 : f32
    %572 = vector.broadcast %cst_273 : f32 to vector<8x32xf32>
    %573 = arith.addf %572, %571 : vector<8x32xf32>
    %574 = arith.divf %572, %573 : vector<8x32xf32>
    %c0_274 = arith.constant 0 : index
    %c0_275 = arith.constant 0 : index
    %575 = vector.load %arg14[%c0_274, %c0_275] : memref<8x32xf32, #tpu.memory_space<vmem>>, vector<8x32xf32>
    %576 = arith.mulf %566, %575 : vector<8x32xf32>
    %577 = arith.mulf %560, %568 : vector<8x32xf32>
    %578 = arith.addf %576, %577 : vector<8x32xf32>
    %579 = math.tanh %578 : vector<8x32xf32>
    %580 = arith.mulf %574, %579 : vector<8x32xf32>
    %c0_276 = arith.constant 0 : index
    %c0_277 = arith.constant 0 : index
    %581 = vector.load %arg13[%c0_276, %c0_277] : memref<8x32xf32, #tpu.memory_space<vmem>>, vector<8x32xf32>
    tpu.vector_store %arg13[%c0_276, %c0_277], %580 {strides = array<i32>} : memref<8x32xf32, #tpu.memory_space<vmem>>, vector<8x32xf32>,
    %c0_278 = arith.constant 0 : index
    %c0_279 = arith.constant 0 : index
    %582 = vector.load %arg14[%c0_278, %c0_279] : memref<8x32xf32, #tpu.memory_space<vmem>>, vector<8x32xf32>
    tpu.vector_store %arg14[%c0_278, %c0_279], %578 {strides = array<i32>} : memref<8x32xf32, #tpu.memory_space<vmem>>, vector<8x32xf32>,
    %c8_280 = arith.constant 8 : index
    %c0_281 = arith.constant 0 : index
    %583 = vector.load %arg11[%c8_280, %c0_281] : memref<128x128xf32, #tpu.memory_space<vmem>>, vector<8x128xf32>
    %c0_282 = arith.constant 0 : index
    %c0_283 = arith.constant 0 : index
    %584 = vector.load %arg13[%c0_282, %c0_283] : memref<8x32xf32, #tpu.memory_space<vmem>>, vector<8x32xf32>
    %cst_284 = arith.constant dense<0.000000e+00> : vector<8x128xf32>
    %585 = tpu.matmul %584, %550, %cst_284 {dimension_numbers = #tpu.dot_dimension_numbers<[1], [0], [0], [1], [0, 0, 1, 1], [], []>} : vector<8x32xf32>, vector<32x128xf32>, vector<8x128xf32> -> vector<8x128xf32>
    %586 = arith.addf %583, %585 : vector<8x128xf32>
    %587 = vector.extract_strided_slice %586 {offsets = [0, 0], sizes = [8, 32], strides = [1, 1]} : vector<8x128xf32> to vector<8x32xf32>
    %588 = arith.negf %587 : vector<8x32xf32>
    %589 = math.exp %588 : vector<8x32xf32>
    %cst_285 = arith.constant 1.000000e+00 : f32
    %590 = vector.broadcast %cst_285 : f32 to vector<8x32xf32>
    %591 = arith.addf %590, %589 : vector<8x32xf32>
    %592 = arith.divf %590, %591 : vector<8x32xf32>
    %593 = vector.extract_strided_slice %586 {offsets = [0, 32], sizes = [8, 32], strides = [1, 1]} : vector<8x128xf32> to vector<8x32xf32>
    %594 = arith.negf %593 : vector<8x32xf32>
    %595 = math.exp %594 : vector<8x32xf32>
    %cst_286 = arith.constant 1.000000e+00 : f32
    %596 = vector.broadcast %cst_286 : f32 to vector<8x32xf32>
    %597 = arith.addf %596, %595 : vector<8x32xf32>
    %598 = arith.divf %596, %597 : vector<8x32xf32>
    %599 = vector.extract_strided_slice %586 {offsets = [0, 64], sizes = [8, 32], strides = [1, 1]} : vector<8x128xf32> to vector<8x32xf32>
    %600 = math.tanh %599 : vector<8x32xf32>
    %601 = vector.extract_strided_slice %586 {offsets = [0, 96], sizes = [8, 32], strides = [1, 1]} : vector<8x128xf32> to vector<8x32xf32>
    %602 = arith.negf %601 : vector<8x32xf32>
    %603 = math.exp %602 : vector<8x32xf32>
    %cst_287 = arith.constant 1.000000e+00 : f32
    %604 = vector.broadcast %cst_287 : f32 to vector<8x32xf32>
    %605 = arith.addf %604, %603 : vector<8x32xf32>
    %606 = arith.divf %604, %605 : vector<8x32xf32>
    %c0_288 = arith.constant 0 : index
    %c0_289 = arith.constant 0 : index
    %607 = vector.load %arg14[%c0_288, %c0_289] : memref<8x32xf32, #tpu.memory_space<vmem>>, vector<8x32xf32>
    %608 = arith.mulf %598, %607 : vector<8x32xf32>
    %609 = arith.mulf %592, %600 : vector<8x32xf32>
    %610 = arith.addf %608, %609 : vector<8x32xf32>
    %611 = math.tanh %610 : vector<8x32xf32>
    %612 = arith.mulf %606, %611 : vector<8x32xf32>
    %c0_290 = arith.constant 0 : index
    %c0_291 = arith.constant 0 : index
    %613 = vector.load %arg13[%c0_290, %c0_291] : memref<8x32xf32, #tpu.memory_space<vmem>>, vector<8x32xf32>
    tpu.vector_store %arg13[%c0_290, %c0_291], %612 {strides = array<i32>} : memref<8x32xf32, #tpu.memory_space<vmem>>, vector<8x32xf32>,
    %c0_292 = arith.constant 0 : index
    %c0_293 = arith.constant 0 : index
    %614 = vector.load %arg14[%c0_292, %c0_293] : memref<8x32xf32, #tpu.memory_space<vmem>>, vector<8x32xf32>
    tpu.vector_store %arg14[%c0_292, %c0_293], %610 {strides = array<i32>} : memref<8x32xf32, #tpu.memory_space<vmem>>, vector<8x32xf32>,
    %c16_294 = arith.constant 16 : index
    %c0_295 = arith.constant 0 : index
    %615 = vector.load %arg11[%c16_294, %c0_295] : memref<128x128xf32, #tpu.memory_space<vmem>>, vector<8x128xf32>
    %c0_296 = arith.constant 0 : index
    %c0_297 = arith.constant 0 : index
    %616 = vector.load %arg13[%c0_296, %c0_297] : memref<8x32xf32, #tpu.memory_space<vmem>>, vector<8x32xf32>
    %cst_298 = arith.constant dense<0.000000e+00> : vector<8x128xf32>
    %617 = tpu.matmul %616, %550, %cst_298 {dimension_numbers = #tpu.dot_dimension_numbers<[1], [0], [0], [1], [0, 0, 1, 1], [], []>} : vector<8x32xf32>, vector<32x128xf32>, vector<8x128xf32> -> vector<8x128xf32>
    %618 = arith.addf %615, %617 : vector<8x128xf32>
    %619 = vector.extract_strided_slice %618 {offsets = [0, 0], sizes = [8, 32], strides = [1, 1]} : vector<8x128xf32> to vector<8x32xf32>
    %620 = arith.negf %619 : vector<8x32xf32>
    %621 = math.exp %620 : vector<8x32xf32>
    %cst_299 = arith.constant 1.000000e+00 : f32
    %622 = vector.broadcast %cst_299 : f32 to vector<8x32xf32>
    %623 = arith.addf %622, %621 : vector<8x32xf32>
    %624 = arith.divf %622, %623 : vector<8x32xf32>
    %625 = vector.extract_strided_slice %618 {offsets = [0, 32], sizes = [8, 32], strides = [1, 1]} : vector<8x128xf32> to vector<8x32xf32>
    %626 = arith.negf %625 : vector<8x32xf32>
    %627 = math.exp %626 : vector<8x32xf32>
    %cst_300 = arith.constant 1.000000e+00 : f32
    %628 = vector.broadcast %cst_300 : f32 to vector<8x32xf32>
    %629 = arith.addf %628, %627 : vector<8x32xf32>
    %630 = arith.divf %628, %629 : vector<8x32xf32>
    %631 = vector.extract_strided_slice %618 {offsets = [0, 64], sizes = [8, 32], strides = [1, 1]} : vector<8x128xf32> to vector<8x32xf32>
    %632 = math.tanh %631 : vector<8x32xf32>
    %633 = vector.extract_strided_slice %618 {offsets = [0, 96], sizes = [8, 32], strides = [1, 1]} : vector<8x128xf32> to vector<8x32xf32>
    %634 = arith.negf %633 : vector<8x32xf32>
    %635 = math.exp %634 : vector<8x32xf32>
    %cst_301 = arith.constant 1.000000e+00 : f32
    %636 = vector.broadcast %cst_301 : f32 to vector<8x32xf32>
    %637 = arith.addf %636, %635 : vector<8x32xf32>
    %638 = arith.divf %636, %637 : vector<8x32xf32>
    %c0_302 = arith.constant 0 : index
    %c0_303 = arith.constant 0 : index
    %639 = vector.load %arg14[%c0_302, %c0_303] : memref<8x32xf32, #tpu.memory_space<vmem>>, vector<8x32xf32>
    %640 = arith.mulf %630, %639 : vector<8x32xf32>
    %641 = arith.mulf %624, %632 : vector<8x32xf32>
    %642 = arith.addf %640, %641 : vector<8x32xf32>
    %643 = math.tanh %642 : vector<8x32xf32>
    %644 = arith.mulf %638, %643 : vector<8x32xf32>
    %c0_304 = arith.constant 0 : index
    %c0_305 = arith.constant 0 : index
    %645 = vector.load %arg13[%c0_304, %c0_305] : memref<8x32xf32, #tpu.memory_space<vmem>>, vector<8x32xf32>
    tpu.vector_store %arg13[%c0_304, %c0_305], %644 {strides = array<i32>} : memref<8x32xf32, #tpu.memory_space<vmem>>, vector<8x32xf32>,
    %c0_306 = arith.constant 0 : index
    %c0_307 = arith.constant 0 : index
    %646 = vector.load %arg14[%c0_306, %c0_307] : memref<8x32xf32, #tpu.memory_space<vmem>>, vector<8x32xf32>
    tpu.vector_store %arg14[%c0_306, %c0_307], %642 {strides = array<i32>} : memref<8x32xf32, #tpu.memory_space<vmem>>, vector<8x32xf32>,
    %c24_308 = arith.constant 24 : index
    %c0_309 = arith.constant 0 : index
    %647 = vector.load %arg11[%c24_308, %c0_309] : memref<128x128xf32, #tpu.memory_space<vmem>>, vector<8x128xf32>
    %c0_310 = arith.constant 0 : index
    %c0_311 = arith.constant 0 : index
    %648 = vector.load %arg13[%c0_310, %c0_311] : memref<8x32xf32, #tpu.memory_space<vmem>>, vector<8x32xf32>
    %cst_312 = arith.constant dense<0.000000e+00> : vector<8x128xf32>
    %649 = tpu.matmul %648, %550, %cst_312 {dimension_numbers = #tpu.dot_dimension_numbers<[1], [0], [0], [1], [0, 0, 1, 1], [], []>} : vector<8x32xf32>, vector<32x128xf32>, vector<8x128xf32> -> vector<8x128xf32>
    %650 = arith.addf %647, %649 : vector<8x128xf32>
    %651 = vector.extract_strided_slice %650 {offsets = [0, 0], sizes = [8, 32], strides = [1, 1]} : vector<8x128xf32> to vector<8x32xf32>
    %652 = arith.negf %651 : vector<8x32xf32>
    %653 = math.exp %652 : vector<8x32xf32>
    %cst_313 = arith.constant 1.000000e+00 : f32
    %654 = vector.broadcast %cst_313 : f32 to vector<8x32xf32>
    %655 = arith.addf %654, %653 : vector<8x32xf32>
    %656 = arith.divf %654, %655 : vector<8x32xf32>
    %657 = vector.extract_strided_slice %650 {offsets = [0, 32], sizes = [8, 32], strides = [1, 1]} : vector<8x128xf32> to vector<8x32xf32>
    %658 = arith.negf %657 : vector<8x32xf32>
    %659 = math.exp %658 : vector<8x32xf32>
    %cst_314 = arith.constant 1.000000e+00 : f32
    %660 = vector.broadcast %cst_314 : f32 to vector<8x32xf32>
    %661 = arith.addf %660, %659 : vector<8x32xf32>
    %662 = arith.divf %660, %661 : vector<8x32xf32>
    %663 = vector.extract_strided_slice %650 {offsets = [0, 64], sizes = [8, 32], strides = [1, 1]} : vector<8x128xf32> to vector<8x32xf32>
    %664 = math.tanh %663 : vector<8x32xf32>
    %665 = vector.extract_strided_slice %650 {offsets = [0, 96], sizes = [8, 32], strides = [1, 1]} : vector<8x128xf32> to vector<8x32xf32>
    %666 = arith.negf %665 : vector<8x32xf32>
    %667 = math.exp %666 : vector<8x32xf32>
    %cst_315 = arith.constant 1.000000e+00 : f32
    %668 = vector.broadcast %cst_315 : f32 to vector<8x32xf32>
    %669 = arith.addf %668, %667 : vector<8x32xf32>
    %670 = arith.divf %668, %669 : vector<8x32xf32>
    %c0_316 = arith.constant 0 : index
    %c0_317 = arith.constant 0 : index
    %671 = vector.load %arg14[%c0_316, %c0_317] : memref<8x32xf32, #tpu.memory_space<vmem>>, vector<8x32xf32>
    %672 = arith.mulf %662, %671 : vector<8x32xf32>
    %673 = arith.mulf %656, %664 : vector<8x32xf32>
    %674 = arith.addf %672, %673 : vector<8x32xf32>
    %675 = math.tanh %674 : vector<8x32xf32>
    %676 = arith.mulf %670, %675 : vector<8x32xf32>
    %c0_318 = arith.constant 0 : index
    %c0_319 = arith.constant 0 : index
    %677 = vector.load %arg13[%c0_318, %c0_319] : memref<8x32xf32, #tpu.memory_space<vmem>>, vector<8x32xf32>
    tpu.vector_store %arg13[%c0_318, %c0_319], %676 {strides = array<i32>} : memref<8x32xf32, #tpu.memory_space<vmem>>, vector<8x32xf32>,
    %c0_320 = arith.constant 0 : index
    %c0_321 = arith.constant 0 : index
    %678 = vector.load %arg14[%c0_320, %c0_321] : memref<8x32xf32, #tpu.memory_space<vmem>>, vector<8x32xf32>
    tpu.vector_store %arg14[%c0_320, %c0_321], %674 {strides = array<i32>} : memref<8x32xf32, #tpu.memory_space<vmem>>, vector<8x32xf32>,
    %c32_322 = arith.constant 32 : index
    %c0_323 = arith.constant 0 : index
    %679 = vector.load %arg11[%c32_322, %c0_323] : memref<128x128xf32, #tpu.memory_space<vmem>>, vector<8x128xf32>
    %c0_324 = arith.constant 0 : index
    %c0_325 = arith.constant 0 : index
    %680 = vector.load %arg13[%c0_324, %c0_325] : memref<8x32xf32, #tpu.memory_space<vmem>>, vector<8x32xf32>
    %cst_326 = arith.constant dense<0.000000e+00> : vector<8x128xf32>
    %681 = tpu.matmul %680, %550, %cst_326 {dimension_numbers = #tpu.dot_dimension_numbers<[1], [0], [0], [1], [0, 0, 1, 1], [], []>} : vector<8x32xf32>, vector<32x128xf32>, vector<8x128xf32> -> vector<8x128xf32>
    %682 = arith.addf %679, %681 : vector<8x128xf32>
    %683 = vector.extract_strided_slice %682 {offsets = [0, 0], sizes = [8, 32], strides = [1, 1]} : vector<8x128xf32> to vector<8x32xf32>
    %684 = arith.negf %683 : vector<8x32xf32>
    %685 = math.exp %684 : vector<8x32xf32>
    %cst_327 = arith.constant 1.000000e+00 : f32
    %686 = vector.broadcast %cst_327 : f32 to vector<8x32xf32>
    %687 = arith.addf %686, %685 : vector<8x32xf32>
    %688 = arith.divf %686, %687 : vector<8x32xf32>
    %689 = vector.extract_strided_slice %682 {offsets = [0, 32], sizes = [8, 32], strides = [1, 1]} : vector<8x128xf32> to vector<8x32xf32>
    %690 = arith.negf %689 : vector<8x32xf32>
    %691 = math.exp %690 : vector<8x32xf32>
    %cst_328 = arith.constant 1.000000e+00 : f32
    %692 = vector.broadcast %cst_328 : f32 to vector<8x32xf32>
    %693 = arith.addf %692, %691 : vector<8x32xf32>
    %694 = arith.divf %692, %693 : vector<8x32xf32>
    %695 = vector.extract_strided_slice %682 {offsets = [0, 64], sizes = [8, 32], strides = [1, 1]} : vector<8x128xf32> to vector<8x32xf32>
    %696 = math.tanh %695 : vector<8x32xf32>
    %697 = vector.extract_strided_slice %682 {offsets = [0, 96], sizes = [8, 32], strides = [1, 1]} : vector<8x128xf32> to vector<8x32xf32>
    %698 = arith.negf %697 : vector<8x32xf32>
    %699 = math.exp %698 : vector<8x32xf32>
    %cst_329 = arith.constant 1.000000e+00 : f32
    %700 = vector.broadcast %cst_329 : f32 to vector<8x32xf32>
    %701 = arith.addf %700, %699 : vector<8x32xf32>
    %702 = arith.divf %700, %701 : vector<8x32xf32>
    %c0_330 = arith.constant 0 : index
    %c0_331 = arith.constant 0 : index
    %703 = vector.load %arg14[%c0_330, %c0_331] : memref<8x32xf32, #tpu.memory_space<vmem>>, vector<8x32xf32>
    %704 = arith.mulf %694, %703 : vector<8x32xf32>
    %705 = arith.mulf %688, %696 : vector<8x32xf32>
    %706 = arith.addf %704, %705 : vector<8x32xf32>
    %707 = math.tanh %706 : vector<8x32xf32>
    %708 = arith.mulf %702, %707 : vector<8x32xf32>
    %c0_332 = arith.constant 0 : index
    %c0_333 = arith.constant 0 : index
    %709 = vector.load %arg13[%c0_332, %c0_333] : memref<8x32xf32, #tpu.memory_space<vmem>>, vector<8x32xf32>
    tpu.vector_store %arg13[%c0_332, %c0_333], %708 {strides = array<i32>} : memref<8x32xf32, #tpu.memory_space<vmem>>, vector<8x32xf32>,
    %c0_334 = arith.constant 0 : index
    %c0_335 = arith.constant 0 : index
    %710 = vector.load %arg14[%c0_334, %c0_335] : memref<8x32xf32, #tpu.memory_space<vmem>>, vector<8x32xf32>
    tpu.vector_store %arg14[%c0_334, %c0_335], %706 {strides = array<i32>} : memref<8x32xf32, #tpu.memory_space<vmem>>, vector<8x32xf32>,
    %c40_336 = arith.constant 40 : index
    %c0_337 = arith.constant 0 : index
    %711 = vector.load %arg11[%c40_336, %c0_337] : memref<128x128xf32, #tpu.memory_space<vmem>>, vector<8x128xf32>
    %c0_338 = arith.constant 0 : index
    %c0_339 = arith.constant 0 : index
    %712 = vector.load %arg13[%c0_338, %c0_339] : memref<8x32xf32, #tpu.memory_space<vmem>>, vector<8x32xf32>
    %cst_340 = arith.constant dense<0.000000e+00> : vector<8x128xf32>
    %713 = tpu.matmul %712, %550, %cst_340 {dimension_numbers = #tpu.dot_dimension_numbers<[1], [0], [0], [1], [0, 0, 1, 1], [], []>} : vector<8x32xf32>, vector<32x128xf32>, vector<8x128xf32> -> vector<8x128xf32>
    %714 = arith.addf %711, %713 : vector<8x128xf32>
    %715 = vector.extract_strided_slice %714 {offsets = [0, 0], sizes = [8, 32], strides = [1, 1]} : vector<8x128xf32> to vector<8x32xf32>
    %716 = arith.negf %715 : vector<8x32xf32>
    %717 = math.exp %716 : vector<8x32xf32>
    %cst_341 = arith.constant 1.000000e+00 : f32
    %718 = vector.broadcast %cst_341 : f32 to vector<8x32xf32>
    %719 = arith.addf %718, %717 : vector<8x32xf32>
    %720 = arith.divf %718, %719 : vector<8x32xf32>
    %721 = vector.extract_strided_slice %714 {offsets = [0, 32], sizes = [8, 32], strides = [1, 1]} : vector<8x128xf32> to vector<8x32xf32>
    %722 = arith.negf %721 : vector<8x32xf32>
    %723 = math.exp %722 : vector<8x32xf32>
    %cst_342 = arith.constant 1.000000e+00 : f32
    %724 = vector.broadcast %cst_342 : f32 to vector<8x32xf32>
    %725 = arith.addf %724, %723 : vector<8x32xf32>
    %726 = arith.divf %724, %725 : vector<8x32xf32>
    %727 = vector.extract_strided_slice %714 {offsets = [0, 64], sizes = [8, 32], strides = [1, 1]} : vector<8x128xf32> to vector<8x32xf32>
    %728 = math.tanh %727 : vector<8x32xf32>
    %729 = vector.extract_strided_slice %714 {offsets = [0, 96], sizes = [8, 32], strides = [1, 1]} : vector<8x128xf32> to vector<8x32xf32>
    %730 = arith.negf %729 : vector<8x32xf32>
    %731 = math.exp %730 : vector<8x32xf32>
    %cst_343 = arith.constant 1.000000e+00 : f32
    %732 = vector.broadcast %cst_343 : f32 to vector<8x32xf32>
    %733 = arith.addf %732, %731 : vector<8x32xf32>
    %734 = arith.divf %732, %733 : vector<8x32xf32>
    %c0_344 = arith.constant 0 : index
    %c0_345 = arith.constant 0 : index
    %735 = vector.load %arg14[%c0_344, %c0_345] : memref<8x32xf32, #tpu.memory_space<vmem>>, vector<8x32xf32>
    %736 = arith.mulf %726, %735 : vector<8x32xf32>
    %737 = arith.mulf %720, %728 : vector<8x32xf32>
    %738 = arith.addf %736, %737 : vector<8x32xf32>
    %739 = math.tanh %738 : vector<8x32xf32>
    %740 = arith.mulf %734, %739 : vector<8x32xf32>
    %c0_346 = arith.constant 0 : index
    %c0_347 = arith.constant 0 : index
    %741 = vector.load %arg13[%c0_346, %c0_347] : memref<8x32xf32, #tpu.memory_space<vmem>>, vector<8x32xf32>
    tpu.vector_store %arg13[%c0_346, %c0_347], %740 {strides = array<i32>} : memref<8x32xf32, #tpu.memory_space<vmem>>, vector<8x32xf32>,
    %c0_348 = arith.constant 0 : index
    %c0_349 = arith.constant 0 : index
    %742 = vector.load %arg14[%c0_348, %c0_349] : memref<8x32xf32, #tpu.memory_space<vmem>>, vector<8x32xf32>
    tpu.vector_store %arg14[%c0_348, %c0_349], %738 {strides = array<i32>} : memref<8x32xf32, #tpu.memory_space<vmem>>, vector<8x32xf32>,
    %c48_350 = arith.constant 48 : index
    %c0_351 = arith.constant 0 : index
    %743 = vector.load %arg11[%c48_350, %c0_351] : memref<128x128xf32, #tpu.memory_space<vmem>>, vector<8x128xf32>
    %c0_352 = arith.constant 0 : index
    %c0_353 = arith.constant 0 : index
    %744 = vector.load %arg13[%c0_352, %c0_353] : memref<8x32xf32, #tpu.memory_space<vmem>>, vector<8x32xf32>
    %cst_354 = arith.constant dense<0.000000e+00> : vector<8x128xf32>
    %745 = tpu.matmul %744, %550, %cst_354 {dimension_numbers = #tpu.dot_dimension_numbers<[1], [0], [0], [1], [0, 0, 1, 1], [], []>} : vector<8x32xf32>, vector<32x128xf32>, vector<8x128xf32> -> vector<8x128xf32>
    %746 = arith.addf %743, %745 : vector<8x128xf32>
    %747 = vector.extract_strided_slice %746 {offsets = [0, 0], sizes = [8, 32], strides = [1, 1]} : vector<8x128xf32> to vector<8x32xf32>
    %748 = arith.negf %747 : vector<8x32xf32>
    %749 = math.exp %748 : vector<8x32xf32>
    %cst_355 = arith.constant 1.000000e+00 : f32
    %750 = vector.broadcast %cst_355 : f32 to vector<8x32xf32>
    %751 = arith.addf %750, %749 : vector<8x32xf32>
    %752 = arith.divf %750, %751 : vector<8x32xf32>
    %753 = vector.extract_strided_slice %746 {offsets = [0, 32], sizes = [8, 32], strides = [1, 1]} : vector<8x128xf32> to vector<8x32xf32>
    %754 = arith.negf %753 : vector<8x32xf32>
    %755 = math.exp %754 : vector<8x32xf32>
    %cst_356 = arith.constant 1.000000e+00 : f32
    %756 = vector.broadcast %cst_356 : f32 to vector<8x32xf32>
    %757 = arith.addf %756, %755 : vector<8x32xf32>
    %758 = arith.divf %756, %757 : vector<8x32xf32>
    %759 = vector.extract_strided_slice %746 {offsets = [0, 64], sizes = [8, 32], strides = [1, 1]} : vector<8x128xf32> to vector<8x32xf32>
    %760 = math.tanh %759 : vector<8x32xf32>
    %761 = vector.extract_strided_slice %746 {offsets = [0, 96], sizes = [8, 32], strides = [1, 1]} : vector<8x128xf32> to vector<8x32xf32>
    %762 = arith.negf %761 : vector<8x32xf32>
    %763 = math.exp %762 : vector<8x32xf32>
    %cst_357 = arith.constant 1.000000e+00 : f32
    %764 = vector.broadcast %cst_357 : f32 to vector<8x32xf32>
    %765 = arith.addf %764, %763 : vector<8x32xf32>
    %766 = arith.divf %764, %765 : vector<8x32xf32>
    %c0_358 = arith.constant 0 : index
    %c0_359 = arith.constant 0 : index
    %767 = vector.load %arg14[%c0_358, %c0_359] : memref<8x32xf32, #tpu.memory_space<vmem>>, vector<8x32xf32>
    %768 = arith.mulf %758, %767 : vector<8x32xf32>
    %769 = arith.mulf %752, %760 : vector<8x32xf32>
    %770 = arith.addf %768, %769 : vector<8x32xf32>
    %771 = math.tanh %770 : vector<8x32xf32>
    %772 = arith.mulf %766, %771 : vector<8x32xf32>
    %c0_360 = arith.constant 0 : index
    %c0_361 = arith.constant 0 : index
    %773 = vector.load %arg13[%c0_360, %c0_361] : memref<8x32xf32, #tpu.memory_space<vmem>>, vector<8x32xf32>
    tpu.vector_store %arg13[%c0_360, %c0_361], %772 {strides = array<i32>} : memref<8x32xf32, #tpu.memory_space<vmem>>, vector<8x32xf32>,
    %c0_362 = arith.constant 0 : index
    %c0_363 = arith.constant 0 : index
    %774 = vector.load %arg14[%c0_362, %c0_363] : memref<8x32xf32, #tpu.memory_space<vmem>>, vector<8x32xf32>
    tpu.vector_store %arg14[%c0_362, %c0_363], %770 {strides = array<i32>} : memref<8x32xf32, #tpu.memory_space<vmem>>, vector<8x32xf32>,
    %c56_364 = arith.constant 56 : index
    %c0_365 = arith.constant 0 : index
    %775 = vector.load %arg11[%c56_364, %c0_365] : memref<128x128xf32, #tpu.memory_space<vmem>>, vector<8x128xf32>
    %c0_366 = arith.constant 0 : index
    %c0_367 = arith.constant 0 : index
    %776 = vector.load %arg13[%c0_366, %c0_367] : memref<8x32xf32, #tpu.memory_space<vmem>>, vector<8x32xf32>
    %cst_368 = arith.constant dense<0.000000e+00> : vector<8x128xf32>
    %777 = tpu.matmul %776, %550, %cst_368 {dimension_numbers = #tpu.dot_dimension_numbers<[1], [0], [0], [1], [0, 0, 1, 1], [], []>} : vector<8x32xf32>, vector<32x128xf32>, vector<8x128xf32> -> vector<8x128xf32>
    %778 = arith.addf %775, %777 : vector<8x128xf32>
    %779 = vector.extract_strided_slice %778 {offsets = [0, 0], sizes = [8, 32], strides = [1, 1]} : vector<8x128xf32> to vector<8x32xf32>
    %780 = arith.negf %779 : vector<8x32xf32>
    %781 = math.exp %780 : vector<8x32xf32>
    %cst_369 = arith.constant 1.000000e+00 : f32
    %782 = vector.broadcast %cst_369 : f32 to vector<8x32xf32>
    %783 = arith.addf %782, %781 : vector<8x32xf32>
    %784 = arith.divf %782, %783 : vector<8x32xf32>
    %785 = vector.extract_strided_slice %778 {offsets = [0, 32], sizes = [8, 32], strides = [1, 1]} : vector<8x128xf32> to vector<8x32xf32>
    %786 = arith.negf %785 : vector<8x32xf32>
    %787 = math.exp %786 : vector<8x32xf32>
    %cst_370 = arith.constant 1.000000e+00 : f32
    %788 = vector.broadcast %cst_370 : f32 to vector<8x32xf32>
    %789 = arith.addf %788, %787 : vector<8x32xf32>
    %790 = arith.divf %788, %789 : vector<8x32xf32>
    %791 = vector.extract_strided_slice %778 {offsets = [0, 64], sizes = [8, 32], strides = [1, 1]} : vector<8x128xf32> to vector<8x32xf32>
    %792 = math.tanh %791 : vector<8x32xf32>
    %793 = vector.extract_strided_slice %778 {offsets = [0, 96], sizes = [8, 32], strides = [1, 1]} : vector<8x128xf32> to vector<8x32xf32>
    %794 = arith.negf %793 : vector<8x32xf32>
    %795 = math.exp %794 : vector<8x32xf32>
    %cst_371 = arith.constant 1.000000e+00 : f32
    %796 = vector.broadcast %cst_371 : f32 to vector<8x32xf32>
    %797 = arith.addf %796, %795 : vector<8x32xf32>
    %798 = arith.divf %796, %797 : vector<8x32xf32>
    %c0_372 = arith.constant 0 : index
    %c0_373 = arith.constant 0 : index
    %799 = vector.load %arg14[%c0_372, %c0_373] : memref<8x32xf32, #tpu.memory_space<vmem>>, vector<8x32xf32>
    %800 = arith.mulf %790, %799 : vector<8x32xf32>
    %801 = arith.mulf %784, %792 : vector<8x32xf32>
    %802 = arith.addf %800, %801 : vector<8x32xf32>
    %803 = math.tanh %802 : vector<8x32xf32>
    %804 = arith.mulf %798, %803 : vector<8x32xf32>
    %c0_374 = arith.constant 0 : index
    %c0_375 = arith.constant 0 : index
    %805 = vector.load %arg13[%c0_374, %c0_375] : memref<8x32xf32, #tpu.memory_space<vmem>>, vector<8x32xf32>
    tpu.vector_store %arg13[%c0_374, %c0_375], %804 {strides = array<i32>} : memref<8x32xf32, #tpu.memory_space<vmem>>, vector<8x32xf32>,
    %c0_376 = arith.constant 0 : index
    %c0_377 = arith.constant 0 : index
    %806 = vector.load %arg14[%c0_376, %c0_377] : memref<8x32xf32, #tpu.memory_space<vmem>>, vector<8x32xf32>
    tpu.vector_store %arg14[%c0_376, %c0_377], %802 {strides = array<i32>} : memref<8x32xf32, #tpu.memory_space<vmem>>, vector<8x32xf32>,
    %c64_378 = arith.constant 64 : index
    %c0_379 = arith.constant 0 : index
    %807 = vector.load %arg11[%c64_378, %c0_379] : memref<128x128xf32, #tpu.memory_space<vmem>>, vector<8x128xf32>
    %c0_380 = arith.constant 0 : index
    %c0_381 = arith.constant 0 : index
    %808 = vector.load %arg13[%c0_380, %c0_381] : memref<8x32xf32, #tpu.memory_space<vmem>>, vector<8x32xf32>
    %cst_382 = arith.constant dense<0.000000e+00> : vector<8x128xf32>
    %809 = tpu.matmul %808, %550, %cst_382 {dimension_numbers = #tpu.dot_dimension_numbers<[1], [0], [0], [1], [0, 0, 1, 1], [], []>} : vector<8x32xf32>, vector<32x128xf32>, vector<8x128xf32> -> vector<8x128xf32>
    %810 = arith.addf %807, %809 : vector<8x128xf32>
    %811 = vector.extract_strided_slice %810 {offsets = [0, 0], sizes = [8, 32], strides = [1, 1]} : vector<8x128xf32> to vector<8x32xf32>
    %812 = arith.negf %811 : vector<8x32xf32>
    %813 = math.exp %812 : vector<8x32xf32>
    %cst_383 = arith.constant 1.000000e+00 : f32
    %814 = vector.broadcast %cst_383 : f32 to vector<8x32xf32>
    %815 = arith.addf %814, %813 : vector<8x32xf32>
    %816 = arith.divf %814, %815 : vector<8x32xf32>
    %817 = vector.extract_strided_slice %810 {offsets = [0, 32], sizes = [8, 32], strides = [1, 1]} : vector<8x128xf32> to vector<8x32xf32>
    %818 = arith.negf %817 : vector<8x32xf32>
    %819 = math.exp %818 : vector<8x32xf32>
    %cst_384 = arith.constant 1.000000e+00 : f32
    %820 = vector.broadcast %cst_384 : f32 to vector<8x32xf32>
    %821 = arith.addf %820, %819 : vector<8x32xf32>
    %822 = arith.divf %820, %821 : vector<8x32xf32>
    %823 = vector.extract_strided_slice %810 {offsets = [0, 64], sizes = [8, 32], strides = [1, 1]} : vector<8x128xf32> to vector<8x32xf32>
    %824 = math.tanh %823 : vector<8x32xf32>
    %825 = vector.extract_strided_slice %810 {offsets = [0, 96], sizes = [8, 32], strides = [1, 1]} : vector<8x128xf32> to vector<8x32xf32>
    %826 = arith.negf %825 : vector<8x32xf32>
    %827 = math.exp %826 : vector<8x32xf32>
    %cst_385 = arith.constant 1.000000e+00 : f32
    %828 = vector.broadcast %cst_385 : f32 to vector<8x32xf32>
    %829 = arith.addf %828, %827 : vector<8x32xf32>
    %830 = arith.divf %828, %829 : vector<8x32xf32>
    %c0_386 = arith.constant 0 : index
    %c0_387 = arith.constant 0 : index
    %831 = vector.load %arg14[%c0_386, %c0_387] : memref<8x32xf32, #tpu.memory_space<vmem>>, vector<8x32xf32>
    %832 = arith.mulf %822, %831 : vector<8x32xf32>
    %833 = arith.mulf %816, %824 : vector<8x32xf32>
    %834 = arith.addf %832, %833 : vector<8x32xf32>
    %835 = math.tanh %834 : vector<8x32xf32>
    %836 = arith.mulf %830, %835 : vector<8x32xf32>
    %c0_388 = arith.constant 0 : index
    %c0_389 = arith.constant 0 : index
    %837 = vector.load %arg13[%c0_388, %c0_389] : memref<8x32xf32, #tpu.memory_space<vmem>>, vector<8x32xf32>
    tpu.vector_store %arg13[%c0_388, %c0_389], %836 {strides = array<i32>} : memref<8x32xf32, #tpu.memory_space<vmem>>, vector<8x32xf32>,
    %c0_390 = arith.constant 0 : index
    %c0_391 = arith.constant 0 : index
    %838 = vector.load %arg14[%c0_390, %c0_391] : memref<8x32xf32, #tpu.memory_space<vmem>>, vector<8x32xf32>
    tpu.vector_store %arg14[%c0_390, %c0_391], %834 {strides = array<i32>} : memref<8x32xf32, #tpu.memory_space<vmem>>, vector<8x32xf32>,
    %c72_392 = arith.constant 72 : index
    %c0_393 = arith.constant 0 : index
    %839 = vector.load %arg11[%c72_392, %c0_393] : memref<128x128xf32, #tpu.memory_space<vmem>>, vector<8x128xf32>
    %c0_394 = arith.constant 0 : index
    %c0_395 = arith.constant 0 : index
    %840 = vector.load %arg13[%c0_394, %c0_395] : memref<8x32xf32, #tpu.memory_space<vmem>>, vector<8x32xf32>
    %cst_396 = arith.constant dense<0.000000e+00> : vector<8x128xf32>
    %841 = tpu.matmul %840, %550, %cst_396 {dimension_numbers = #tpu.dot_dimension_numbers<[1], [0], [0], [1], [0, 0, 1, 1], [], []>} : vector<8x32xf32>, vector<32x128xf32>, vector<8x128xf32> -> vector<8x128xf32>
    %842 = arith.addf %839, %841 : vector<8x128xf32>
    %843 = vector.extract_strided_slice %842 {offsets = [0, 0], sizes = [8, 32], strides = [1, 1]} : vector<8x128xf32> to vector<8x32xf32>
    %844 = arith.negf %843 : vector<8x32xf32>
    %845 = math.exp %844 : vector<8x32xf32>
    %cst_397 = arith.constant 1.000000e+00 : f32
    %846 = vector.broadcast %cst_397 : f32 to vector<8x32xf32>
    %847 = arith.addf %846, %845 : vector<8x32xf32>
    %848 = arith.divf %846, %847 : vector<8x32xf32>
    %849 = vector.extract_strided_slice %842 {offsets = [0, 32], sizes = [8, 32], strides = [1, 1]} : vector<8x128xf32> to vector<8x32xf32>
    %850 = arith.negf %849 : vector<8x32xf32>
    %851 = math.exp %850 : vector<8x32xf32>
    %cst_398 = arith.constant 1.000000e+00 : f32
    %852 = vector.broadcast %cst_398 : f32 to vector<8x32xf32>
    %853 = arith.addf %852, %851 : vector<8x32xf32>
    %854 = arith.divf %852, %853 : vector<8x32xf32>
    %855 = vector.extract_strided_slice %842 {offsets = [0, 64], sizes = [8, 32], strides = [1, 1]} : vector<8x128xf32> to vector<8x32xf32>
    %856 = math.tanh %855 : vector<8x32xf32>
    %857 = vector.extract_strided_slice %842 {offsets = [0, 96], sizes = [8, 32], strides = [1, 1]} : vector<8x128xf32> to vector<8x32xf32>
    %858 = arith.negf %857 : vector<8x32xf32>
    %859 = math.exp %858 : vector<8x32xf32>
    %cst_399 = arith.constant 1.000000e+00 : f32
    %860 = vector.broadcast %cst_399 : f32 to vector<8x32xf32>
    %861 = arith.addf %860, %859 : vector<8x32xf32>
    %862 = arith.divf %860, %861 : vector<8x32xf32>
    %c0_400 = arith.constant 0 : index
    %c0_401 = arith.constant 0 : index
    %863 = vector.load %arg14[%c0_400, %c0_401] : memref<8x32xf32, #tpu.memory_space<vmem>>, vector<8x32xf32>
    %864 = arith.mulf %854, %863 : vector<8x32xf32>
    %865 = arith.mulf %848, %856 : vector<8x32xf32>
    %866 = arith.addf %864, %865 : vector<8x32xf32>
    %867 = math.tanh %866 : vector<8x32xf32>
    %868 = arith.mulf %862, %867 : vector<8x32xf32>
    %c0_402 = arith.constant 0 : index
    %c0_403 = arith.constant 0 : index
    %869 = vector.load %arg13[%c0_402, %c0_403] : memref<8x32xf32, #tpu.memory_space<vmem>>, vector<8x32xf32>
    tpu.vector_store %arg13[%c0_402, %c0_403], %868 {strides = array<i32>} : memref<8x32xf32, #tpu.memory_space<vmem>>, vector<8x32xf32>,
    %c0_404 = arith.constant 0 : index
    %c0_405 = arith.constant 0 : index
    %870 = vector.load %arg14[%c0_404, %c0_405] : memref<8x32xf32, #tpu.memory_space<vmem>>, vector<8x32xf32>
    tpu.vector_store %arg14[%c0_404, %c0_405], %866 {strides = array<i32>} : memref<8x32xf32, #tpu.memory_space<vmem>>, vector<8x32xf32>,
    %c80_406 = arith.constant 80 : index
    %c0_407 = arith.constant 0 : index
    %871 = vector.load %arg11[%c80_406, %c0_407] : memref<128x128xf32, #tpu.memory_space<vmem>>, vector<8x128xf32>
    %c0_408 = arith.constant 0 : index
    %c0_409 = arith.constant 0 : index
    %872 = vector.load %arg13[%c0_408, %c0_409] : memref<8x32xf32, #tpu.memory_space<vmem>>, vector<8x32xf32>
    %cst_410 = arith.constant dense<0.000000e+00> : vector<8x128xf32>
    %873 = tpu.matmul %872, %550, %cst_410 {dimension_numbers = #tpu.dot_dimension_numbers<[1], [0], [0], [1], [0, 0, 1, 1], [], []>} : vector<8x32xf32>, vector<32x128xf32>, vector<8x128xf32> -> vector<8x128xf32>
    %874 = arith.addf %871, %873 : vector<8x128xf32>
    %875 = vector.extract_strided_slice %874 {offsets = [0, 0], sizes = [8, 32], strides = [1, 1]} : vector<8x128xf32> to vector<8x32xf32>
    %876 = arith.negf %875 : vector<8x32xf32>
    %877 = math.exp %876 : vector<8x32xf32>
    %cst_411 = arith.constant 1.000000e+00 : f32
    %878 = vector.broadcast %cst_411 : f32 to vector<8x32xf32>
    %879 = arith.addf %878, %877 : vector<8x32xf32>
    %880 = arith.divf %878, %879 : vector<8x32xf32>
    %881 = vector.extract_strided_slice %874 {offsets = [0, 32], sizes = [8, 32], strides = [1, 1]} : vector<8x128xf32> to vector<8x32xf32>
    %882 = arith.negf %881 : vector<8x32xf32>
    %883 = math.exp %882 : vector<8x32xf32>
    %cst_412 = arith.constant 1.000000e+00 : f32
    %884 = vector.broadcast %cst_412 : f32 to vector<8x32xf32>
    %885 = arith.addf %884, %883 : vector<8x32xf32>
    %886 = arith.divf %884, %885 : vector<8x32xf32>
    %887 = vector.extract_strided_slice %874 {offsets = [0, 64], sizes = [8, 32], strides = [1, 1]} : vector<8x128xf32> to vector<8x32xf32>
    %888 = math.tanh %887 : vector<8x32xf32>
    %889 = vector.extract_strided_slice %874 {offsets = [0, 96], sizes = [8, 32], strides = [1, 1]} : vector<8x128xf32> to vector<8x32xf32>
    %890 = arith.negf %889 : vector<8x32xf32>
    %891 = math.exp %890 : vector<8x32xf32>
    %cst_413 = arith.constant 1.000000e+00 : f32
    %892 = vector.broadcast %cst_413 : f32 to vector<8x32xf32>
    %893 = arith.addf %892, %891 : vector<8x32xf32>
    %894 = arith.divf %892, %893 : vector<8x32xf32>
    %c0_414 = arith.constant 0 : index
    %c0_415 = arith.constant 0 : index
    %895 = vector.load %arg14[%c0_414, %c0_415] : memref<8x32xf32, #tpu.memory_space<vmem>>, vector<8x32xf32>
    %896 = arith.mulf %886, %895 : vector<8x32xf32>
    %897 = arith.mulf %880, %888 : vector<8x32xf32>
    %898 = arith.addf %896, %897 : vector<8x32xf32>
    %899 = math.tanh %898 : vector<8x32xf32>
    %900 = arith.mulf %894, %899 : vector<8x32xf32>
    %c0_416 = arith.constant 0 : index
    %c0_417 = arith.constant 0 : index
    %901 = vector.load %arg13[%c0_416, %c0_417] : memref<8x32xf32, #tpu.memory_space<vmem>>, vector<8x32xf32>
    tpu.vector_store %arg13[%c0_416, %c0_417], %900 {strides = array<i32>} : memref<8x32xf32, #tpu.memory_space<vmem>>, vector<8x32xf32>,
    %c0_418 = arith.constant 0 : index
    %c0_419 = arith.constant 0 : index
    %902 = vector.load %arg14[%c0_418, %c0_419] : memref<8x32xf32, #tpu.memory_space<vmem>>, vector<8x32xf32>
    tpu.vector_store %arg14[%c0_418, %c0_419], %898 {strides = array<i32>} : memref<8x32xf32, #tpu.memory_space<vmem>>, vector<8x32xf32>,
    %c88_420 = arith.constant 88 : index
    %c0_421 = arith.constant 0 : index
    %903 = vector.load %arg11[%c88_420, %c0_421] : memref<128x128xf32, #tpu.memory_space<vmem>>, vector<8x128xf32>
    %c0_422 = arith.constant 0 : index
    %c0_423 = arith.constant 0 : index
    %904 = vector.load %arg13[%c0_422, %c0_423] : memref<8x32xf32, #tpu.memory_space<vmem>>, vector<8x32xf32>
    %cst_424 = arith.constant dense<0.000000e+00> : vector<8x128xf32>
    %905 = tpu.matmul %904, %550, %cst_424 {dimension_numbers = #tpu.dot_dimension_numbers<[1], [0], [0], [1], [0, 0, 1, 1], [], []>} : vector<8x32xf32>, vector<32x128xf32>, vector<8x128xf32> -> vector<8x128xf32>
    %906 = arith.addf %903, %905 : vector<8x128xf32>
    %907 = vector.extract_strided_slice %906 {offsets = [0, 0], sizes = [8, 32], strides = [1, 1]} : vector<8x128xf32> to vector<8x32xf32>
    %908 = arith.negf %907 : vector<8x32xf32>
    %909 = math.exp %908 : vector<8x32xf32>
    %cst_425 = arith.constant 1.000000e+00 : f32
    %910 = vector.broadcast %cst_425 : f32 to vector<8x32xf32>
    %911 = arith.addf %910, %909 : vector<8x32xf32>
    %912 = arith.divf %910, %911 : vector<8x32xf32>
    %913 = vector.extract_strided_slice %906 {offsets = [0, 32], sizes = [8, 32], strides = [1, 1]} : vector<8x128xf32> to vector<8x32xf32>
    %914 = arith.negf %913 : vector<8x32xf32>
    %915 = math.exp %914 : vector<8x32xf32>
    %cst_426 = arith.constant 1.000000e+00 : f32
    %916 = vector.broadcast %cst_426 : f32 to vector<8x32xf32>
    %917 = arith.addf %916, %915 : vector<8x32xf32>
    %918 = arith.divf %916, %917 : vector<8x32xf32>
    %919 = vector.extract_strided_slice %906 {offsets = [0, 64], sizes = [8, 32], strides = [1, 1]} : vector<8x128xf32> to vector<8x32xf32>
    %920 = math.tanh %919 : vector<8x32xf32>
    %921 = vector.extract_strided_slice %906 {offsets = [0, 96], sizes = [8, 32], strides = [1, 1]} : vector<8x128xf32> to vector<8x32xf32>
    %922 = arith.negf %921 : vector<8x32xf32>
    %923 = math.exp %922 : vector<8x32xf32>
    %cst_427 = arith.constant 1.000000e+00 : f32
    %924 = vector.broadcast %cst_427 : f32 to vector<8x32xf32>
    %925 = arith.addf %924, %923 : vector<8x32xf32>
    %926 = arith.divf %924, %925 : vector<8x32xf32>
    %c0_428 = arith.constant 0 : index
    %c0_429 = arith.constant 0 : index
    %927 = vector.load %arg14[%c0_428, %c0_429] : memref<8x32xf32, #tpu.memory_space<vmem>>, vector<8x32xf32>
    %928 = arith.mulf %918, %927 : vector<8x32xf32>
    %929 = arith.mulf %912, %920 : vector<8x32xf32>
    %930 = arith.addf %928, %929 : vector<8x32xf32>
    %931 = math.tanh %930 : vector<8x32xf32>
    %932 = arith.mulf %926, %931 : vector<8x32xf32>
    %c0_430 = arith.constant 0 : index
    %c0_431 = arith.constant 0 : index
    %933 = vector.load %arg13[%c0_430, %c0_431] : memref<8x32xf32, #tpu.memory_space<vmem>>, vector<8x32xf32>
    tpu.vector_store %arg13[%c0_430, %c0_431], %932 {strides = array<i32>} : memref<8x32xf32, #tpu.memory_space<vmem>>, vector<8x32xf32>,
    %c0_432 = arith.constant 0 : index
    %c0_433 = arith.constant 0 : index
    %934 = vector.load %arg14[%c0_432, %c0_433] : memref<8x32xf32, #tpu.memory_space<vmem>>, vector<8x32xf32>
    tpu.vector_store %arg14[%c0_432, %c0_433], %930 {strides = array<i32>} : memref<8x32xf32, #tpu.memory_space<vmem>>, vector<8x32xf32>,
    %c96_434 = arith.constant 96 : index
    %c0_435 = arith.constant 0 : index
    %935 = vector.load %arg11[%c96_434, %c0_435] : memref<128x128xf32, #tpu.memory_space<vmem>>, vector<8x128xf32>
    %c0_436 = arith.constant 0 : index
    %c0_437 = arith.constant 0 : index
    %936 = vector.load %arg13[%c0_436, %c0_437] : memref<8x32xf32, #tpu.memory_space<vmem>>, vector<8x32xf32>
    %cst_438 = arith.constant dense<0.000000e+00> : vector<8x128xf32>
    %937 = tpu.matmul %936, %550, %cst_438 {dimension_numbers = #tpu.dot_dimension_numbers<[1], [0], [0], [1], [0, 0, 1, 1], [], []>} : vector<8x32xf32>, vector<32x128xf32>, vector<8x128xf32> -> vector<8x128xf32>
    %938 = arith.addf %935, %937 : vector<8x128xf32>
    %939 = vector.extract_strided_slice %938 {offsets = [0, 0], sizes = [8, 32], strides = [1, 1]} : vector<8x128xf32> to vector<8x32xf32>
    %940 = arith.negf %939 : vector<8x32xf32>
    %941 = math.exp %940 : vector<8x32xf32>
    %cst_439 = arith.constant 1.000000e+00 : f32
    %942 = vector.broadcast %cst_439 : f32 to vector<8x32xf32>
    %943 = arith.addf %942, %941 : vector<8x32xf32>
    %944 = arith.divf %942, %943 : vector<8x32xf32>
    %945 = vector.extract_strided_slice %938 {offsets = [0, 32], sizes = [8, 32], strides = [1, 1]} : vector<8x128xf32> to vector<8x32xf32>
    %946 = arith.negf %945 : vector<8x32xf32>
    %947 = math.exp %946 : vector<8x32xf32>
    %cst_440 = arith.constant 1.000000e+00 : f32
    %948 = vector.broadcast %cst_440 : f32 to vector<8x32xf32>
    %949 = arith.addf %948, %947 : vector<8x32xf32>
    %950 = arith.divf %948, %949 : vector<8x32xf32>
    %951 = vector.extract_strided_slice %938 {offsets = [0, 64], sizes = [8, 32], strides = [1, 1]} : vector<8x128xf32> to vector<8x32xf32>
    %952 = math.tanh %951 : vector<8x32xf32>
    %953 = vector.extract_strided_slice %938 {offsets = [0, 96], sizes = [8, 32], strides = [1, 1]} : vector<8x128xf32> to vector<8x32xf32>
    %954 = arith.negf %953 : vector<8x32xf32>
    %955 = math.exp %954 : vector<8x32xf32>
    %cst_441 = arith.constant 1.000000e+00 : f32
    %956 = vector.broadcast %cst_441 : f32 to vector<8x32xf32>
    %957 = arith.addf %956, %955 : vector<8x32xf32>
    %958 = arith.divf %956, %957 : vector<8x32xf32>
    %c0_442 = arith.constant 0 : index
    %c0_443 = arith.constant 0 : index
    %959 = vector.load %arg14[%c0_442, %c0_443] : memref<8x32xf32, #tpu.memory_space<vmem>>, vector<8x32xf32>
    %960 = arith.mulf %950, %959 : vector<8x32xf32>
    %961 = arith.mulf %944, %952 : vector<8x32xf32>
    %962 = arith.addf %960, %961 : vector<8x32xf32>
    %963 = math.tanh %962 : vector<8x32xf32>
    %964 = arith.mulf %958, %963 : vector<8x32xf32>
    %c0_444 = arith.constant 0 : index
    %c0_445 = arith.constant 0 : index
    %965 = vector.load %arg13[%c0_444, %c0_445] : memref<8x32xf32, #tpu.memory_space<vmem>>, vector<8x32xf32>
    tpu.vector_store %arg13[%c0_444, %c0_445], %964 {strides = array<i32>} : memref<8x32xf32, #tpu.memory_space<vmem>>, vector<8x32xf32>,
    %c0_446 = arith.constant 0 : index
    %c0_447 = arith.constant 0 : index
    %966 = vector.load %arg14[%c0_446, %c0_447] : memref<8x32xf32, #tpu.memory_space<vmem>>, vector<8x32xf32>
    tpu.vector_store %arg14[%c0_446, %c0_447], %962 {strides = array<i32>} : memref<8x32xf32, #tpu.memory_space<vmem>>, vector<8x32xf32>,
    %c104_448 = arith.constant 104 : index
    %c0_449 = arith.constant 0 : index
    %967 = vector.load %arg11[%c104_448, %c0_449] : memref<128x128xf32, #tpu.memory_space<vmem>>, vector<8x128xf32>
    %c0_450 = arith.constant 0 : index
    %c0_451 = arith.constant 0 : index
    %968 = vector.load %arg13[%c0_450, %c0_451] : memref<8x32xf32, #tpu.memory_space<vmem>>, vector<8x32xf32>
    %cst_452 = arith.constant dense<0.000000e+00> : vector<8x128xf32>
    %969 = tpu.matmul %968, %550, %cst_452 {dimension_numbers = #tpu.dot_dimension_numbers<[1], [0], [0], [1], [0, 0, 1, 1], [], []>} : vector<8x32xf32>, vector<32x128xf32>, vector<8x128xf32> -> vector<8x128xf32>
    %970 = arith.addf %967, %969 : vector<8x128xf32>
    %971 = vector.extract_strided_slice %970 {offsets = [0, 0], sizes = [8, 32], strides = [1, 1]} : vector<8x128xf32> to vector<8x32xf32>
    %972 = arith.negf %971 : vector<8x32xf32>
    %973 = math.exp %972 : vector<8x32xf32>
    %cst_453 = arith.constant 1.000000e+00 : f32
    %974 = vector.broadcast %cst_453 : f32 to vector<8x32xf32>
    %975 = arith.addf %974, %973 : vector<8x32xf32>
    %976 = arith.divf %974, %975 : vector<8x32xf32>
    %977 = vector.extract_strided_slice %970 {offsets = [0, 32], sizes = [8, 32], strides = [1, 1]} : vector<8x128xf32> to vector<8x32xf32>
    %978 = arith.negf %977 : vector<8x32xf32>
    %979 = math.exp %978 : vector<8x32xf32>
    %cst_454 = arith.constant 1.000000e+00 : f32
    %980 = vector.broadcast %cst_454 : f32 to vector<8x32xf32>
    %981 = arith.addf %980, %979 : vector<8x32xf32>
    %982 = arith.divf %980, %981 : vector<8x32xf32>
    %983 = vector.extract_strided_slice %970 {offsets = [0, 64], sizes = [8, 32], strides = [1, 1]} : vector<8x128xf32> to vector<8x32xf32>
    %984 = math.tanh %983 : vector<8x32xf32>
    %985 = vector.extract_strided_slice %970 {offsets = [0, 96], sizes = [8, 32], strides = [1, 1]} : vector<8x128xf32> to vector<8x32xf32>
    %986 = arith.negf %985 : vector<8x32xf32>
    %987 = math.exp %986 : vector<8x32xf32>
    %cst_455 = arith.constant 1.000000e+00 : f32
    %988 = vector.broadcast %cst_455 : f32 to vector<8x32xf32>
    %989 = arith.addf %988, %987 : vector<8x32xf32>
    %990 = arith.divf %988, %989 : vector<8x32xf32>
    %c0_456 = arith.constant 0 : index
    %c0_457 = arith.constant 0 : index
    %991 = vector.load %arg14[%c0_456, %c0_457] : memref<8x32xf32, #tpu.memory_space<vmem>>, vector<8x32xf32>
    %992 = arith.mulf %982, %991 : vector<8x32xf32>
    %993 = arith.mulf %976, %984 : vector<8x32xf32>
    %994 = arith.addf %992, %993 : vector<8x32xf32>
    %995 = math.tanh %994 : vector<8x32xf32>
    %996 = arith.mulf %990, %995 : vector<8x32xf32>
    %c0_458 = arith.constant 0 : index
    %c0_459 = arith.constant 0 : index
    %997 = vector.load %arg13[%c0_458, %c0_459] : memref<8x32xf32, #tpu.memory_space<vmem>>, vector<8x32xf32>
    tpu.vector_store %arg13[%c0_458, %c0_459], %996 {strides = array<i32>} : memref<8x32xf32, #tpu.memory_space<vmem>>, vector<8x32xf32>,
    %c0_460 = arith.constant 0 : index
    %c0_461 = arith.constant 0 : index
    %998 = vector.load %arg14[%c0_460, %c0_461] : memref<8x32xf32, #tpu.memory_space<vmem>>, vector<8x32xf32>
    tpu.vector_store %arg14[%c0_460, %c0_461], %994 {strides = array<i32>} : memref<8x32xf32, #tpu.memory_space<vmem>>, vector<8x32xf32>,
    %c112_462 = arith.constant 112 : index
    %c0_463 = arith.constant 0 : index
    %999 = vector.load %arg11[%c112_462, %c0_463] : memref<128x128xf32, #tpu.memory_space<vmem>>, vector<8x128xf32>
    %c0_464 = arith.constant 0 : index
    %c0_465 = arith.constant 0 : index
    %1000 = vector.load %arg13[%c0_464, %c0_465] : memref<8x32xf32, #tpu.memory_space<vmem>>, vector<8x32xf32>
    %cst_466 = arith.constant dense<0.000000e+00> : vector<8x128xf32>
    %1001 = tpu.matmul %1000, %550, %cst_466 {dimension_numbers = #tpu.dot_dimension_numbers<[1], [0], [0], [1], [0, 0, 1, 1], [], []>} : vector<8x32xf32>, vector<32x128xf32>, vector<8x128xf32> -> vector<8x128xf32>
    %1002 = arith.addf %999, %1001 : vector<8x128xf32>
    %1003 = vector.extract_strided_slice %1002 {offsets = [0, 0], sizes = [8, 32], strides = [1, 1]} : vector<8x128xf32> to vector<8x32xf32>
    %1004 = arith.negf %1003 : vector<8x32xf32>
    %1005 = math.exp %1004 : vector<8x32xf32>
    %cst_467 = arith.constant 1.000000e+00 : f32
    %1006 = vector.broadcast %cst_467 : f32 to vector<8x32xf32>
    %1007 = arith.addf %1006, %1005 : vector<8x32xf32>
    %1008 = arith.divf %1006, %1007 : vector<8x32xf32>
    %1009 = vector.extract_strided_slice %1002 {offsets = [0, 32], sizes = [8, 32], strides = [1, 1]} : vector<8x128xf32> to vector<8x32xf32>
    %1010 = arith.negf %1009 : vector<8x32xf32>
    %1011 = math.exp %1010 : vector<8x32xf32>
    %cst_468 = arith.constant 1.000000e+00 : f32
    %1012 = vector.broadcast %cst_468 : f32 to vector<8x32xf32>
    %1013 = arith.addf %1012, %1011 : vector<8x32xf32>
    %1014 = arith.divf %1012, %1013 : vector<8x32xf32>
    %1015 = vector.extract_strided_slice %1002 {offsets = [0, 64], sizes = [8, 32], strides = [1, 1]} : vector<8x128xf32> to vector<8x32xf32>
    %1016 = math.tanh %1015 : vector<8x32xf32>
    %1017 = vector.extract_strided_slice %1002 {offsets = [0, 96], sizes = [8, 32], strides = [1, 1]} : vector<8x128xf32> to vector<8x32xf32>
    %1018 = arith.negf %1017 : vector<8x32xf32>
    %1019 = math.exp %1018 : vector<8x32xf32>
    %cst_469 = arith.constant 1.000000e+00 : f32
    %1020 = vector.broadcast %cst_469 : f32 to vector<8x32xf32>
    %1021 = arith.addf %1020, %1019 : vector<8x32xf32>
    %1022 = arith.divf %1020, %1021 : vector<8x32xf32>
    %c0_470 = arith.constant 0 : index
    %c0_471 = arith.constant 0 : index
    %1023 = vector.load %arg14[%c0_470, %c0_471] : memref<8x32xf32, #tpu.memory_space<vmem>>, vector<8x32xf32>
    %1024 = arith.mulf %1014, %1023 : vector<8x32xf32>
    %1025 = arith.mulf %1008, %1016 : vector<8x32xf32>
    %1026 = arith.addf %1024, %1025 : vector<8x32xf32>
    %1027 = math.tanh %1026 : vector<8x32xf32>
    %1028 = arith.mulf %1022, %1027 : vector<8x32xf32>
    %c0_472 = arith.constant 0 : index
    %c0_473 = arith.constant 0 : index
    %1029 = vector.load %arg13[%c0_472, %c0_473] : memref<8x32xf32, #tpu.memory_space<vmem>>, vector<8x32xf32>
    tpu.vector_store %arg13[%c0_472, %c0_473], %1028 {strides = array<i32>} : memref<8x32xf32, #tpu.memory_space<vmem>>, vector<8x32xf32>,
    %c0_474 = arith.constant 0 : index
    %c0_475 = arith.constant 0 : index
    %1030 = vector.load %arg14[%c0_474, %c0_475] : memref<8x32xf32, #tpu.memory_space<vmem>>, vector<8x32xf32>
    tpu.vector_store %arg14[%c0_474, %c0_475], %1026 {strides = array<i32>} : memref<8x32xf32, #tpu.memory_space<vmem>>, vector<8x32xf32>,
    %c120_476 = arith.constant 120 : index
    %c0_477 = arith.constant 0 : index
    %1031 = vector.load %arg11[%c120_476, %c0_477] : memref<128x128xf32, #tpu.memory_space<vmem>>, vector<8x128xf32>
    %c0_478 = arith.constant 0 : index
    %c0_479 = arith.constant 0 : index
    %1032 = vector.load %arg13[%c0_478, %c0_479] : memref<8x32xf32, #tpu.memory_space<vmem>>, vector<8x32xf32>
    %cst_480 = arith.constant dense<0.000000e+00> : vector<8x128xf32>
    %1033 = tpu.matmul %1032, %550, %cst_480 {dimension_numbers = #tpu.dot_dimension_numbers<[1], [0], [0], [1], [0, 0, 1, 1], [], []>} : vector<8x32xf32>, vector<32x128xf32>, vector<8x128xf32> -> vector<8x128xf32>
    %1034 = arith.addf %1031, %1033 : vector<8x128xf32>
    %1035 = vector.extract_strided_slice %1034 {offsets = [0, 0], sizes = [8, 32], strides = [1, 1]} : vector<8x128xf32> to vector<8x32xf32>
    %1036 = arith.negf %1035 : vector<8x32xf32>
    %1037 = math.exp %1036 : vector<8x32xf32>
    %cst_481 = arith.constant 1.000000e+00 : f32
    %1038 = vector.broadcast %cst_481 : f32 to vector<8x32xf32>
    %1039 = arith.addf %1038, %1037 : vector<8x32xf32>
    %1040 = arith.divf %1038, %1039 : vector<8x32xf32>
    %1041 = vector.extract_strided_slice %1034 {offsets = [0, 32], sizes = [8, 32], strides = [1, 1]} : vector<8x128xf32> to vector<8x32xf32>
    %1042 = arith.negf %1041 : vector<8x32xf32>
    %1043 = math.exp %1042 : vector<8x32xf32>
    %cst_482 = arith.constant 1.000000e+00 : f32
    %1044 = vector.broadcast %cst_482 : f32 to vector<8x32xf32>
    %1045 = arith.addf %1044, %1043 : vector<8x32xf32>
    %1046 = arith.divf %1044, %1045 : vector<8x32xf32>
    %1047 = vector.extract_strided_slice %1034 {offsets = [0, 64], sizes = [8, 32], strides = [1, 1]} : vector<8x128xf32> to vector<8x32xf32>
    %1048 = math.tanh %1047 : vector<8x32xf32>
    %1049 = vector.extract_strided_slice %1034 {offsets = [0, 96], sizes = [8, 32], strides = [1, 1]} : vector<8x128xf32> to vector<8x32xf32>
    %1050 = arith.negf %1049 : vector<8x32xf32>
    %1051 = math.exp %1050 : vector<8x32xf32>
    %cst_483 = arith.constant 1.000000e+00 : f32
    %1052 = vector.broadcast %cst_483 : f32 to vector<8x32xf32>
    %1053 = arith.addf %1052, %1051 : vector<8x32xf32>
    %1054 = arith.divf %1052, %1053 : vector<8x32xf32>
    %c0_484 = arith.constant 0 : index
    %c0_485 = arith.constant 0 : index
    %1055 = vector.load %arg14[%c0_484, %c0_485] : memref<8x32xf32, #tpu.memory_space<vmem>>, vector<8x32xf32>
    %1056 = arith.mulf %1046, %1055 : vector<8x32xf32>
    %1057 = arith.mulf %1040, %1048 : vector<8x32xf32>
    %1058 = arith.addf %1056, %1057 : vector<8x32xf32>
    %1059 = math.tanh %1058 : vector<8x32xf32>
    %1060 = arith.mulf %1054, %1059 : vector<8x32xf32>
    %c0_486 = arith.constant 0 : index
    %c0_487 = arith.constant 0 : index
    %1061 = vector.load %arg13[%c0_486, %c0_487] : memref<8x32xf32, #tpu.memory_space<vmem>>, vector<8x32xf32>
    tpu.vector_store %arg13[%c0_486, %c0_487], %1060 {strides = array<i32>} : memref<8x32xf32, #tpu.memory_space<vmem>>, vector<8x32xf32>,
    %c0_488 = arith.constant 0 : index
    %c0_489 = arith.constant 0 : index
    %1062 = vector.load %arg14[%c0_488, %c0_489] : memref<8x32xf32, #tpu.memory_space<vmem>>, vector<8x32xf32>
    tpu.vector_store %arg14[%c0_488, %c0_489], %1058 {strides = array<i32>} : memref<8x32xf32, #tpu.memory_space<vmem>>, vector<8x32xf32>,
    %c0_490 = arith.constant 0 : index
    %c0_491 = arith.constant 0 : index
    %1063 = vector.load %arg13[%c0_490, %c0_491] : memref<8x32xf32, #tpu.memory_space<vmem>>, vector<8x32xf32>
    %c0_492 = arith.constant 0 : index
    %c0_493 = arith.constant 0 : index
    %1064 = vector.load %arg8[%c0_492, %c0_493] : memref<32x8xf32, #tpu.memory_space<vmem>>, vector<32x8xf32>
    %cst_494 = arith.constant dense<0.000000e+00> : vector<8x8xf32>
    %1065 = tpu.matmul %1063, %1064, %cst_494 {dimension_numbers = #tpu.dot_dimension_numbers<[1], [0], [0], [1], [0, 0, 1, 1], [], []>} : vector<8x32xf32>, vector<32x8xf32>, vector<8x8xf32> -> vector<8x8xf32>
    %c0_495 = arith.constant 0 : index
    %c0_496 = arith.constant 0 : index
    %1066 = vector.load %arg9[%c0_495, %c0_496] : memref<1x8xf32, #tpu.memory_space<vmem>>, vector<1x8xf32>
    %1067 = vector.broadcast %1066 : vector<1x8xf32> to vector<8x8xf32>
    %1068 = arith.addf %1065, %1067 : vector<8x8xf32>
    %c0_497 = arith.constant 0 : index
    %c0_498 = arith.constant 0 : index
    %1069 = vector.load %arg10[%c0_497, %c0_498] : memref<8x8xf32, #tpu.memory_space<vmem>>, vector<8x8xf32>
    tpu.vector_store %arg10[%c0_497, %c0_498], %1068 {strides = array<i32>} : memref<8x8xf32, #tpu.memory_space<vmem>>, vector<8x8xf32>,
    return
  }
  func.func @transform_0(%arg0: i32) -> (i32, i32) {
    %c0_i32 = arith.constant 0 : i32
    %c0_i32_0 = arith.constant 0 : i32
    %c0_i32_1 = arith.constant 0 : i32
    return %c0_i32, %c0_i32_0 : i32, i32
  }
  func.func @transform_1(%arg0: i32) -> (i32, i32) {
    %c0_i32 = arith.constant 0 : i32
    %c0_i32_0 = arith.constant 0 : i32
    %c0_i32_1 = arith.constant 0 : i32
    return %c0_i32, %c0_i32_0 : i32, i32
  }
  func.func @transform_2(%arg0: i32) -> (i32, i32) {
    %c0_i32 = arith.constant 0 : i32
    %c0_i32_0 = arith.constant 0 : i32
    %c0_i32_1 = arith.constant 0 : i32
    return %c0_i32, %c0_i32_0 : i32, i32
  }
  func.func @transform_3(%arg0: i32) -> (i32, i32) {
    %c0_i32 = arith.constant 0 : i32
    %c0_i32_0 = arith.constant 0 : i32
    %c0_i32_1 = arith.constant 0 : i32
    return %c0_i32, %c0_i32_0 : i32, i32
  }
  func.func @transform_4(%arg0: i32) -> (i32, i32) {
    %c0_i32 = arith.constant 0 : i32
    %c0_i32_0 = arith.constant 0 : i32
    %c0_i32_1 = arith.constant 0 : i32
    return %c0_i32, %c0_i32_0 : i32, i32
  }
  func.func @transform_5(%arg0: i32) -> (i32, i32) {
    %c0_i32 = arith.constant 0 : i32
    %c0_i32_0 = arith.constant 0 : i32
    %c0_i32_1 = arith.constant 0 : i32
    return %c0_i32, %c0_i32_0 : i32, i32
  }
  func.func @transform_6(%arg0: i32) -> (i32, i32) {
    %c0_i32 = arith.constant 0 : i32
    %c0_i32_0 = arith.constant 0 : i32
    %c0_i32_1 = arith.constant 0 : i32
    return %c0_i32, %c0_i32_0 : i32, i32
  }
  func.func @transform_7(%arg0: i32) -> (i32, i32) {
    %c0_i32 = arith.constant 0 : i32
    %c0_i32_0 = arith.constant 0 : i32
    %c0_i32_1 = arith.constant 0 : i32
    return %c0_i32, %c0_i32_0 : i32, i32
  }
  func.func @transform_8(%arg0: i32) -> (i32, i32) {
    %c0_i32 = arith.constant 0 : i32
    %c0_i32_0 = arith.constant 0 : i32
    %c0_i32_1 = arith.constant 0 : i32
    return %c0_i32, %c0_i32_0 : i32, i32
  }
  func.func @transform_9(%arg0: i32) -> (i32, i32) {
    %c0_i32 = arith.constant 0 : i32
    %c0_i32_0 = arith.constant 0 : i32
    %c0_i32_1 = arith.constant 0 : i32
    return %c0_i32, %c0_i32_0 : i32, i32
  }
}

</mosaic_0001>

<llo_original>
// kernel: lstm_with_scalar2vec_forward.1
$region0: #{lstm_with_scalar2vec_forward.1}
  #allocation0 [shape = 'u32[]', space=smem, size = 0x4, offset = 0x4, fixed_abs, tag = 'smem constant byte address 0x4 - core index']
  #allocation1 [shape = 'u32[144,128]{1,0:T(1,128)}', space=vmem, size = 0x12000, scoped, tag = 'internal scratch']
  #allocation2 [shape = 'f32[128,128]{1,0:T(8,128)}', space=vmem, size = 0x10000, scoped, tag = 'scratch operand']
  #allocation3 [shape = 'f32[128,32]{1,0:T(8,128)}', space=vmem, size = 0x10000, scoped, tag = 'scratch operand']
  #allocation4 [shape = 'f32[8,32]{1,0:T(8,128)}', space=vmem, size = 0x1000, scoped, tag = 'scratch operand']
  #allocation5 [shape = 'f32[8,32]{1,0:T(8,128)}', space=vmem, size = 0x1000, scoped, tag = 'scratch operand']
  %s0 = inlined_call_operand.vmem [shape: f32[128,1], index: 0, kind: input, shape index: {}]
  %s1 = inlined_call_operand.vmem [shape: f32[1,128], index: 1, kind: input, shape index: {}]
  %s2 = inlined_call_operand.vmem [shape: f32[1,128], index: 2, kind: input, shape index: {}]
  %s3 = inlined_call_operand.vmem [shape: f32[32,128], index: 3, kind: input, shape index: {}]
  %s4 = inlined_call_operand.vmem [shape: f32[32,128], index: 4, kind: input, shape index: {}]
  %s5 = inlined_call_operand.vmem [shape: f32[1,128], index: 5, kind: input, shape index: {}]
  %s6 = inlined_call_operand.vmem [shape: f32[32,128], index: 6, kind: input, shape index: {}]
  %s7 = inlined_call_operand.vmem [shape: f32[32,8], index: 7, kind: input, shape index: {}]
  %s8 = inlined_call_operand.vmem [shape: f32[1,8], index: 8, kind: input, shape index: {}]
  %s9 = inlined_call_operand.vmem [shape: f32[8,8], index: 9, kind: output, shape index: {}]
  %s10 = sld [smem:[#allocation0]]
  $region46: #{lstm_with_scalar2vec_forward.1} parent=0
    _
  %s12 = ssub.s32 1, %s10
  %s13 = scalar_select 0, %s12, %s10
  // Predicated region
  $region2: #{lstm_with_scalar2vec_forward.1} parent=0 // pred_check
    _
  $region3: #{lstm_with_scalar2vec_forward.1} parent=0 // pred_check_branch
    %15 = sbr.rel (0) target = $region5
  $region4: #{lstm_with_scalar2vec_forward.1} parent=0 // pred_region
    _
  $region5: #{lstm_with_scalar2vec_forward.1} parent=0 // pred_fallthru
    _
  // Predicated region
  $region6: #{lstm_with_scalar2vec_forward.1} parent=0 // pred_check
    _
  $region7: #{lstm_with_scalar2vec_forward.1} parent=0 // pred_check_branch
    %17 = sbr.rel (0) target = $region9
  $region8: #{lstm_with_scalar2vec_forward.1} parent=0 // pred_region
    _
  $region9: #{lstm_with_scalar2vec_forward.1} parent=0 // pred_fallthru
    _
  // Predicated region
  $region10: #{lstm_with_scalar2vec_forward.1} parent=0 // pred_check
    _
  $region11: #{lstm_with_scalar2vec_forward.1} parent=0 // pred_check_branch
    %19 = sbr.rel (0) target = $region13
  $region12: #{lstm_with_scalar2vec_forward.1} parent=0 // pred_region
    _
  $region13: #{lstm_with_scalar2vec_forward.1} parent=0 // pred_fallthru
    _
  // Predicated region
  $region14: #{lstm_with_scalar2vec_forward.1} parent=0 // pred_check
    _
  $region15: #{lstm_with_scalar2vec_forward.1} parent=0 // pred_check_branch
    %21 = sbr.rel (0) target = $region17
  $region16: #{lstm_with_scalar2vec_forward.1} parent=0 // pred_region
    _
  $region17: #{lstm_with_scalar2vec_forward.1} parent=0 // pred_fallthru
    _
  // Predicated region
  $region18: #{lstm_with_scalar2vec_forward.1} parent=0 // pred_check
    _
  $region19: #{lstm_with_scalar2vec_forward.1} parent=0 // pred_check_branch
    %23 = sbr.rel (0) target = $region21
  $region20: #{lstm_with_scalar2vec_forward.1} parent=0 // pred_region
    _
  $region21: #{lstm_with_scalar2vec_forward.1} parent=0 // pred_fallthru
    _
  // Predicated region
  $region22: #{lstm_with_scalar2vec_forward.1} parent=0 // pred_check
    _
  $region23: #{lstm_with_scalar2vec_forward.1} parent=0 // pred_check_branch
    %25 = sbr.rel (0) target = $region25
  $region24: #{lstm_with_scalar2vec_forward.1} parent=0 // pred_region
    _
  $region25: #{lstm_with_scalar2vec_forward.1} parent=0 // pred_fallthru
    _
  // Predicated region
  $region26: #{lstm_with_scalar2vec_forward.1} parent=0 // pred_check
    _
  $region27: #{lstm_with_scalar2vec_forward.1} parent=0 // pred_check_branch
    %27 = sbr.rel (0) target = $region29
  $region28: #{lstm_with_scalar2vec_forward.1} parent=0 // pred_region
    _
  $region29: #{lstm_with_scalar2vec_forward.1} parent=0 // pred_fallthru
    _
  // Predicated region
  $region30: #{lstm_with_scalar2vec_forward.1} parent=0 // pred_check
    _
  $region31: #{lstm_with_scalar2vec_forward.1} parent=0 // pred_check_branch
    %29 = sbr.rel (0) target = $region33
  $region32: #{lstm_with_scalar2vec_forward.1} parent=0 // pred_region
    _
  $region33: #{lstm_with_scalar2vec_forward.1} parent=0 // pred_fallthru
    _
  // Predicated region
  $region34: #{lstm_with_scalar2vec_forward.1} parent=0 // pred_check
    _
  $region35: #{lstm_with_scalar2vec_forward.1} parent=0 // pred_check_branch
    %31 = sbr.rel (0) target = $region37
  $region36: #{lstm_with_scalar2vec_forward.1} parent=0 // pred_region
    _
  $region37: #{lstm_with_scalar2vec_forward.1} parent=0 // pred_fallthru
    _
  %v32 = vld [vmem:[%s0] sm:$0xff]
  %v33 = vld [vmem:[%s0 + $0x8] sm:$0xff]
  %v34 = vld [vmem:[%s0 + $0x10] sm:$0xff]
  %v35 = vld [vmem:[%s0 + $0x18] sm:$0xff]
  %v36 = vld [vmem:[%s0 + $0x20] sm:$0xff]
  %v37 = vld [vmem:[%s0 + $0x28] sm:$0xff]
  %v38 = vld [vmem:[%s0 + $0x30] sm:$0xff]
  %v39 = vld [vmem:[%s0 + $0x38] sm:$0xff]
  %v40 = vld [vmem:[%s0 + $0x40] sm:$0xff]
  %v41 = vld [vmem:[%s0 + $0x48] sm:$0xff]
  %v42 = vld [vmem:[%s0 + $0x50] sm:$0xff]
  %v43 = vld [vmem:[%s0 + $0x58] sm:$0xff]
  %v44 = vld [vmem:[%s0 + $0x60] sm:$0xff]
  %v45 = vld [vmem:[%s0 + $0x68] sm:$0xff]
  %v46 = vld [vmem:[%s0 + $0x70] sm:$0xff]
  %v47 = vld [vmem:[%s0 + $0x78] sm:$0xff]
  %49 = vset.pattern.permute.xlu0 0
  %50 = vperm.xlu0 %49, %v32
  %v51 = vpop.permute.xlu0 %50
  %54 = vset.pattern.permute.xlu0 0
  %55 = vperm.xlu0 %54, %v33
  %v56 = vpop.permute.xlu0 %55
  %59 = vset.pattern.permute.xlu0 0
  %60 = vperm.xlu0 %59, %v34
  %v61 = vpop.permute.xlu0 %60
  %64 = vset.pattern.permute.xlu0 0
  %65 = vperm.xlu0 %64, %v35
  %v66 = vpop.permute.xlu0 %65
  %69 = vset.pattern.permute.xlu0 0
  %70 = vperm.xlu0 %69, %v36
  %v71 = vpop.permute.xlu0 %70
  %74 = vset.pattern.permute.xlu0 0
  %75 = vperm.xlu0 %74, %v37
  %v76 = vpop.permute.xlu0 %75
  %79 = vset.pattern.permute.xlu0 0
  %80 = vperm.xlu0 %79, %v38
  %v81 = vpop.permute.xlu0 %80
  %84 = vset.pattern.permute.xlu0 0
  %85 = vperm.xlu0 %84, %v39
  %v86 = vpop.permute.xlu0 %85
  %89 = vset.pattern.permute.xlu0 0
  %90 = vperm.xlu0 %89, %v40
  %v91 = vpop.permute.xlu0 %90
  %94 = vset.pattern.permute.xlu0 0
  %95 = vperm.xlu0 %94, %v41
  %v96 = vpop.permute.xlu0 %95
  %99 = vset.pattern.permute.xlu0 0
  %100 = vperm.xlu0 %99, %v42
  %v101 = vpop.permute.xlu0 %100
  %104 = vset.pattern.permute.xlu0 0
  %105 = vperm.xlu0 %104, %v43
  %v106 = vpop.permute.xlu0 %105
  %109 = vset.pattern.permute.xlu0 0
  %110 = vperm.xlu0 %109, %v44
  %v111 = vpop.permute.xlu0 %110
  %114 = vset.pattern.permute.xlu0 0
  %115 = vperm.xlu0 %114, %v45
  %v116 = vpop.permute.xlu0 %115
  %119 = vset.pattern.permute.xlu0 0
  %120 = vperm.xlu0 %119, %v46
  %v121 = vpop.permute.xlu0 %120
  %124 = vset.pattern.permute.xlu0 0
  %125 = vperm.xlu0 %124, %v47
  %v126 = vpop.permute.xlu0 %125
  %v128 = vld [vmem:[%s1] sm:$0x1]
  %v130 = vlaneseq
  %v131 = vshrl.u32 %v130, 7
  %v132 = vsub.s32 0, %v131
  %v133 = vrot.slane %v128, %v132
  %v135 = vmul.f32 %v51, %v133
  %v136 = vmul.f32 %v56, %v133
  %v137 = vmul.f32 %v61, %v133
  %v138 = vmul.f32 %v66, %v133
  %v139 = vmul.f32 %v71, %v133
  %v140 = vmul.f32 %v76, %v133
  %v141 = vmul.f32 %v81, %v133
  %v142 = vmul.f32 %v86, %v133
  %v143 = vmul.f32 %v91, %v133
  %v144 = vmul.f32 %v96, %v133
  %v145 = vmul.f32 %v101, %v133
  %v146 = vmul.f32 %v106, %v133
  %v147 = vmul.f32 %v111, %v133
  %v148 = vmul.f32 %v116, %v133
  %v149 = vmul.f32 %v121, %v133
  %v150 = vmul.f32 %v126, %v133
  %v151 = vld [vmem:[%s2] sm:$0x1]
  %v153 = vlaneseq
  %v154 = vshrl.u32 %v153, 7
  %v155 = vsub.s32 0, %v154
  %v156 = vrot.slane %v151, %v155
  %v158 = vadd.f32 %v135, %v156
  %v159 = vadd.f32 %v136, %v156
  %v160 = vadd.f32 %v137, %v156
  %v161 = vadd.f32 %v138, %v156
  %v162 = vadd.f32 %v139, %v156
  %v163 = vadd.f32 %v140, %v156
  %v164 = vadd.f32 %v141, %v156
  %v165 = vadd.f32 %v142, %v156
  %v166 = vadd.f32 %v143, %v156
  %v167 = vadd.f32 %v144, %v156
  %v168 = vadd.f32 %v145, %v156
  %v169 = vadd.f32 %v146, %v156
  %v170 = vadd.f32 %v147, %v156
  %v171 = vadd.f32 %v148, %v156
  %v172 = vadd.f32 %v149, %v156
  %v173 = vadd.f32 %v150, %v156
  %174 = vst [vmem:[#allocation2] sm:$0xff] %v158
  %175 = vst [vmem:[#allocation2 + $0x8] sm:$0xff] %v159
  %176 = vst [vmem:[#allocation2 + $0x10] sm:$0xff] %v160
  %177 = vst [vmem:[#allocation2 + $0x18] sm:$0xff] %v161
  %178 = vst [vmem:[#allocation2 + $0x20] sm:$0xff] %v162
  %179 = vst [vmem:[#allocation2 + $0x28] sm:$0xff] %v163
  %180 = vst [vmem:[#allocation2 + $0x30] sm:$0xff] %v164
  %181 = vst [vmem:[#allocation2 + $0x38] sm:$0xff] %v165
  %182 = vst [vmem:[#allocation2 + $0x40] sm:$0xff] %v166
  %183 = vst [vmem:[#allocation2 + $0x48] sm:$0xff] %v167
  %184 = vst [vmem:[#allocation2 + $0x50] sm:$0xff] %v168
  %185 = vst [vmem:[#allocation2 + $0x58] sm:$0xff] %v169
  %186 = vst [vmem:[#allocation2 + $0x60] sm:$0xff] %v170
  %187 = vst [vmem:[#allocation2 + $0x68] sm:$0xff] %v171
  %188 = vst [vmem:[#allocation2 + $0x70] sm:$0xff] %v172
  %189 = vst [vmem:[#allocation2 + $0x78] sm:$0xff] %v173
  %vm190 = vcmask 261120
  %191 = vst.msk [vmem:[#allocation4] sm:$0xff] %vm190, 0.0
  %192 = vst.msk [vmem:[#allocation5] sm:$0xff] %vm190, 0.0
  %v193 = vld [vmem:[%s3] sm:$0xff]
  %v194 = vld [vmem:[%s3 + $0x8] sm:$0xff]
  %v195 = vld [vmem:[%s3 + $0x10] sm:$0xff]
  %v196 = vld [vmem:[%s3 + $0x18] sm:$0xff]
  %v197 = vld [vmem:[#allocation2] sm:$0xff]
  %v198 = vld [vmem:[#allocation4] sm:$0xff]
  %v200 = vsel %vm190, %v198, 0
  %202 = vmatprep.subr.mxu0 0.0
  %203 = vmatpush1.msra.mxu0 %v193
  %204 = vmatprep.subr.mxu0 0.0
  %205 = vmatpush1.msra.mxu0 %v194
  %206 = vmatprep.subr.mxu0 0.0
  %207 = vmatpush1.msra.mxu0 %v195
  %208 = vmatprep.subr.mxu0 0.0
  %209 = vmatpush1.msra.mxu0 %v196
  %210 = vmatprep.subr.mxu0 0.0
  %211 = vmatpush1.msra.mxu0 0.0
  %212 = vmatprep.subr.mxu0 0.0
  %213 = vmatpush1.msra.mxu0 0.0
  %214 = vmatprep.subr.mxu0 0.0
  %215 = vmatpush1.msra.mxu0 0.0
  %216 = vmatprep.subr.mxu0 0.0
  %217 = vmatpush1.msra.mxu0 0.0
  %218 = vmatprep.subr.mxu0 0.0
  %219 = vmatpush1.msra.mxu0 0.0
  %220 = vmatprep.subr.mxu0 0.0
  %221 = vmatpush1.msra.mxu0 0.0
  %222 = vmatprep.subr.mxu0 0.0
  %223 = vmatpush1.msra.mxu0 0.0
  %224 = vmatprep.subr.mxu0 0.0
  %225 = vmatpush1.msra.mxu0 0.0
  %226 = vmatprep.subr.mxu0 0.0
  %227 = vmatpush1.msra.mxu0 0.0
  %228 = vmatprep.subr.mxu0 0.0
  %229 = vmatpush1.msra.mxu0 0.0
  %230 = vmatprep.subr.mxu0 0.0
  %231 = vmatpush1.msra.mxu0 0.0
  %232 = vmatprep.subr.mxu0 0.0
  %233 = vmatpush1.msra.mxu0 0.0
  %234 = vmatprep.subr.mxu0 0.0
  %235 = vmatpush1.msra.mxu0 0.0
  %236 = vmatprep.subr.mxu0 0.0
  %237 = vmatpush1.msra.mxu0 0.0
  %238 = vmatprep.subr.mxu0 0.0
  %239 = vmatpush1.msra.mxu0 0.0
  %240 = vmatprep.subr.mxu0 0.0
  %241 = vmatpush1.msra.mxu0 0.0
  %242 = vmatprep.subr.mxu0 0.0
  %243 = vmatpush1.msra.mxu0 0.0
  %244 = vmatprep.subr.mxu0 0.0
  %245 = vmatpush1.msra.mxu0 0.0
  %246 = vmatprep.subr.mxu0 0.0
  %247 = vmatpush1.msra.mxu0 0.0
  %248 = vmatprep.subr.mxu0 0.0
  %249 = vmatpush1.msra.mxu0 0.0
  %250 = vmatprep.subr.mxu0 0.0
  %251 = vmatpush1.msra.mxu0 0.0
  %252 = vmatprep.subr.mxu0 0.0
  %253 = vmatpush1.msra.mxu0 0.0
  %254 = vmatprep.subr.mxu0 0.0
  %255 = vmatpush1.msra.mxu0 0.0
  %256 = vmatprep.subr.mxu0 0.0
  %257 = vmatpush1.msra.mxu0 0.0
  %258 = vmatprep.subr.mxu0 0.0
  %259 = vmatpush1.msra.mxu0 0.0
  %260 = vmatprep.subr.mxu0 0.0
  %261 = vmatpush1.msra.mxu0 0.0
  %262 = vmatprep.subr.mxu0 0.0
  %263 = vmatpush1.msra.mxu0 0.0
  %264 = vmatprep.subr.mxu0 0.0
  %265 = vmatpush1.msra.mxu0 0.0
  %266 = vmatprep.mubr.f32.mxu0 0.0
  %267 = vmatmul.mubr.f32.gmra.mrb[0].mxu0 %v200
  %v268 = vpop.f32.mrb[0].mxu0
  %v269 = vadd.f32 0.0, %v268
  %v270 = vpop.f32.mrb[0].mxu0
  %271 = vdwg.mxu0
  %v272 = vadd.f32 %v197, %v269
  %v273 = vxor.u32 %v272, 2147483648
  %v274 = vmul.f32 %v273, 1.442695
  %v275 = vpow.pop %v274
  %v276 = vadd.f32 %v275, 1.0
  %v277 = vrcp.pop %v276
  %v278 = vmul.f32 1.0, %v277
  %v279 = vtanh.pop %v272
  %v280 = vld [vmem:[#allocation5] sm:$0xff]
  %282 = vrot.lane.b32.xlu0 %v280, 32
  %v283 = vpop.permute.xlu0 %282
  %v285 = vmul.f32 %v278, %v283
  %287 = vrot.lane.b32.xlu0 %v279, 64
  %v288 = vpop.permute.xlu0 %287
  %v290 = vmul.f32 %v278, %v288
  %292 = vrot.lane.b32.xlu0 %v290, 32
  %v293 = vpop.permute.xlu0 %292
  %v295 = vadd.f32 %v285, %v293
  %v296 = vtanh.pop %v295
  %298 = vrot.lane.b32.xlu0 %v296, 64
  %v299 = vpop.permute.xlu0 %298
  %v301 = vmul.f32 %v278, %v299
  %303 = vrot.lane.b32.xlu0 %v301, 32
  %v304 = vpop.permute.xlu0 %303
  %306 = vst.msk [vmem:[#allocation4] sm:$0xff] %vm190, %v304
  %308 = vrot.lane.b32.xlu0 %v295, 96
  %v309 = vpop.permute.xlu0 %308
  %311 = vst.msk [vmem:[#allocation5] sm:$0xff] %vm190, %v309
  %312 = vst.msk [vmem:[#allocation3] sm:$0xff] %vm190, %v304
  %v313 = vld [vmem:[#allocation2 + $0x8] sm:$0xff]
  %v314 = vld [vmem:[#allocation4] sm:$0xff]
  %v316 = vsel %vm190, %v314, 0
  %318 = vmatprep.subr.mxu0 0.0
  %319 = vmatpush1.msra.mxu0 %v193
  %320 = vmatprep.subr.mxu0 0.0
  %321 = vmatpush1.msra.mxu0 %v194
  %322 = vmatprep.subr.mxu0 0.0
  %323 = vmatpush1.msra.mxu0 %v195
  %324 = vmatprep.subr.mxu0 0.0
  %325 = vmatpush1.msra.mxu0 %v196
  %326 = vmatprep.subr.mxu0 0.0
  %327 = vmatpush1.msra.mxu0 0.0
  %328 = vmatprep.subr.mxu0 0.0
  %329 = vmatpush1.msra.mxu0 0.0
  %330 = vmatprep.subr.mxu0 0.0
  %331 = vmatpush1.msra.mxu0 0.0
  %332 = vmatprep.subr.mxu0 0.0
  %333 = vmatpush1.msra.mxu0 0.0
  %334 = vmatprep.subr.mxu0 0.0
  %335 = vmatpush1.msra.mxu0 0.0
  %336 = vmatprep.subr.mxu0 0.0
  %337 = vmatpush1.msra.mxu0 0.0
  %338 = vmatprep.subr.mxu0 0.0
  %339 = vmatpush1.msra.mxu0 0.0
  %340 = vmatprep.subr.mxu0 0.0
  %341 = vmatpush1.msra.mxu0 0.0
  %342 = vmatprep.subr.mxu0 0.0
  %343 = vmatpush1.msra.mxu0 0.0
  %344 = vmatprep.subr.mxu0 0.0
  %345 = vmatpush1.msra.mxu0 0.0
  %346 = vmatprep.subr.mxu0 0.0
  %347 = vmatpush1.msra.mxu0 0.0
  %348 = vmatprep.subr.mxu0 0.0
  %349 = vmatpush1.msra.mxu0 0.0
  %350 = vmatprep.subr.mxu0 0.0
  %351 = vmatpush1.msra.mxu0 0.0
  %352 = vmatprep.subr.mxu0 0.0
  %353 = vmatpush1.msra.mxu0 0.0
  %354 = vmatprep.subr.mxu0 0.0
  %355 = vmatpush1.msra.mxu0 0.0
  %356 = vmatprep.subr.mxu0 0.0
  %357 = vmatpush1.msra.mxu0 0.0
  %358 = vmatprep.subr.mxu0 0.0
  %359 = vmatpush1.msra.mxu0 0.0
  %360 = vmatprep.subr.mxu0 0.0
  %361 = vmatpush1.msra.mxu0 0.0
  %362 = vmatprep.subr.mxu0 0.0
  %363 = vmatpush1.msra.mxu0 0.0
  %364 = vmatprep.subr.mxu0 0.0
  %365 = vmatpush1.msra.mxu0 0.0
  %366 = vmatprep.subr.mxu0 0.0
  %367 = vmatpush1.msra.mxu0 0.0
  %368 = vmatprep.subr.mxu0 0.0
  %369 = vmatpush1.msra.mxu0 0.0
  %370 = vmatprep.subr.mxu0 0.0
  %371 = vmatpush1.msra.mxu0 0.0
  %372 = vmatprep.subr.mxu0 0.0
  %373 = vmatpush1.msra.mxu0 0.0
  %374 = vmatprep.subr.mxu0 0.0
  %375 = vmatpush1.msra.mxu0 0.0
  %376 = vmatprep.subr.mxu0 0.0
  %377 = vmatpush1.msra.mxu0 0.0
  %378 = vmatprep.subr.mxu0 0.0
  %379 = vmatpush1.msra.mxu0 0.0
  %380 = vmatprep.subr.mxu0 0.0
  %381 = vmatpush1.msra.mxu0 0.0
  %382 = vmatprep.mubr.f32.mxu0 0.0
  %383 = vmatmul.mubr.f32.gmra.mrb[0].mxu0 %v316
  %v384 = vpop.f32.mrb[0].mxu0
  %v385 = vadd.f32 0.0, %v384
  %v386 = vpop.f32.mrb[0].mxu0
  %387 = vdwg.mxu0
  %v388 = vadd.f32 %v313, %v385
  %v389 = vxor.u32 %v388, 2147483648
  %v390 = vmul.f32 %v389, 1.442695
  %v391 = vpow.pop %v390
  %v392 = vadd.f32 %v391, 1.0
  %v393 = vrcp.pop %v392
  %v394 = vmul.f32 1.0, %v393
  %v395 = vtanh.pop %v388
  %v396 = vld [vmem:[#allocation5] sm:$0xff]
  %398 = vrot.lane.b32.xlu0 %v396, 32
  %v399 = vpop.permute.xlu0 %398
  %v401 = vmul.f32 %v394, %v399
  %403 = vrot.lane.b32.xlu0 %v395, 64
  %v404 = vpop.permute.xlu0 %403
  %v406 = vmul.f32 %v394, %v404
  %408 = vrot.lane.b32.xlu0 %v406, 32
  %v409 = vpop.permute.xlu0 %408
  %v411 = vadd.f32 %v401, %v409
  %v412 = vtanh.pop %v411
  %414 = vrot.lane.b32.xlu0 %v412, 64
  %v415 = vpop.permute.xlu0 %414
  %v417 = vmul.f32 %v394, %v415
  %419 = vrot.lane.b32.xlu0 %v417, 32
  %v420 = vpop.permute.xlu0 %419
  %422 = vst.msk [vmem:[#allocation4] sm:$0xff] %vm190, %v420
  %424 = vrot.lane.b32.xlu0 %v411, 96
  %v425 = vpop.permute.xlu0 %424
  %427 = vst.msk [vmem:[#allocation5] sm:$0xff] %vm190, %v425
  %428 = vst.msk [vmem:[#allocation3 + $0x8] sm:$0xff] %vm190, %v420
  %v429 = vld [vmem:[#allocation2 + $0x10] sm:$0xff]
  %v430 = vld [vmem:[#allocation4] sm:$0xff]
  %v432 = vsel %vm190, %v430, 0
  %434 = vmatprep.subr.mxu0 0.0
  %435 = vmatpush1.msra.mxu0 %v193
  %436 = vmatprep.subr.mxu0 0.0
  %437 = vmatpush1.msra.mxu0 %v194
  %438 = vmatprep.subr.mxu0 0.0
  %439 = vmatpush1.msra.mxu0 %v195
  %440 = vmatprep.subr.mxu0 0.0
  %441 = vmatpush1.msra.mxu0 %v196
  %442 = vmatprep.subr.mxu0 0.0
  %443 = vmatpush1.msra.mxu0 0.0
  %444 = vmatprep.subr.mxu0 0.0
  %445 = vmatpush1.msra.mxu0 0.0
  %446 = vmatprep.subr.mxu0 0.0
  %447 = vmatpush1.msra.mxu0 0.0
  %448 = vmatprep.subr.mxu0 0.0
  %449 = vmatpush1.msra.mxu0 0.0
  %450 = vmatprep.subr.mxu0 0.0
  %451 = vmatpush1.msra.mxu0 0.0
  %452 = vmatprep.subr.mxu0 0.0
  %453 = vmatpush1.msra.mxu0 0.0
  %454 = vmatprep.subr.mxu0 0.0
  %455 = vmatpush1.msra.mxu0 0.0
  %456 = vmatprep.subr.mxu0 0.0
  %457 = vmatpush1.msra.mxu0 0.0
  %458 = vmatprep.subr.mxu0 0.0
  %459 = vmatpush1.msra.mxu0 0.0
  %460 = vmatprep.subr.mxu0 0.0
  %461 = vmatpush1.msra.mxu0 0.0
  %462 = vmatprep.subr.mxu0 0.0
  %463 = vmatpush1.msra.mxu0 0.0
  %464 = vmatprep.subr.mxu0 0.0
  %465 = vmatpush1.msra.mxu0 0.0
  %466 = vmatprep.subr.mxu0 0.0
  %467 = vmatpush1.msra.mxu0 0.0
  %468 = vmatprep.subr.mxu0 0.0
  %469 = vmatpush1.msra.mxu0 0.0
  %470 = vmatprep.subr.mxu0 0.0
  %471 = vmatpush1.msra.mxu0 0.0
  %472 = vmatprep.subr.mxu0 0.0
  %473 = vmatpush1.msra.mxu0 0.0
  %474 = vmatprep.subr.mxu0 0.0
  %475 = vmatpush1.msra.mxu0 0.0
  %476 = vmatprep.subr.mxu0 0.0
  %477 = vmatpush1.msra.mxu0 0.0
  %478 = vmatprep.subr.mxu0 0.0
  %479 = vmatpush1.msra.mxu0 0.0
  %480 = vmatprep.subr.mxu0 0.0
  %481 = vmatpush1.msra.mxu0 0.0
  %482 = vmatprep.subr.mxu0 0.0
  %483 = vmatpush1.msra.mxu0 0.0
  %484 = vmatprep.subr.mxu0 0.0
  %485 = vmatpush1.msra.mxu0 0.0
  %486 = vmatprep.subr.mxu0 0.0
  %487 = vmatpush1.msra.mxu0 0.0
  %488 = vmatprep.subr.mxu0 0.0
  %489 = vmatpush1.msra.mxu0 0.0
  %490 = vmatprep.subr.mxu0 0.0
  %491 = vmatpush1.msra.mxu0 0.0
  %492 = vmatprep.subr.mxu0 0.0
  %493 = vmatpush1.msra.mxu0 0.0
  %494 = vmatprep.subr.mxu0 0.0
  %495 = vmatpush1.msra.mxu0 0.0
  %496 = vmatprep.subr.mxu0 0.0
  %497 = vmatpush1.msra.mxu0 0.0
  %498 = vmatprep.mubr.f32.mxu0 0.0
  %499 = vmatmul.mubr.f32.gmra.mrb[0].mxu0 %v432
  %v500 = vpop.f32.mrb[0].mxu0
  %v501 = vadd.f32 0.0, %v500
  %v502 = vpop.f32.mrb[0].mxu0
  %503 = vdwg.mxu0
  %v504 = vadd.f32 %v429, %v501
  %v505 = vxor.u32 %v504, 2147483648
  %v506 = vmul.f32 %v505, 1.442695
  %v507 = vpow.pop %v506
  %v508 = vadd.f32 %v507, 1.0
  %v509 = vrcp.pop %v508
  %v510 = vmul.f32 1.0, %v509
  %v511 = vtanh.pop %v504
  %v512 = vld [vmem:[#allocation5] sm:$0xff]
  %514 = vrot.lane.b32.xlu0 %v512, 32
  %v515 = vpop.permute.xlu0 %514
  %v517 = vmul.f32 %v510, %v515
  %519 = vrot.lane.b32.xlu0 %v511, 64
  %v520 = vpop.permute.xlu0 %519
  %v522 = vmul.f32 %v510, %v520
  %524 = vrot.lane.b32.xlu0 %v522, 32
  %v525 = vpop.permute.xlu0 %524
  %v527 = vadd.f32 %v517, %v525
  %v528 = vtanh.pop %v527
  %530 = vrot.lane.b32.xlu0 %v528, 64
  %v531 = vpop.permute.xlu0 %530
  %v533 = vmul.f32 %v510, %v531
  %535 = vrot.lane.b32.xlu0 %v533, 32
  %v536 = vpop.permute.xlu0 %535
  %538 = vst.msk [vmem:[#allocation4] sm:$0xff] %vm190, %v536
  %540 = vrot.lane.b32.xlu0 %v527, 96
  %v541 = vpop.permute.xlu0 %540
  %543 = vst.msk [vmem:[#allocation5] sm:$0xff] %vm190, %v541
  %544 = vst.msk [vmem:[#allocation3 + $0x10] sm:$0xff] %vm190, %v536
  %v545 = vld [vmem:[#allocation2 + $0x18] sm:$0xff]
  %v546 = vld [vmem:[#allocation4] sm:$0xff]
  %v548 = vsel %vm190, %v546, 0
  %550 = vmatprep.subr.mxu0 0.0
  %551 = vmatpush1.msra.mxu0 %v193
  %552 = vmatprep.subr.mxu0 0.0
  %553 = vmatpush1.msra.mxu0 %v194
  %554 = vmatprep.subr.mxu0 0.0
  %555 = vmatpush1.msra.mxu0 %v195
  %556 = vmatprep.subr.mxu0 0.0
  %557 = vmatpush1.msra.mxu0 %v196
  %558 = vmatprep.subr.mxu0 0.0
  %559 = vmatpush1.msra.mxu0 0.0
  %560 = vmatprep.subr.mxu0 0.0
  %561 = vmatpush1.msra.mxu0 0.0
  %562 = vmatprep.subr.mxu0 0.0
  %563 = vmatpush1.msra.mxu0 0.0
  %564 = vmatprep.subr.mxu0 0.0
  %565 = vmatpush1.msra.mxu0 0.0
  %566 = vmatprep.subr.mxu0 0.0
  %567 = vmatpush1.msra.mxu0 0.0
  %568 = vmatprep.subr.mxu0 0.0
  %569 = vmatpush1.msra.mxu0 0.0
  %570 = vmatprep.subr.mxu0 0.0
  %571 = vmatpush1.msra.mxu0 0.0
  %572 = vmatprep.subr.mxu0 0.0
  %573 = vmatpush1.msra.mxu0 0.0
  %574 = vmatprep.subr.mxu0 0.0
  %575 = vmatpush1.msra.mxu0 0.0
  %576 = vmatprep.subr.mxu0 0.0
  %577 = vmatpush1.msra.mxu0 0.0
  %578 = vmatprep.subr.mxu0 0.0
  %579 = vmatpush1.msra.mxu0 0.0
  %580 = vmatprep.subr.mxu0 0.0
  %581 = vmatpush1.msra.mxu0 0.0
  %582 = vmatprep.subr.mxu0 0.0
  %583 = vmatpush1.msra.mxu0 0.0
  %584 = vmatprep.subr.mxu0 0.0
  %585 = vmatpush1.msra.mxu0 0.0
  %586 = vmatprep.subr.mxu0 0.0
  %587 = vmatpush1.msra.mxu0 0.0
  %588 = vmatprep.subr.mxu0 0.0
  %589 = vmatpush1.msra.mxu0 0.0
  %590 = vmatprep.subr.mxu0 0.0
  %591 = vmatpush1.msra.mxu0 0.0
  %592 = vmatprep.subr.mxu0 0.0
  %593 = vmatpush1.msra.mxu0 0.0
  %594 = vmatprep.subr.mxu0 0.0
  %595 = vmatpush1.msra.mxu0 0.0
  %596 = vmatprep.subr.mxu0 0.0
  %597 = vmatpush1.msra.mxu0 0.0
  %598 = vmatprep.subr.mxu0 0.0
  %599 = vmatpush1.msra.mxu0 0.0
  %600 = vmatprep.subr.mxu0 0.0
  %601 = vmatpush1.msra.mxu0 0.0
  %602 = vmatprep.subr.mxu0 0.0
  %603 = vmatpush1.msra.mxu0 0.0
  %604 = vmatprep.subr.mxu0 0.0
  %605 = vmatpush1.msra.mxu0 0.0
  %606 = vmatprep.subr.mxu0 0.0
  %607 = vmatpush1.msra.mxu0 0.0
  %608 = vmatprep.subr.mxu0 0.0
  %609 = vmatpush1.msra.mxu0 0.0
  %610 = vmatprep.subr.mxu0 0.0
  %611 = vmatpush1.msra.mxu0 0.0
  %612 = vmatprep.subr.mxu0 0.0
  %613 = vmatpush1.msra.mxu0 0.0
  %614 = vmatprep.mubr.f32.mxu0 0.0
  %615 = vmatmul.mubr.f32.gmra.mrb[0].mxu0 %v548
  %v616 = vpop.f32.mrb[0].mxu0
  %v617 = vadd.f32 0.0, %v616
  %v618 = vpop.f32.mrb[0].mxu0
  %619 = vdwg.mxu0
  %v620 = vadd.f32 %v545, %v617
  %v621 = vxor.u32 %v620, 2147483648
  %v622 = vmul.f32 %v621, 1.442695
  %v623 = vpow.pop %v622
  %v624 = vadd.f32 %v623, 1.0
  %v625 = vrcp.pop %v624
  %v626 = vmul.f32 1.0, %v625
  %v627 = vtanh.pop %v620
  %v628 = vld [vmem:[#allocation5] sm:$0xff]
  %630 = vrot.lane.b32.xlu0 %v628, 32
  %v631 = vpop.permute.xlu0 %630
  %v633 = vmul.f32 %v626, %v631
  %635 = vrot.lane.b32.xlu0 %v627, 64
  %v636 = vpop.permute.xlu0 %635
  %v638 = vmul.f32 %v626, %v636
  %640 = vrot.lane.b32.xlu0 %v638, 32
  %v641 = vpop.permute.xlu0 %640
  %v643 = vadd.f32 %v633, %v641
  %v644 = vtanh.pop %v643
  %646 = vrot.lane.b32.xlu0 %v644, 64
  %v647 = vpop.permute.xlu0 %646
  %v649 = vmul.f32 %v626, %v647
  %651 = vrot.lane.b32.xlu0 %v649, 32
  %v652 = vpop.permute.xlu0 %651
  %654 = vst.msk [vmem:[#allocation4] sm:$0xff] %vm190, %v652
  %656 = vrot.lane.b32.xlu0 %v643, 96
  %v657 = vpop.permute.xlu0 %656
  %659 = vst.msk [vmem:[#allocation5] sm:$0xff] %vm190, %v657
  %660 = vst.msk [vmem:[#allocation3 + $0x18] sm:$0xff] %vm190, %v652
  %v661 = vld [vmem:[#allocation2 + $0x20] sm:$0xff]
  %v662 = vld [vmem:[#allocation4] sm:$0xff]
  %v664 = vsel %vm190, %v662, 0
  %666 = vmatprep.subr.mxu0 0.0
  %667 = vmatpush1.msra.mxu0 %v193
  %668 = vmatprep.subr.mxu0 0.0
  %669 = vmatpush1.msra.mxu0 %v194
  %670 = vmatprep.subr.mxu0 0.0
  %671 = vmatpush1.msra.mxu0 %v195
  %672 = vmatprep.subr.mxu0 0.0
  %673 = vmatpush1.msra.mxu0 %v196
  %674 = vmatprep.subr.mxu0 0.0
  %675 = vmatpush1.msra.mxu0 0.0
  %676 = vmatprep.subr.mxu0 0.0
  %677 = vmatpush1.msra.mxu0 0.0
  %678 = vmatprep.subr.mxu0 0.0
  %679 = vmatpush1.msra.mxu0 0.0
  %680 = vmatprep.subr.mxu0 0.0
  %681 = vmatpush1.msra.mxu0 0.0
  %682 = vmatprep.subr.mxu0 0.0
  %683 = vmatpush1.msra.mxu0 0.0
  %684 = vmatprep.subr.mxu0 0.0
  %685 = vmatpush1.msra.mxu0 0.0
  %686 = vmatprep.subr.mxu0 0.0
  %687 = vmatpush1.msra.mxu0 0.0
  %688 = vmatprep.subr.mxu0 0.0
  %689 = vmatpush1.msra.mxu0 0.0
  %690 = vmatprep.subr.mxu0 0.0
  %691 = vmatpush1.msra.mxu0 0.0
  %692 = vmatprep.subr.mxu0 0.0
  %693 = vmatpush1.msra.mxu0 0.0
  %694 = vmatprep.subr.mxu0 0.0
  %695 = vmatpush1.msra.mxu0 0.0
  %696 = vmatprep.subr.mxu0 0.0
  %697 = vmatpush1.msra.mxu0 0.0
  %698 = vmatprep.subr.mxu0 0.0
  %699 = vmatpush1.msra.mxu0 0.0
  %700 = vmatprep.subr.mxu0 0.0
  %701 = vmatpush1.msra.mxu0 0.0
  %702 = vmatprep.subr.mxu0 0.0
  %703 = vmatpush1.msra.mxu0 0.0
  %704 = vmatprep.subr.mxu0 0.0
  %705 = vmatpush1.msra.mxu0 0.0
  %706 = vmatprep.subr.mxu0 0.0
  %707 = vmatpush1.msra.mxu0 0.0
  %708 = vmatprep.subr.mxu0 0.0
  %709 = vmatpush1.msra.mxu0 0.0
  %710 = vmatprep.subr.mxu0 0.0
  %711 = vmatpush1.msra.mxu0 0.0
  %712 = vmatprep.subr.mxu0 0.0
  %713 = vmatpush1.msra.mxu0 0.0
  %714 = vmatprep.subr.mxu0 0.0
  %715 = vmatpush1.msra.mxu0 0.0
  %716 = vmatprep.subr.mxu0 0.0
  %717 = vmatpush1.msra.mxu0 0.0
  %718 = vmatprep.subr.mxu0 0.0
  %719 = vmatpush1.msra.mxu0 0.0
  %720 = vmatprep.subr.mxu0 0.0
  %721 = vmatpush1.msra.mxu0 0.0
  %722 = vmatprep.subr.mxu0 0.0
  %723 = vmatpush1.msra.mxu0 0.0
  %724 = vmatprep.subr.mxu0 0.0
  %725 = vmatpush1.msra.mxu0 0.0
  %726 = vmatprep.subr.mxu0 0.0
  %727 = vmatpush1.msra.mxu0 0.0
  %728 = vmatprep.subr.mxu0 0.0
  %729 = vmatpush1.msra.mxu0 0.0
  %730 = vmatprep.mubr.f32.mxu0 0.0
  %731 = vmatmul.mubr.f32.gmra.mrb[0].mxu0 %v664
  %v732 = vpop.f32.mrb[0].mxu0
  %v733 = vadd.f32 0.0, %v732
  %v734 = vpop.f32.mrb[0].mxu0
  %735 = vdwg.mxu0
  %v736 = vadd.f32 %v661, %v733
  %v737 = vxor.u32 %v736, 2147483648
  %v738 = vmul.f32 %v737, 1.442695
  %v739 = vpow.pop %v738
  %v740 = vadd.f32 %v739, 1.0
  %v741 = vrcp.pop %v740
  %v742 = vmul.f32 1.0, %v741
  %v743 = vtanh.pop %v736
  %v744 = vld [vmem:[#allocation5] sm:$0xff]
  %746 = vrot.lane.b32.xlu0 %v744, 32
  %v747 = vpop.permute.xlu0 %746
  %v749 = vmul.f32 %v742, %v747
  %751 = vrot.lane.b32.xlu0 %v743, 64
  %v752 = vpop.permute.xlu0 %751
  %v754 = vmul.f32 %v742, %v752
  %756 = vrot.lane.b32.xlu0 %v754, 32
  %v757 = vpop.permute.xlu0 %756
  %v759 = vadd.f32 %v749, %v757
  %v760 = vtanh.pop %v759
  %762 = vrot.lane.b32.xlu0 %v760, 64
  %v763 = vpop.permute.xlu0 %762
  %v765 = vmul.f32 %v742, %v763
  %767 = vrot.lane.b32.xlu0 %v765, 32
  %v768 = vpop.permute.xlu0 %767
  %770 = vst.msk [vmem:[#allocation4] sm:$0xff] %vm190, %v768
  %772 = vrot.lane.b32.xlu0 %v759, 96
  %v773 = vpop.permute.xlu0 %772
  %775 = vst.msk [vmem:[#allocation5] sm:$0xff] %vm190, %v773
  %776 = vst.msk [vmem:[#allocation3 + $0x20] sm:$0xff] %vm190, %v768
  %v777 = vld [vmem:[#allocation2 + $0x28] sm:$0xff]
  %v778 = vld [vmem:[#allocation4] sm:$0xff]
  %v780 = vsel %vm190, %v778, 0
  %782 = vmatprep.subr.mxu0 0.0
  %783 = vmatpush1.msra.mxu0 %v193
  %784 = vmatprep.subr.mxu0 0.0
  %785 = vmatpush1.msra.mxu0 %v194
  %786 = vmatprep.subr.mxu0 0.0
  %787 = vmatpush1.msra.mxu0 %v195
  %788 = vmatprep.subr.mxu0 0.0
  %789 = vmatpush1.msra.mxu0 %v196
  %790 = vmatprep.subr.mxu0 0.0
  %791 = vmatpush1.msra.mxu0 0.0
  %792 = vmatprep.subr.mxu0 0.0
  %793 = vmatpush1.msra.mxu0 0.0
  %794 = vmatprep.subr.mxu0 0.0
  %795 = vmatpush1.msra.mxu0 0.0
  %796 = vmatprep.subr.mxu0 0.0
  %797 = vmatpush1.msra.mxu0 0.0
  %798 = vmatprep.subr.mxu0 0.0
  %799 = vmatpush1.msra.mxu0 0.0
  %800 = vmatprep.subr.mxu0 0.0
  %801 = vmatpush1.msra.mxu0 0.0
  %802 = vmatprep.subr.mxu0 0.0
  %803 = vmatpush1.msra.mxu0 0.0
  %804 = vmatprep.subr.mxu0 0.0
  %805 = vmatpush1.msra.mxu0 0.0
  %806 = vmatprep.subr.mxu0 0.0
  %807 = vmatpush1.msra.mxu0 0.0
  %808 = vmatprep.subr.mxu0 0.0
  %809 = vmatpush1.msra.mxu0 0.0
  %810 = vmatprep.subr.mxu0 0.0
  %811 = vmatpush1.msra.mxu0 0.0
  %812 = vmatprep.subr.mxu0 0.0
  %813 = vmatpush1.msra.mxu0 0.0
  %814 = vmatprep.subr.mxu0 0.0
  %815 = vmatpush1.msra.mxu0 0.0
  %816 = vmatprep.subr.mxu0 0.0
  %817 = vmatpush1.msra.mxu0 0.0
  %818 = vmatprep.subr.mxu0 0.0
  %819 = vmatpush1.msra.mxu0 0.0
  %820 = vmatprep.subr.mxu0 0.0
  %821 = vmatpush1.msra.mxu0 0.0
  %822 = vmatprep.subr.mxu0 0.0
  %823 = vmatpush1.msra.mxu0 0.0
  %824 = vmatprep.subr.mxu0 0.0
  %825 = vmatpush1.msra.mxu0 0.0
  %826 = vmatprep.subr.mxu0 0.0
  %827 = vmatpush1.msra.mxu0 0.0
  %828 = vmatprep.subr.mxu0 0.0
  %829 = vmatpush1.msra.mxu0 0.0
  %830 = vmatprep.subr.mxu0 0.0
  %831 = vmatpush1.msra.mxu0 0.0
  %832 = vmatprep.subr.mxu0 0.0
  %833 = vmatpush1.msra.mxu0 0.0
  %834 = vmatprep.subr.mxu0 0.0
  %835 = vmatpush1.msra.mxu0 0.0
  %836 = vmatprep.subr.mxu0 0.0
  %837 = vmatpush1.msra.mxu0 0.0
  %838 = vmatprep.subr.mxu0 0.0
  %839 = vmatpush1.msra.mxu0 0.0
  %840 = vmatprep.subr.mxu0 0.0
  %841 = vmatpush1.msra.mxu0 0.0
  %842 = vmatprep.subr.mxu0 0.0
  %843 = vmatpush1.msra.mxu0 0.0
  %844 = vmatprep.subr.mxu0 0.0
  %845 = vmatpush1.msra.mxu0 0.0
  %846 = vmatprep.mubr.f32.mxu0 0.0
  %847 = vmatmul.mubr.f32.gmra.mrb[0].mxu0 %v780
  %v848 = vpop.f32.mrb[0].mxu0
  %v849 = vadd.f32 0.0, %v848
  %v850 = vpop.f32.mrb[0].mxu0
  %851 = vdwg.mxu0
  %v852 = vadd.f32 %v777, %v849
  %v853 = vxor.u32 %v852, 2147483648
  %v854 = vmul.f32 %v853, 1.442695
  %v855 = vpow.pop %v854
  %v856 = vadd.f32 %v855, 1.0
  %v857 = vrcp.pop %v856
  %v858 = vmul.f32 1.0, %v857
  %v859 = vtanh.pop %v852
  %v860 = vld [vmem:[#allocation5] sm:$0xff]
  %862 = vrot.lane.b32.xlu0 %v860, 32
  %v863 = vpop.permute.xlu0 %862
  %v865 = vmul.f32 %v858, %v863
  %867 = vrot.lane.b32.xlu0 %v859, 64
  %v868 = vpop.permute.xlu0 %867
  %v870 = vmul.f32 %v858, %v868
  %872 = vrot.lane.b32.xlu0 %v870, 32
  %v873 = vpop.permute.xlu0 %872
  %v875 = vadd.f32 %v865, %v873
  %v876 = vtanh.pop %v875
  %878 = vrot.lane.b32.xlu0 %v876, 64
  %v879 = vpop.permute.xlu0 %878
  %v881 = vmul.f32 %v858, %v879
  %883 = vrot.lane.b32.xlu0 %v881, 32
  %v884 = vpop.permute.xlu0 %883
  %886 = vst.msk [vmem:[#allocation4] sm:$0xff] %vm190, %v884
  %888 = vrot.lane.b32.xlu0 %v875, 96
  %v889 = vpop.permute.xlu0 %888
  %891 = vst.msk [vmem:[#allocation5] sm:$0xff] %vm190, %v889
  %892 = vst.msk [vmem:[#allocation3 + $0x28] sm:$0xff] %vm190, %v884
  %v893 = vld [vmem:[#allocation2 + $0x30] sm:$0xff]
  %v894 = vld [vmem:[#allocation4] sm:$0xff]
  %v896 = vsel %vm190, %v894, 0
  %898 = vmatprep.subr.mxu0 0.0
  %899 = vmatpush1.msra.mxu0 %v193
  %900 = vmatprep.subr.mxu0 0.0
  %901 = vmatpush1.msra.mxu0 %v194
  %902 = vmatprep.subr.mxu0 0.0
  %903 = vmatpush1.msra.mxu0 %v195
  %904 = vmatprep.subr.mxu0 0.0
  %905 = vmatpush1.msra.mxu0 %v196
  %906 = vmatprep.subr.mxu0 0.0
  %907 = vmatpush1.msra.mxu0 0.0
  %908 = vmatprep.subr.mxu0 0.0
  %909 = vmatpush1.msra.mxu0 0.0
  %910 = vmatprep.subr.mxu0 0.0
  %911 = vmatpush1.msra.mxu0 0.0
  %912 = vmatprep.subr.mxu0 0.0
  %913 = vmatpush1.msra.mxu0 0.0
  %914 = vmatprep.subr.mxu0 0.0
  %915 = vmatpush1.msra.mxu0 0.0
  %916 = vmatprep.subr.mxu0 0.0
  %917 = vmatpush1.msra.mxu0 0.0
  %918 = vmatprep.subr.mxu0 0.0
  %919 = vmatpush1.msra.mxu0 0.0
  %920 = vmatprep.subr.mxu0 0.0
  %921 = vmatpush1.msra.mxu0 0.0
  %922 = vmatprep.subr.mxu0 0.0
  %923 = vmatpush1.msra.mxu0 0.0
  %924 = vmatprep.subr.mxu0 0.0
  %925 = vmatpush1.msra.mxu0 0.0
  %926 = vmatprep.subr.mxu0 0.0
  %927 = vmatpush1.msra.mxu0 0.0
  %928 = vmatprep.subr.mxu0 0.0
  %929 = vmatpush1.msra.mxu0 0.0
  %930 = vmatprep.subr.mxu0 0.0
  %931 = vmatpush1.msra.mxu0 0.0
  %932 = vmatprep.subr.mxu0 0.0
  %933 = vmatpush1.msra.mxu0 0.0
  %934 = vmatprep.subr.mxu0 0.0
  %935 = vmatpush1.msra.mxu0 0.0
  %936 = vmatprep.subr.mxu0 0.0
  %937 = vmatpush1.msra.mxu0 0.0
  %938 = vmatprep.subr.mxu0 0.0
  %939 = vmatpush1.msra.mxu0 0.0
  %940 = vmatprep.subr.mxu0 0.0
  %941 = vmatpush1.msra.mxu0 0.0
  %942 = vmatprep.subr.mxu0 0.0
  %943 = vmatpush1.msra.mxu0 0.0
  %944 = vmatprep.subr.mxu0 0.0
  %945 = vmatpush1.msra.mxu0 0.0
  %946 = vmatprep.subr.mxu0 0.0
  %947 = vmatpush1.msra.mxu0 0.0
  %948 = vmatprep.subr.mxu0 0.0
  %949 = vmatpush1.msra.mxu0 0.0
  %950 = vmatprep.subr.mxu0 0.0
  %951 = vmatpush1.msra.mxu0 0.0
  %952 = vmatprep.subr.mxu0 0.0
  %953 = vmatpush1.msra.mxu0 0.0
  %954 = vmatprep.subr.mxu0 0.0
  %955 = vmatpush1.msra.mxu0 0.0
  %956 = vmatprep.subr.mxu0 0.0
  %957 = vmatpush1.msra.mxu0 0.0
  %958 = vmatprep.subr.mxu0 0.0
  %959 = vmatpush1.msra.mxu0 0.0
  %960 = vmatprep.subr.mxu0 0.0
  %961 = vmatpush1.msra.mxu0 0.0
  %962 = vmatprep.mubr.f32.mxu0 0.0
  %963 = vmatmul.mubr.f32.gmra.mrb[0].mxu0 %v896
  %v964 = vpop.f32.mrb[0].mxu0
  %v965 = vadd.f32 0.0, %v964
  %v966 = vpop.f32.mrb[0].mxu0
  %967 = vdwg.mxu0
  %v968 = vadd.f32 %v893, %v965
  %v969 = vxor.u32 %v968, 2147483648
  %v970 = vmul.f32 %v969, 1.442695
  %v971 = vpow.pop %v970
  %v972 = vadd.f32 %v971, 1.0
  %v973 = vrcp.pop %v972
  %v974 = vmul.f32 1.0, %v973
  %v975 = vtanh.pop %v968
  %v976 = vld [vmem:[#allocation5] sm:$0xff]
  %978 = vrot.lane.b32.xlu0 %v976, 32
  %v979 = vpop.permute.xlu0 %978
  %v981 = vmul.f32 %v974, %v979
  %983 = vrot.lane.b32.xlu0 %v975, 64
  %v984 = vpop.permute.xlu0 %983
  %v986 = vmul.f32 %v974, %v984
  %988 = vrot.lane.b32.xlu0 %v986, 32
  %v989 = vpop.permute.xlu0 %988
  %v991 = vadd.f32 %v981, %v989
  %v992 = vtanh.pop %v991
  %994 = vrot.lane.b32.xlu0 %v992, 64
  %v995 = vpop.permute.xlu0 %994
  %v997 = vmul.f32 %v974, %v995
  %999 = vrot.lane.b32.xlu0 %v997, 32
  %v1000 = vpop.permute.xlu0 %999
  %1002 = vst.msk [vmem:[#allocation4] sm:$0xff] %vm190, %v1000
  %1004 = vrot.lane.b32.xlu0 %v991, 96
  %v1005 = vpop.permute.xlu0 %1004
  %1007 = vst.msk [vmem:[#allocation5] sm:$0xff] %vm190, %v1005
  %1008 = vst.msk [vmem:[#allocation3 + $0x30] sm:$0xff] %vm190, %v1000
  %v1009 = vld [vmem:[#allocation2 + $0x38] sm:$0xff]
  %v1010 = vld [vmem:[#allocation4] sm:$0xff]
  %v1012 = vsel %vm190, %v1010, 0
  %1014 = vmatprep.subr.mxu0 0.0
  %1015 = vmatpush1.msra.mxu0 %v193
  %1016 = vmatprep.subr.mxu0 0.0
  %1017 = vmatpush1.msra.mxu0 %v194
  %1018 = vmatprep.subr.mxu0 0.0
  %1019 = vmatpush1.msra.mxu0 %v195
  %1020 = vmatprep.subr.mxu0 0.0
  %1021 = vmatpush1.msra.mxu0 %v196
  %1022 = vmatprep.subr.mxu0 0.0
  %1023 = vmatpush1.msra.mxu0 0.0
  %1024 = vmatprep.subr.mxu0 0.0
  %1025 = vmatpush1.msra.mxu0 0.0
  %1026 = vmatprep.subr.mxu0 0.0
  %1027 = vmatpush1.msra.mxu0 0.0
  %1028 = vmatprep.subr.mxu0 0.0
  %1029 = vmatpush1.msra.mxu0 0.0
  %1030 = vmatprep.subr.mxu0 0.0
  %1031 = vmatpush1.msra.mxu0 0.0
  %1032 = vmatprep.subr.mxu0 0.0
  %1033 = vmatpush1.msra.mxu0 0.0
  %1034 = vmatprep.subr.mxu0 0.0
  %1035 = vmatpush1.msra.mxu0 0.0
  %1036 = vmatprep.subr.mxu0 0.0
  %1037 = vmatpush1.msra.mxu0 0.0
  %1038 = vmatprep.subr.mxu0 0.0
  %1039 = vmatpush1.msra.mxu0 0.0
  %1040 = vmatprep.subr.mxu0 0.0
  %1041 = vmatpush1.msra.mxu0 0.0
  %1042 = vmatprep.subr.mxu0 0.0
  %1043 = vmatpush1.msra.mxu0 0.0
  %1044 = vmatprep.subr.mxu0 0.0
  %1045 = vmatpush1.msra.mxu0 0.0
  %1046 = vmatprep.subr.mxu0 0.0
  %1047 = vmatpush1.msra.mxu0 0.0
  %1048 = vmatprep.subr.mxu0 0.0
  %1049 = vmatpush1.msra.mxu0 0.0
  %1050 = vmatprep.subr.mxu0 0.0
  %1051 = vmatpush1.msra.mxu0 0.0
  %1052 = vmatprep.subr.mxu0 0.0
  %1053 = vmatpush1.msra.mxu0 0.0
  %1054 = vmatprep.subr.mxu0 0.0
  %1055 = vmatpush1.msra.mxu0 0.0
  %1056 = vmatprep.subr.mxu0 0.0
  %1057 = vmatpush1.msra.mxu0 0.0
  %1058 = vmatprep.subr.mxu0 0.0
  %1059 = vmatpush1.msra.mxu0 0.0
  %1060 = vmatprep.subr.mxu0 0.0
  %1061 = vmatpush1.msra.mxu0 0.0
  %1062 = vmatprep.subr.mxu0 0.0
  %1063 = vmatpush1.msra.mxu0 0.0
  %1064 = vmatprep.subr.mxu0 0.0
  %1065 = vmatpush1.msra.mxu0 0.0
  %1066 = vmatprep.subr.mxu0 0.0
  %1067 = vmatpush1.msra.mxu0 0.0
  %1068 = vmatprep.subr.mxu0 0.0
  %1069 = vmatpush1.msra.mxu0 0.0
  %1070 = vmatprep.subr.mxu0 0.0
  %1071 = vmatpush1.msra.mxu0 0.0
  %1072 = vmatprep.subr.mxu0 0.0
  %1073 = vmatpush1.msra.mxu0 0.0
  %1074 = vmatprep.subr.mxu0 0.0
  %1075 = vmatpush1.msra.mxu0 0.0
  %1076 = vmatprep.subr.mxu0 0.0
  %1077 = vmatpush1.msra.mxu0 0.0
  %1078 = vmatprep.mubr.f32.mxu0 0.0
  %1079 = vmatmul.mubr.f32.gmra.mrb[0].mxu0 %v1012
  %v1080 = vpop.f32.mrb[0].mxu0
  %v1081 = vadd.f32 0.0, %v1080
  %v1082 = vpop.f32.mrb[0].mxu0
  %1083 = vdwg.mxu0
  %v1084 = vadd.f32 %v1009, %v1081
  %v1085 = vxor.u32 %v1084, 2147483648
  %v1086 = vmul.f32 %v1085, 1.442695
  %v1087 = vpow.pop %v1086
  %v1088 = vadd.f32 %v1087, 1.0
  %v1089 = vrcp.pop %v1088
  %v1090 = vmul.f32 1.0, %v1089
  %v1091 = vtanh.pop %v1084
  %v1092 = vld [vmem:[#allocation5] sm:$0xff]
  %1094 = vrot.lane.b32.xlu0 %v1092, 32
  %v1095 = vpop.permute.xlu0 %1094
  %v1097 = vmul.f32 %v1090, %v1095
  %1099 = vrot.lane.b32.xlu0 %v1091, 64
  %v1100 = vpop.permute.xlu0 %1099
  %v1102 = vmul.f32 %v1090, %v1100
  %1104 = vrot.lane.b32.xlu0 %v1102, 32
  %v1105 = vpop.permute.xlu0 %1104
  %v1107 = vadd.f32 %v1097, %v1105
  %v1108 = vtanh.pop %v1107
  %1110 = vrot.lane.b32.xlu0 %v1108, 64
  %v1111 = vpop.permute.xlu0 %1110
  %v1113 = vmul.f32 %v1090, %v1111
  %1115 = vrot.lane.b32.xlu0 %v1113, 32
  %v1116 = vpop.permute.xlu0 %1115
  %1118 = vst.msk [vmem:[#allocation4] sm:$0xff] %vm190, %v1116
  %1120 = vrot.lane.b32.xlu0 %v1107, 96
  %v1121 = vpop.permute.xlu0 %1120
  %1123 = vst.msk [vmem:[#allocation5] sm:$0xff] %vm190, %v1121
  %1124 = vst.msk [vmem:[#allocation3 + $0x38] sm:$0xff] %vm190, %v1116
  %v1125 = vld [vmem:[#allocation2 + $0x40] sm:$0xff]
  %v1126 = vld [vmem:[#allocation4] sm:$0xff]
  %v1128 = vsel %vm190, %v1126, 0
  %1130 = vmatprep.subr.mxu0 0.0
  %1131 = vmatpush1.msra.mxu0 %v193
  %1132 = vmatprep.subr.mxu0 0.0
  %1133 = vmatpush1.msra.mxu0 %v194
  %1134 = vmatprep.subr.mxu0 0.0
  %1135 = vmatpush1.msra.mxu0 %v195
  %1136 = vmatprep.subr.mxu0 0.0
  %1137 = vmatpush1.msra.mxu0 %v196
  %1138 = vmatprep.subr.mxu0 0.0
  %1139 = vmatpush1.msra.mxu0 0.0
  %1140 = vmatprep.subr.mxu0 0.0
  %1141 = vmatpush1.msra.mxu0 0.0
  %1142 = vmatprep.subr.mxu0 0.0
  %1143 = vmatpush1.msra.mxu0 0.0
  %1144 = vmatprep.subr.mxu0 0.0
  %1145 = vmatpush1.msra.mxu0 0.0
  %1146 = vmatprep.subr.mxu0 0.0
  %1147 = vmatpush1.msra.mxu0 0.0
  %1148 = vmatprep.subr.mxu0 0.0
  %1149 = vmatpush1.msra.mxu0 0.0
  %1150 = vmatprep.subr.mxu0 0.0
  %1151 = vmatpush1.msra.mxu0 0.0
  %1152 = vmatprep.subr.mxu0 0.0
  %1153 = vmatpush1.msra.mxu0 0.0
  %1154 = vmatprep.subr.mxu0 0.0
  %1155 = vmatpush1.msra.mxu0 0.0
  %1156 = vmatprep.subr.mxu0 0.0
  %1157 = vmatpush1.msra.mxu0 0.0
  %1158 = vmatprep.subr.mxu0 0.0
  %1159 = vmatpush1.msra.mxu0 0.0
  %1160 = vmatprep.subr.mxu0 0.0
  %1161 = vmatpush1.msra.mxu0 0.0
  %1162 = vmatprep.subr.mxu0 0.0
  %1163 = vmatpush1.msra.mxu0 0.0
  %1164 = vmatprep.subr.mxu0 0.0
  %1165 = vmatpush1.msra.mxu0 0.0
  %1166 = vmatprep.subr.mxu0 0.0
  %1167 = vmatpush1.msra.mxu0 0.0
  %1168 = vmatprep.subr.mxu0 0.0
  %1169 = vmatpush1.msra.mxu0 0.0
  %1170 = vmatprep.subr.mxu0 0.0
  %1171 = vmatpush1.msra.mxu0 0.0
  %1172 = vmatprep.subr.mxu0 0.0
  %1173 = vmatpush1.msra.mxu0 0.0
  %1174 = vmatprep.subr.mxu0 0.0
  %1175 = vmatpush1.msra.mxu0 0.0
  %1176 = vmatprep.subr.mxu0 0.0
  %1177 = vmatpush1.msra.mxu0 0.0
  %1178 = vmatprep.subr.mxu0 0.0
  %1179 = vmatpush1.msra.mxu0 0.0
  %1180 = vmatprep.subr.mxu0 0.0
  %1181 = vmatpush1.msra.mxu0 0.0
  %1182 = vmatprep.subr.mxu0 0.0
  %1183 = vmatpush1.msra.mxu0 0.0
  %1184 = vmatprep.subr.mxu0 0.0
  %1185 = vmatpush1.msra.mxu0 0.0
  %1186 = vmatprep.subr.mxu0 0.0
  %1187 = vmatpush1.msra.mxu0 0.0
  %1188 = vmatprep.subr.mxu0 0.0
  %1189 = vmatpush1.msra.mxu0 0.0
  %1190 = vmatprep.subr.mxu0 0.0
  %1191 = vmatpush1.msra.mxu0 0.0
  %1192 = vmatprep.subr.mxu0 0.0
  %1193 = vmatpush1.msra.mxu0 0.0
  %1194 = vmatprep.mubr.f32.mxu0 0.0
  %1195 = vmatmul.mubr.f32.gmra.mrb[0].mxu0 %v1128
  %v1196 = vpop.f32.mrb[0].mxu0
  %v1197 = vadd.f32 0.0, %v1196
  %v1198 = vpop.f32.mrb[0].mxu0
  %1199 = vdwg.mxu0
  %v1200 = vadd.f32 %v1125, %v1197
  %v1201 = vxor.u32 %v1200, 2147483648
  %v1202 = vmul.f32 %v1201, 1.442695
  %v1203 = vpow.pop %v1202
  %v1204 = vadd.f32 %v1203, 1.0
  %v1205 = vrcp.pop %v1204
  %v1206 = vmul.f32 1.0, %v1205
  %v1207 = vtanh.pop %v1200
  %v1208 = vld [vmem:[#allocation5] sm:$0xff]
  %1210 = vrot.lane.b32.xlu0 %v1208, 32
  %v1211 = vpop.permute.xlu0 %1210
  %v1213 = vmul.f32 %v1206, %v1211
  %1215 = vrot.lane.b32.xlu0 %v1207, 64
  %v1216 = vpop.permute.xlu0 %1215
  %v1218 = vmul.f32 %v1206, %v1216
  %1220 = vrot.lane.b32.xlu0 %v1218, 32
  %v1221 = vpop.permute.xlu0 %1220
  %v1223 = vadd.f32 %v1213, %v1221
  %v1224 = vtanh.pop %v1223
  %1226 = vrot.lane.b32.xlu0 %v1224, 64
  %v1227 = vpop.permute.xlu0 %1226
  %v1229 = vmul.f32 %v1206, %v1227
  %1231 = vrot.lane.b32.xlu0 %v1229, 32
  %v1232 = vpop.permute.xlu0 %1231
  %1234 = vst.msk [vmem:[#allocation4] sm:$0xff] %vm190, %v1232
  %1236 = vrot.lane.b32.xlu0 %v1223, 96
  %v1237 = vpop.permute.xlu0 %1236
  %1239 = vst.msk [vmem:[#allocation5] sm:$0xff] %vm190, %v1237
  %1240 = vst.msk [vmem:[#allocation3 + $0x40] sm:$0xff] %vm190, %v1232
  %v1241 = vld [vmem:[#allocation2 + $0x48] sm:$0xff]
  %v1242 = vld [vmem:[#allocation4] sm:$0xff]
  %v1244 = vsel %vm190, %v1242, 0
  %1246 = vmatprep.subr.mxu0 0.0
  %1247 = vmatpush1.msra.mxu0 %v193
  %1248 = vmatprep.subr.mxu0 0.0
  %1249 = vmatpush1.msra.mxu0 %v194
  %1250 = vmatprep.subr.mxu0 0.0
  %1251 = vmatpush1.msra.mxu0 %v195
  %1252 = vmatprep.subr.mxu0 0.0
  %1253 = vmatpush1.msra.mxu0 %v196
  %1254 = vmatprep.subr.mxu0 0.0
  %1255 = vmatpush1.msra.mxu0 0.0
  %1256 = vmatprep.subr.mxu0 0.0
  %1257 = vmatpush1.msra.mxu0 0.0
  %1258 = vmatprep.subr.mxu0 0.0
  %1259 = vmatpush1.msra.mxu0 0.0
  %1260 = vmatprep.subr.mxu0 0.0
  %1261 = vmatpush1.msra.mxu0 0.0
  %1262 = vmatprep.subr.mxu0 0.0
  %1263 = vmatpush1.msra.mxu0 0.0
  %1264 = vmatprep.subr.mxu0 0.0
  %1265 = vmatpush1.msra.mxu0 0.0
  %1266 = vmatprep.subr.mxu0 0.0
  %1267 = vmatpush1.msra.mxu0 0.0
  %1268 = vmatprep.subr.mxu0 0.0
  %1269 = vmatpush1.msra.mxu0 0.0
  %1270 = vmatprep.subr.mxu0 0.0
  %1271 = vmatpush1.msra.mxu0 0.0
  %1272 = vmatprep.subr.mxu0 0.0
  %1273 = vmatpush1.msra.mxu0 0.0
  %1274 = vmatprep.subr.mxu0 0.0
  %1275 = vmatpush1.msra.mxu0 0.0
  %1276 = vmatprep.subr.mxu0 0.0
  %1277 = vmatpush1.msra.mxu0 0.0
  %1278 = vmatprep.subr.mxu0 0.0
  %1279 = vmatpush1.msra.mxu0 0.0
  %1280 = vmatprep.subr.mxu0 0.0
  %1281 = vmatpush1.msra.mxu0 0.0
  %1282 = vmatprep.subr.mxu0 0.0
  %1283 = vmatpush1.msra.mxu0 0.0
  %1284 = vmatprep.subr.mxu0 0.0
  %1285 = vmatpush1.msra.mxu0 0.0
  %1286 = vmatprep.subr.mxu0 0.0
  %1287 = vmatpush1.msra.mxu0 0.0
  %1288 = vmatprep.subr.mxu0 0.0
  %1289 = vmatpush1.msra.mxu0 0.0
  %1290 = vmatprep.subr.mxu0 0.0
  %1291 = vmatpush1.msra.mxu0 0.0
  %1292 = vmatprep.subr.mxu0 0.0
  %1293 = vmatpush1.msra.mxu0 0.0
  %1294 = vmatprep.subr.mxu0 0.0
  %1295 = vmatpush1.msra.mxu0 0.0
  %1296 = vmatprep.subr.mxu0 0.0
  %1297 = vmatpush1.msra.mxu0 0.0
  %1298 = vmatprep.subr.mxu0 0.0
  %1299 = vmatpush1.msra.mxu0 0.0
  %1300 = vmatprep.subr.mxu0 0.0
  %1301 = vmatpush1.msra.mxu0 0.0
  %1302 = vmatprep.subr.mxu0 0.0
  %1303 = vmatpush1.msra.mxu0 0.0
  %1304 = vmatprep.subr.mxu0 0.0
  %1305 = vmatpush1.msra.mxu0 0.0
  %1306 = vmatprep.subr.mxu0 0.0
  %1307 = vmatpush1.msra.mxu0 0.0
  %1308 = vmatprep.subr.mxu0 0.0
  %1309 = vmatpush1.msra.mxu0 0.0
  %1310 = vmatprep.mubr.f32.mxu0 0.0
  %1311 = vmatmul.mubr.f32.gmra.mrb[0].mxu0 %v1244
  %v1312 = vpop.f32.mrb[0].mxu0
  %v1313 = vadd.f32 0.0, %v1312
  %v1314 = vpop.f32.mrb[0].mxu0
  %1315 = vdwg.mxu0
  %v1316 = vadd.f32 %v1241, %v1313
  %v1317 = vxor.u32 %v1316, 2147483648
  %v1318 = vmul.f32 %v1317, 1.442695
  %v1319 = vpow.pop %v1318
  %v1320 = vadd.f32 %v1319, 1.0
  %v1321 = vrcp.pop %v1320
  %v1322 = vmul.f32 1.0, %v1321
  %v1323 = vtanh.pop %v1316
  %v1324 = vld [vmem:[#allocation5] sm:$0xff]
  %1326 = vrot.lane.b32.xlu0 %v1324, 32
  %v1327 = vpop.permute.xlu0 %1326
  %v1329 = vmul.f32 %v1322, %v1327
  %1331 = vrot.lane.b32.xlu0 %v1323, 64
  %v1332 = vpop.permute.xlu0 %1331
  %v1334 = vmul.f32 %v1322, %v1332
  %1336 = vrot.lane.b32.xlu0 %v1334, 32
  %v1337 = vpop.permute.xlu0 %1336
  %v1339 = vadd.f32 %v1329, %v1337
  %v1340 = vtanh.pop %v1339
  %1342 = vrot.lane.b32.xlu0 %v1340, 64
  %v1343 = vpop.permute.xlu0 %1342
  %v1345 = vmul.f32 %v1322, %v1343
  %1347 = vrot.lane.b32.xlu0 %v1345, 32
  %v1348 = vpop.permute.xlu0 %1347
  %1350 = vst.msk [vmem:[#allocation4] sm:$0xff] %vm190, %v1348
  %1352 = vrot.lane.b32.xlu0 %v1339, 96
  %v1353 = vpop.permute.xlu0 %1352
  %1355 = vst.msk [vmem:[#allocation5] sm:$0xff] %vm190, %v1353
  %1356 = vst.msk [vmem:[#allocation3 + $0x48] sm:$0xff] %vm190, %v1348
  %v1357 = vld [vmem:[#allocation2 + $0x50] sm:$0xff]
  %v1358 = vld [vmem:[#allocation4] sm:$0xff]
  %v1360 = vsel %vm190, %v1358, 0
  %1362 = vmatprep.subr.mxu0 0.0
  %1363 = vmatpush1.msra.mxu0 %v193
  %1364 = vmatprep.subr.mxu0 0.0
  %1365 = vmatpush1.msra.mxu0 %v194
  %1366 = vmatprep.subr.mxu0 0.0
  %1367 = vmatpush1.msra.mxu0 %v195
  %1368 = vmatprep.subr.mxu0 0.0
  %1369 = vmatpush1.msra.mxu0 %v196
  %1370 = vmatprep.subr.mxu0 0.0
  %1371 = vmatpush1.msra.mxu0 0.0
  %1372 = vmatprep.subr.mxu0 0.0
  %1373 = vmatpush1.msra.mxu0 0.0
  %1374 = vmatprep.subr.mxu0 0.0
  %1375 = vmatpush1.msra.mxu0 0.0
  %1376 = vmatprep.subr.mxu0 0.0
  %1377 = vmatpush1.msra.mxu0 0.0
  %1378 = vmatprep.subr.mxu0 0.0
  %1379 = vmatpush1.msra.mxu0 0.0
  %1380 = vmatprep.subr.mxu0 0.0
  %1381 = vmatpush1.msra.mxu0 0.0
  %1382 = vmatprep.subr.mxu0 0.0
  %1383 = vmatpush1.msra.mxu0 0.0
  %1384 = vmatprep.subr.mxu0 0.0
  %1385 = vmatpush1.msra.mxu0 0.0
  %1386 = vmatprep.subr.mxu0 0.0
  %1387 = vmatpush1.msra.mxu0 0.0
  %1388 = vmatprep.subr.mxu0 0.0
  %1389 = vmatpush1.msra.mxu0 0.0
  %1390 = vmatprep.subr.mxu0 0.0
  %1391 = vmatpush1.msra.mxu0 0.0
  %1392 = vmatprep.subr.mxu0 0.0
  %1393 = vmatpush1.msra.mxu0 0.0
  %1394 = vmatprep.subr.mxu0 0.0
  %1395 = vmatpush1.msra.mxu0 0.0
  %1396 = vmatprep.subr.mxu0 0.0
  %1397 = vmatpush1.msra.mxu0 0.0
  %1398 = vmatprep.subr.mxu0 0.0
  %1399 = vmatpush1.msra.mxu0 0.0
  %1400 = vmatprep.subr.mxu0 0.0
  %1401 = vmatpush1.msra.mxu0 0.0
  %1402 = vmatprep.subr.mxu0 0.0
  %1403 = vmatpush1.msra.mxu0 0.0
  %1404 = vmatprep.subr.mxu0 0.0
  %1405 = vmatpush1.msra.mxu0 0.0
  %1406 = vmatprep.subr.mxu0 0.0
  %1407 = vmatpush1.msra.mxu0 0.0
  %1408 = vmatprep.subr.mxu0 0.0
  %1409 = vmatpush1.msra.mxu0 0.0
  %1410 = vmatprep.subr.mxu0 0.0
  %1411 = vmatpush1.msra.mxu0 0.0
  %1412 = vmatprep.subr.mxu0 0.0
  %1413 = vmatpush1.msra.mxu0 0.0
  %1414 = vmatprep.subr.mxu0 0.0
  %1415 = vmatpush1.msra.mxu0 0.0
  %1416 = vmatprep.subr.mxu0 0.0
  %1417 = vmatpush1.msra.mxu0 0.0
  %1418 = vmatprep.subr.mxu0 0.0
  %1419 = vmatpush1.msra.mxu0 0.0
  %1420 = vmatprep.subr.mxu0 0.0
  %1421 = vmatpush1.msra.mxu0 0.0
  %1422 = vmatprep.subr.mxu0 0.0
  %1423 = vmatpush1.msra.mxu0 0.0
  %1424 = vmatprep.subr.mxu0 0.0
  %1425 = vmatpush1.msra.mxu0 0.0
  %1426 = vmatprep.mubr.f32.mxu0 0.0
  %1427 = vmatmul.mubr.f32.gmra.mrb[0].mxu0 %v1360
  %v1428 = vpop.f32.mrb[0].mxu0
  %v1429 = vadd.f32 0.0, %v1428
  %v1430 = vpop.f32.mrb[0].mxu0
  %1431 = vdwg.mxu0
  %v1432 = vadd.f32 %v1357, %v1429
  %v1433 = vxor.u32 %v1432, 2147483648
  %v1434 = vmul.f32 %v1433, 1.442695
  %v1435 = vpow.pop %v1434
  %v1436 = vadd.f32 %v1435, 1.0
  %v1437 = vrcp.pop %v1436
  %v1438 = vmul.f32 1.0, %v1437
  %v1439 = vtanh.pop %v1432
  %v1440 = vld [vmem:[#allocation5] sm:$0xff]
  %1442 = vrot.lane.b32.xlu0 %v1440, 32
  %v1443 = vpop.permute.xlu0 %1442
  %v1445 = vmul.f32 %v1438, %v1443
  %1447 = vrot.lane.b32.xlu0 %v1439, 64
  %v1448 = vpop.permute.xlu0 %1447
  %v1450 = vmul.f32 %v1438, %v1448
  %1452 = vrot.lane.b32.xlu0 %v1450, 32
  %v1453 = vpop.permute.xlu0 %1452
  %v1455 = vadd.f32 %v1445, %v1453
  %v1456 = vtanh.pop %v1455
  %1458 = vrot.lane.b32.xlu0 %v1456, 64
  %v1459 = vpop.permute.xlu0 %1458
  %v1461 = vmul.f32 %v1438, %v1459
  %1463 = vrot.lane.b32.xlu0 %v1461, 32
  %v1464 = vpop.permute.xlu0 %1463
  %1466 = vst.msk [vmem:[#allocation4] sm:$0xff] %vm190, %v1464
  %1468 = vrot.lane.b32.xlu0 %v1455, 96
  %v1469 = vpop.permute.xlu0 %1468
  %1471 = vst.msk [vmem:[#allocation5] sm:$0xff] %vm190, %v1469
  %1472 = vst.msk [vmem:[#allocation3 + $0x50] sm:$0xff] %vm190, %v1464
  %v1473 = vld [vmem:[#allocation2 + $0x58] sm:$0xff]
  %v1474 = vld [vmem:[#allocation4] sm:$0xff]
  %v1476 = vsel %vm190, %v1474, 0
  %1478 = vmatprep.subr.mxu0 0.0
  %1479 = vmatpush1.msra.mxu0 %v193
  %1480 = vmatprep.subr.mxu0 0.0
  %1481 = vmatpush1.msra.mxu0 %v194
  %1482 = vmatprep.subr.mxu0 0.0
  %1483 = vmatpush1.msra.mxu0 %v195
  %1484 = vmatprep.subr.mxu0 0.0
  %1485 = vmatpush1.msra.mxu0 %v196
  %1486 = vmatprep.subr.mxu0 0.0
  %1487 = vmatpush1.msra.mxu0 0.0
  %1488 = vmatprep.subr.mxu0 0.0
  %1489 = vmatpush1.msra.mxu0 0.0
  %1490 = vmatprep.subr.mxu0 0.0
  %1491 = vmatpush1.msra.mxu0 0.0
  %1492 = vmatprep.subr.mxu0 0.0
  %1493 = vmatpush1.msra.mxu0 0.0
  %1494 = vmatprep.subr.mxu0 0.0
  %1495 = vmatpush1.msra.mxu0 0.0
  %1496 = vmatprep.subr.mxu0 0.0
  %1497 = vmatpush1.msra.mxu0 0.0
  %1498 = vmatprep.subr.mxu0 0.0
  %1499 = vmatpush1.msra.mxu0 0.0
  %1500 = vmatprep.subr.mxu0 0.0
  %1501 = vmatpush1.msra.mxu0 0.0
  %1502 = vmatprep.subr.mxu0 0.0
  %1503 = vmatpush1.msra.mxu0 0.0
  %1504 = vmatprep.subr.mxu0 0.0
  %1505 = vmatpush1.msra.mxu0 0.0
  %1506 = vmatprep.subr.mxu0 0.0
  %1507 = vmatpush1.msra.mxu0 0.0
  %1508 = vmatprep.subr.mxu0 0.0
  %1509 = vmatpush1.msra.mxu0 0.0
  %1510 = vmatprep.subr.mxu0 0.0
  %1511 = vmatpush1.msra.mxu0 0.0
  %1512 = vmatprep.subr.mxu0 0.0
  %1513 = vmatpush1.msra.mxu0 0.0
  %1514 = vmatprep.subr.mxu0 0.0
  %1515 = vmatpush1.msra.mxu0 0.0
  %1516 = vmatprep.subr.mxu0 0.0
  %1517 = vmatpush1.msra.mxu0 0.0
  %1518 = vmatprep.subr.mxu0 0.0
  %1519 = vmatpush1.msra.mxu0 0.0
  %1520 = vmatprep.subr.mxu0 0.0
  %1521 = vmatpush1.msra.mxu0 0.0
  %1522 = vmatprep.subr.mxu0 0.0
  %1523 = vmatpush1.msra.mxu0 0.0
  %1524 = vmatprep.subr.mxu0 0.0
  %1525 = vmatpush1.msra.mxu0 0.0
  %1526 = vmatprep.subr.mxu0 0.0
  %1527 = vmatpush1.msra.mxu0 0.0
  %1528 = vmatprep.subr.mxu0 0.0
  %1529 = vmatpush1.msra.mxu0 0.0
  %1530 = vmatprep.subr.mxu0 0.0
  %1531 = vmatpush1.msra.mxu0 0.0
  %1532 = vmatprep.subr.mxu0 0.0
  %1533 = vmatpush1.msra.mxu0 0.0
  %1534 = vmatprep.subr.mxu0 0.0
  %1535 = vmatpush1.msra.mxu0 0.0
  %1536 = vmatprep.subr.mxu0 0.0
  %1537 = vmatpush1.msra.mxu0 0.0
  %1538 = vmatprep.subr.mxu0 0.0
  %1539 = vmatpush1.msra.mxu0 0.0
  %1540 = vmatprep.subr.mxu0 0.0
  %1541 = vmatpush1.msra.mxu0 0.0
  %1542 = vmatprep.mubr.f32.mxu0 0.0
  %1543 = vmatmul.mubr.f32.gmra.mrb[0].mxu0 %v1476
  %v1544 = vpop.f32.mrb[0].mxu0
  %v1545 = vadd.f32 0.0, %v1544
  %v1546 = vpop.f32.mrb[0].mxu0
  %1547 = vdwg.mxu0
  %v1548 = vadd.f32 %v1473, %v1545
  %v1549 = vxor.u32 %v1548, 2147483648
  %v1550 = vmul.f32 %v1549, 1.442695
  %v1551 = vpow.pop %v1550
  %v1552 = vadd.f32 %v1551, 1.0
  %v1553 = vrcp.pop %v1552
  %v1554 = vmul.f32 1.0, %v1553
  %v1555 = vtanh.pop %v1548
  %v1556 = vld [vmem:[#allocation5] sm:$0xff]
  %1558 = vrot.lane.b32.xlu0 %v1556, 32
  %v1559 = vpop.permute.xlu0 %1558
  %v1561 = vmul.f32 %v1554, %v1559
  %1563 = vrot.lane.b32.xlu0 %v1555, 64
  %v1564 = vpop.permute.xlu0 %1563
  %v1566 = vmul.f32 %v1554, %v1564
  %1568 = vrot.lane.b32.xlu0 %v1566, 32
  %v1569 = vpop.permute.xlu0 %1568
  %v1571 = vadd.f32 %v1561, %v1569
  %v1572 = vtanh.pop %v1571
  %1574 = vrot.lane.b32.xlu0 %v1572, 64
  %v1575 = vpop.permute.xlu0 %1574
  %v1577 = vmul.f32 %v1554, %v1575
  %1579 = vrot.lane.b32.xlu0 %v1577, 32
  %v1580 = vpop.permute.xlu0 %1579
  %1582 = vst.msk [vmem:[#allocation4] sm:$0xff] %vm190, %v1580
  %1584 = vrot.lane.b32.xlu0 %v1571, 96
  %v1585 = vpop.permute.xlu0 %1584
  %1587 = vst.msk [vmem:[#allocation5] sm:$0xff] %vm190, %v1585
  %1588 = vst.msk [vmem:[#allocation3 + $0x58] sm:$0xff] %vm190, %v1580
  %v1589 = vld [vmem:[#allocation2 + $0x60] sm:$0xff]
  %v1590 = vld [vmem:[#allocation4] sm:$0xff]
  %v1592 = vsel %vm190, %v1590, 0
  %1594 = vmatprep.subr.mxu0 0.0
  %1595 = vmatpush1.msra.mxu0 %v193
  %1596 = vmatprep.subr.mxu0 0.0
  %1597 = vmatpush1.msra.mxu0 %v194
  %1598 = vmatprep.subr.mxu0 0.0
  %1599 = vmatpush1.msra.mxu0 %v195
  %1600 = vmatprep.subr.mxu0 0.0
  %1601 = vmatpush1.msra.mxu0 %v196
  %1602 = vmatprep.subr.mxu0 0.0
  %1603 = vmatpush1.msra.mxu0 0.0
  %1604 = vmatprep.subr.mxu0 0.0
  %1605 = vmatpush1.msra.mxu0 0.0
  %1606 = vmatprep.subr.mxu0 0.0
  %1607 = vmatpush1.msra.mxu0 0.0
  %1608 = vmatprep.subr.mxu0 0.0
  %1609 = vmatpush1.msra.mxu0 0.0
  %1610 = vmatprep.subr.mxu0 0.0
  %1611 = vmatpush1.msra.mxu0 0.0
  %1612 = vmatprep.subr.mxu0 0.0
  %1613 = vmatpush1.msra.mxu0 0.0
  %1614 = vmatprep.subr.mxu0 0.0
  %1615 = vmatpush1.msra.mxu0 0.0
  %1616 = vmatprep.subr.mxu0 0.0
  %1617 = vmatpush1.msra.mxu0 0.0
  %1618 = vmatprep.subr.mxu0 0.0
  %1619 = vmatpush1.msra.mxu0 0.0
  %1620 = vmatprep.subr.mxu0 0.0
  %1621 = vmatpush1.msra.mxu0 0.0
  %1622 = vmatprep.subr.mxu0 0.0
  %1623 = vmatpush1.msra.mxu0 0.0
  %1624 = vmatprep.subr.mxu0 0.0
  %1625 = vmatpush1.msra.mxu0 0.0
  %1626 = vmatprep.subr.mxu0 0.0
  %1627 = vmatpush1.msra.mxu0 0.0
  %1628 = vmatprep.subr.mxu0 0.0
  %1629 = vmatpush1.msra.mxu0 0.0
  %1630 = vmatprep.subr.mxu0 0.0
  %1631 = vmatpush1.msra.mxu0 0.0
  %1632 = vmatprep.subr.mxu0 0.0
  %1633 = vmatpush1.msra.mxu0 0.0
  %1634 = vmatprep.subr.mxu0 0.0
  %1635 = vmatpush1.msra.mxu0 0.0
  %1636 = vmatprep.subr.mxu0 0.0
  %1637 = vmatpush1.msra.mxu0 0.0
  %1638 = vmatprep.subr.mxu0 0.0
  %1639 = vmatpush1.msra.mxu0 0.0
  %1640 = vmatprep.subr.mxu0 0.0
  %1641 = vmatpush1.msra.mxu0 0.0
  %1642 = vmatprep.subr.mxu0 0.0
  %1643 = vmatpush1.msra.mxu0 0.0
  %1644 = vmatprep.subr.mxu0 0.0
  %1645 = vmatpush1.msra.mxu0 0.0
  %1646 = vmatprep.subr.mxu0 0.0
  %1647 = vmatpush1.msra.mxu0 0.0
  %1648 = vmatprep.subr.mxu0 0.0
  %1649 = vmatpush1.msra.mxu0 0.0
  %1650 = vmatprep.subr.mxu0 0.0
  %1651 = vmatpush1.msra.mxu0 0.0
  %1652 = vmatprep.subr.mxu0 0.0
  %1653 = vmatpush1.msra.mxu0 0.0
  %1654 = vmatprep.subr.mxu0 0.0
  %1655 = vmatpush1.msra.mxu0 0.0
  %1656 = vmatprep.subr.mxu0 0.0
  %1657 = vmatpush1.msra.mxu0 0.0
  %1658 = vmatprep.mubr.f32.mxu0 0.0
  %1659 = vmatmul.mubr.f32.gmra.mrb[0].mxu0 %v1592
  %v1660 = vpop.f32.mrb[0].mxu0
  %v1661 = vadd.f32 0.0, %v1660
  %v1662 = vpop.f32.mrb[0].mxu0
  %1663 = vdwg.mxu0
  %v1664 = vadd.f32 %v1589, %v1661
  %v1665 = vxor.u32 %v1664, 2147483648
  %v1666 = vmul.f32 %v1665, 1.442695
  %v1667 = vpow.pop %v1666
  %v1668 = vadd.f32 %v1667, 1.0
  %v1669 = vrcp.pop %v1668
  %v1670 = vmul.f32 1.0, %v1669
  %v1671 = vtanh.pop %v1664
  %v1672 = vld [vmem:[#allocation5] sm:$0xff]
  %1674 = vrot.lane.b32.xlu0 %v1672, 32
  %v1675 = vpop.permute.xlu0 %1674
  %v1677 = vmul.f32 %v1670, %v1675
  %1679 = vrot.lane.b32.xlu0 %v1671, 64
  %v1680 = vpop.permute.xlu0 %1679
  %v1682 = vmul.f32 %v1670, %v1680
  %1684 = vrot.lane.b32.xlu0 %v1682, 32
  %v1685 = vpop.permute.xlu0 %1684
  %v1687 = vadd.f32 %v1677, %v1685
  %v1688 = vtanh.pop %v1687
  %1690 = vrot.lane.b32.xlu0 %v1688, 64
  %v1691 = vpop.permute.xlu0 %1690
  %v1693 = vmul.f32 %v1670, %v1691
  %1695 = vrot.lane.b32.xlu0 %v1693, 32
  %v1696 = vpop.permute.xlu0 %1695
  %1698 = vst.msk [vmem:[#allocation4] sm:$0xff] %vm190, %v1696
  %1700 = vrot.lane.b32.xlu0 %v1687, 96
  %v1701 = vpop.permute.xlu0 %1700
  %1703 = vst.msk [vmem:[#allocation5] sm:$0xff] %vm190, %v1701
  %1704 = vst.msk [vmem:[#allocation3 + $0x60] sm:$0xff] %vm190, %v1696
  %v1705 = vld [vmem:[#allocation2 + $0x68] sm:$0xff]
  %v1706 = vld [vmem:[#allocation4] sm:$0xff]
  %v1708 = vsel %vm190, %v1706, 0
  %1710 = vmatprep.subr.mxu0 0.0
  %1711 = vmatpush1.msra.mxu0 %v193
  %1712 = vmatprep.subr.mxu0 0.0
  %1713 = vmatpush1.msra.mxu0 %v194
  %1714 = vmatprep.subr.mxu0 0.0
  %1715 = vmatpush1.msra.mxu0 %v195
  %1716 = vmatprep.subr.mxu0 0.0
  %1717 = vmatpush1.msra.mxu0 %v196
  %1718 = vmatprep.subr.mxu0 0.0
  %1719 = vmatpush1.msra.mxu0 0.0
  %1720 = vmatprep.subr.mxu0 0.0
  %1721 = vmatpush1.msra.mxu0 0.0
  %1722 = vmatprep.subr.mxu0 0.0
  %1723 = vmatpush1.msra.mxu0 0.0
  %1724 = vmatprep.subr.mxu0 0.0
  %1725 = vmatpush1.msra.mxu0 0.0
  %1726 = vmatprep.subr.mxu0 0.0
  %1727 = vmatpush1.msra.mxu0 0.0
  %1728 = vmatprep.subr.mxu0 0.0
  %1729 = vmatpush1.msra.mxu0 0.0
  %1730 = vmatprep.subr.mxu0 0.0
  %1731 = vmatpush1.msra.mxu0 0.0
  %1732 = vmatprep.subr.mxu0 0.0
  %1733 = vmatpush1.msra.mxu0 0.0
  %1734 = vmatprep.subr.mxu0 0.0
  %1735 = vmatpush1.msra.mxu0 0.0
  %1736 = vmatprep.subr.mxu0 0.0
  %1737 = vmatpush1.msra.mxu0 0.0
  %1738 = vmatprep.subr.mxu0 0.0
  %1739 = vmatpush1.msra.mxu0 0.0
  %1740 = vmatprep.subr.mxu0 0.0
  %1741 = vmatpush1.msra.mxu0 0.0
  %1742 = vmatprep.subr.mxu0 0.0
  %1743 = vmatpush1.msra.mxu0 0.0
  %1744 = vmatprep.subr.mxu0 0.0
  %1745 = vmatpush1.msra.mxu0 0.0
  %1746 = vmatprep.subr.mxu0 0.0
  %1747 = vmatpush1.msra.mxu0 0.0
  %1748 = vmatprep.subr.mxu0 0.0
  %1749 = vmatpush1.msra.mxu0 0.0
  %1750 = vmatprep.subr.mxu0 0.0
  %1751 = vmatpush1.msra.mxu0 0.0
  %1752 = vmatprep.subr.mxu0 0.0
  %1753 = vmatpush1.msra.mxu0 0.0
  %1754 = vmatprep.subr.mxu0 0.0
  %1755 = vmatpush1.msra.mxu0 0.0
  %1756 = vmatprep.subr.mxu0 0.0
  %1757 = vmatpush1.msra.mxu0 0.0
  %1758 = vmatprep.subr.mxu0 0.0
  %1759 = vmatpush1.msra.mxu0 0.0
  %1760 = vmatprep.subr.mxu0 0.0
  %1761 = vmatpush1.msra.mxu0 0.0
  %1762 = vmatprep.subr.mxu0 0.0
  %1763 = vmatpush1.msra.mxu0 0.0
  %1764 = vmatprep.subr.mxu0 0.0
  %1765 = vmatpush1.msra.mxu0 0.0
  %1766 = vmatprep.subr.mxu0 0.0
  %1767 = vmatpush1.msra.mxu0 0.0
  %1768 = vmatprep.subr.mxu0 0.0
  %1769 = vmatpush1.msra.mxu0 0.0
  %1770 = vmatprep.subr.mxu0 0.0
  %1771 = vmatpush1.msra.mxu0 0.0
  %1772 = vmatprep.subr.mxu0 0.0
  %1773 = vmatpush1.msra.mxu0 0.0
  %1774 = vmatprep.mubr.f32.mxu0 0.0
  %1775 = vmatmul.mubr.f32.gmra.mrb[0].mxu0 %v1708
  %v1776 = vpop.f32.mrb[0].mxu0
  %v1777 = vadd.f32 0.0, %v1776
  %v1778 = vpop.f32.mrb[0].mxu0
  %1779 = vdwg.mxu0
  %v1780 = vadd.f32 %v1705, %v1777
  %v1781 = vxor.u32 %v1780, 2147483648
  %v1782 = vmul.f32 %v1781, 1.442695
  %v1783 = vpow.pop %v1782
  %v1784 = vadd.f32 %v1783, 1.0
  %v1785 = vrcp.pop %v1784
  %v1786 = vmul.f32 1.0, %v1785
  %v1787 = vtanh.pop %v1780
  %v1788 = vld [vmem:[#allocation5] sm:$0xff]
  %1790 = vrot.lane.b32.xlu0 %v1788, 32
  %v1791 = vpop.permute.xlu0 %1790
  %v1793 = vmul.f32 %v1786, %v1791
  %1795 = vrot.lane.b32.xlu0 %v1787, 64
  %v1796 = vpop.permute.xlu0 %1795
  %v1798 = vmul.f32 %v1786, %v1796
  %1800 = vrot.lane.b32.xlu0 %v1798, 32
  %v1801 = vpop.permute.xlu0 %1800
  %v1803 = vadd.f32 %v1793, %v1801
  %v1804 = vtanh.pop %v1803
  %1806 = vrot.lane.b32.xlu0 %v1804, 64
  %v1807 = vpop.permute.xlu0 %1806
  %v1809 = vmul.f32 %v1786, %v1807
  %1811 = vrot.lane.b32.xlu0 %v1809, 32
  %v1812 = vpop.permute.xlu0 %1811
  %1814 = vst.msk [vmem:[#allocation4] sm:$0xff] %vm190, %v1812
  %1816 = vrot.lane.b32.xlu0 %v1803, 96
  %v1817 = vpop.permute.xlu0 %1816
  %1819 = vst.msk [vmem:[#allocation5] sm:$0xff] %vm190, %v1817
  %1820 = vst.msk [vmem:[#allocation3 + $0x68] sm:$0xff] %vm190, %v1812
  %v1821 = vld [vmem:[#allocation2 + $0x70] sm:$0xff]
  %v1822 = vld [vmem:[#allocation4] sm:$0xff]
  %v1824 = vsel %vm190, %v1822, 0
  %1826 = vmatprep.subr.mxu0 0.0
  %1827 = vmatpush1.msra.mxu0 %v193
  %1828 = vmatprep.subr.mxu0 0.0
  %1829 = vmatpush1.msra.mxu0 %v194
  %1830 = vmatprep.subr.mxu0 0.0
  %1831 = vmatpush1.msra.mxu0 %v195
  %1832 = vmatprep.subr.mxu0 0.0
  %1833 = vmatpush1.msra.mxu0 %v196
  %1834 = vmatprep.subr.mxu0 0.0
  %1835 = vmatpush1.msra.mxu0 0.0
  %1836 = vmatprep.subr.mxu0 0.0
  %1837 = vmatpush1.msra.mxu0 0.0
  %1838 = vmatprep.subr.mxu0 0.0
  %1839 = vmatpush1.msra.mxu0 0.0
  %1840 = vmatprep.subr.mxu0 0.0
  %1841 = vmatpush1.msra.mxu0 0.0
  %1842 = vmatprep.subr.mxu0 0.0
  %1843 = vmatpush1.msra.mxu0 0.0
  %1844 = vmatprep.subr.mxu0 0.0
  %1845 = vmatpush1.msra.mxu0 0.0
  %1846 = vmatprep.subr.mxu0 0.0
  %1847 = vmatpush1.msra.mxu0 0.0
  %1848 = vmatprep.subr.mxu0 0.0
  %1849 = vmatpush1.msra.mxu0 0.0
  %1850 = vmatprep.subr.mxu0 0.0
  %1851 = vmatpush1.msra.mxu0 0.0
  %1852 = vmatprep.subr.mxu0 0.0
  %1853 = vmatpush1.msra.mxu0 0.0
  %1854 = vmatprep.subr.mxu0 0.0
  %1855 = vmatpush1.msra.mxu0 0.0
  %1856 = vmatprep.subr.mxu0 0.0
  %1857 = vmatpush1.msra.mxu0 0.0
  %1858 = vmatprep.subr.mxu0 0.0
  %1859 = vmatpush1.msra.mxu0 0.0
  %1860 = vmatprep.subr.mxu0 0.0
  %1861 = vmatpush1.msra.mxu0 0.0
  %1862 = vmatprep.subr.mxu0 0.0
  %1863 = vmatpush1.msra.mxu0 0.0
  %1864 = vmatprep.subr.mxu0 0.0
  %1865 = vmatpush1.msra.mxu0 0.0
  %1866 = vmatprep.subr.mxu0 0.0
  %1867 = vmatpush1.msra.mxu0 0.0
  %1868 = vmatprep.subr.mxu0 0.0
  %1869 = vmatpush1.msra.mxu0 0.0
  %1870 = vmatprep.subr.mxu0 0.0
  %1871 = vmatpush1.msra.mxu0 0.0
  %1872 = vmatprep.subr.mxu0 0.0
  %1873 = vmatpush1.msra.mxu0 0.0
  %1874 = vmatprep.subr.mxu0 0.0
  %1875 = vmatpush1.msra.mxu0 0.0
  %1876 = vmatprep.subr.mxu0 0.0
  %1877 = vmatpush1.msra.mxu0 0.0
  %1878 = vmatprep.subr.mxu0 0.0
  %1879 = vmatpush1.msra.mxu0 0.0
  %1880 = vmatprep.subr.mxu0 0.0
  %1881 = vmatpush1.msra.mxu0 0.0
  %1882 = vmatprep.subr.mxu0 0.0
  %1883 = vmatpush1.msra.mxu0 0.0
  %1884 = vmatprep.subr.mxu0 0.0
  %1885 = vmatpush1.msra.mxu0 0.0
  %1886 = vmatprep.subr.mxu0 0.0
  %1887 = vmatpush1.msra.mxu0 0.0
  %1888 = vmatprep.subr.mxu0 0.0
  %1889 = vmatpush1.msra.mxu0 0.0
  %1890 = vmatprep.mubr.f32.mxu0 0.0
  %1891 = vmatmul.mubr.f32.gmra.mrb[0].mxu0 %v1824
  %v1892 = vpop.f32.mrb[0].mxu0
  %v1893 = vadd.f32 0.0, %v1892
  %v1894 = vpop.f32.mrb[0].mxu0
  %1895 = vdwg.mxu0
  %v1896 = vadd.f32 %v1821, %v1893
  %v1897 = vxor.u32 %v1896, 2147483648
  %v1898 = vmul.f32 %v1897, 1.442695
  %v1899 = vpow.pop %v1898
  %v1900 = vadd.f32 %v1899, 1.0
  %v1901 = vrcp.pop %v1900
  %v1902 = vmul.f32 1.0, %v1901
  %v1903 = vtanh.pop %v1896
  %v1904 = vld [vmem:[#allocation5] sm:$0xff]
  %1906 = vrot.lane.b32.xlu0 %v1904, 32
  %v1907 = vpop.permute.xlu0 %1906
  %v1909 = vmul.f32 %v1902, %v1907
  %1911 = vrot.lane.b32.xlu0 %v1903, 64
  %v1912 = vpop.permute.xlu0 %1911
  %v1914 = vmul.f32 %v1902, %v1912
  %1916 = vrot.lane.b32.xlu0 %v1914, 32
  %v1917 = vpop.permute.xlu0 %1916
  %v1919 = vadd.f32 %v1909, %v1917
  %v1920 = vtanh.pop %v1919
  %1922 = vrot.lane.b32.xlu0 %v1920, 64
  %v1923 = vpop.permute.xlu0 %1922
  %v1925 = vmul.f32 %v1902, %v1923
  %1927 = vrot.lane.b32.xlu0 %v1925, 32
  %v1928 = vpop.permute.xlu0 %1927
  %1930 = vst.msk [vmem:[#allocation4] sm:$0xff] %vm190, %v1928
  %1932 = vrot.lane.b32.xlu0 %v1919, 96
  %v1933 = vpop.permute.xlu0 %1932
  %1935 = vst.msk [vmem:[#allocation5] sm:$0xff] %vm190, %v1933
  %1936 = vst.msk [vmem:[#allocation3 + $0x70] sm:$0xff] %vm190, %v1928
  %v1937 = vld [vmem:[#allocation2 + $0x78] sm:$0xff]
  %v1938 = vld [vmem:[#allocation4] sm:$0xff]
  %v1940 = vsel %vm190, %v1938, 0
  %1942 = vmatprep.subr.mxu0 0.0
  %1943 = vmatpush1.msra.mxu0 %v193
  %1944 = vmatprep.subr.mxu0 0.0
  %1945 = vmatpush1.msra.mxu0 %v194
  %1946 = vmatprep.subr.mxu0 0.0
  %1947 = vmatpush1.msra.mxu0 %v195
  %1948 = vmatprep.subr.mxu0 0.0
  %1949 = vmatpush1.msra.mxu0 %v196
  %1950 = vmatprep.subr.mxu0 0.0
  %1951 = vmatpush1.msra.mxu0 0.0
  %1952 = vmatprep.subr.mxu0 0.0
  %1953 = vmatpush1.msra.mxu0 0.0
  %1954 = vmatprep.subr.mxu0 0.0
  %1955 = vmatpush1.msra.mxu0 0.0
  %1956 = vmatprep.subr.mxu0 0.0
  %1957 = vmatpush1.msra.mxu0 0.0
  %1958 = vmatprep.subr.mxu0 0.0
  %1959 = vmatpush1.msra.mxu0 0.0
  %1960 = vmatprep.subr.mxu0 0.0
  %1961 = vmatpush1.msra.mxu0 0.0
  %1962 = vmatprep.subr.mxu0 0.0
  %1963 = vmatpush1.msra.mxu0 0.0
  %1964 = vmatprep.subr.mxu0 0.0
  %1965 = vmatpush1.msra.mxu0 0.0
  %1966 = vmatprep.subr.mxu0 0.0
  %1967 = vmatpush1.msra.mxu0 0.0
  %1968 = vmatprep.subr.mxu0 0.0
  %1969 = vmatpush1.msra.mxu0 0.0
  %1970 = vmatprep.subr.mxu0 0.0
  %1971 = vmatpush1.msra.mxu0 0.0
  %1972 = vmatprep.subr.mxu0 0.0
  %1973 = vmatpush1.msra.mxu0 0.0
  %1974 = vmatprep.subr.mxu0 0.0
  %1975 = vmatpush1.msra.mxu0 0.0
  %1976 = vmatprep.subr.mxu0 0.0
  %1977 = vmatpush1.msra.mxu0 0.0
  %1978 = vmatprep.subr.mxu0 0.0
  %1979 = vmatpush1.msra.mxu0 0.0
  %1980 = vmatprep.subr.mxu0 0.0
  %1981 = vmatpush1.msra.mxu0 0.0
  %1982 = vmatprep.subr.mxu0 0.0
  %1983 = vmatpush1.msra.mxu0 0.0
  %1984 = vmatprep.subr.mxu0 0.0
  %1985 = vmatpush1.msra.mxu0 0.0
  %1986 = vmatprep.subr.mxu0 0.0
  %1987 = vmatpush1.msra.mxu0 0.0
  %1988 = vmatprep.subr.mxu0 0.0
  %1989 = vmatpush1.msra.mxu0 0.0
  %1990 = vmatprep.subr.mxu0 0.0
  %1991 = vmatpush1.msra.mxu0 0.0
  %1992 = vmatprep.subr.mxu0 0.0
  %1993 = vmatpush1.msra.mxu0 0.0
  %1994 = vmatprep.subr.mxu0 0.0
  %1995 = vmatpush1.msra.mxu0 0.0
  %1996 = vmatprep.subr.mxu0 0.0
  %1997 = vmatpush1.msra.mxu0 0.0
  %1998 = vmatprep.subr.mxu0 0.0
  %1999 = vmatpush1.msra.mxu0 0.0
  %2000 = vmatprep.subr.mxu0 0.0
  %2001 = vmatpush1.msra.mxu0 0.0
  %2002 = vmatprep.subr.mxu0 0.0
  %2003 = vmatpush1.msra.mxu0 0.0
  %2004 = vmatprep.subr.mxu0 0.0
  %2005 = vmatpush1.msra.mxu0 0.0
  %2006 = vmatprep.mubr.f32.mxu0 0.0
  %2007 = vmatmul.mubr.f32.gmra.mrb[0].mxu0 %v1940
  %v2008 = vpop.f32.mrb[0].mxu0
  %v2009 = vadd.f32 0.0, %v2008
  %v2010 = vpop.f32.mrb[0].mxu0
  %2011 = vdwg.mxu0
  %v2012 = vadd.f32 %v1937, %v2009
  %v2013 = vxor.u32 %v2012, 2147483648
  %v2014 = vmul.f32 %v2013, 1.442695
  %v2015 = vpow.pop %v2014
  %v2016 = vadd.f32 %v2015, 1.0
  %v2017 = vrcp.pop %v2016
  %v2018 = vmul.f32 1.0, %v2017
  %v2019 = vtanh.pop %v2012
  %v2020 = vld [vmem:[#allocation5] sm:$0xff]
  %2022 = vrot.lane.b32.xlu0 %v2020, 32
  %v2023 = vpop.permute.xlu0 %2022
  %v2025 = vmul.f32 %v2018, %v2023
  %2027 = vrot.lane.b32.xlu0 %v2019, 64
  %v2028 = vpop.permute.xlu0 %2027
  %v2030 = vmul.f32 %v2018, %v2028
  %2032 = vrot.lane.b32.xlu0 %v2030, 32
  %v2033 = vpop.permute.xlu0 %2032
  %v2035 = vadd.f32 %v2025, %v2033
  %v2036 = vtanh.pop %v2035
  %2038 = vrot.lane.b32.xlu0 %v2036, 64
  %v2039 = vpop.permute.xlu0 %2038
  %v2041 = vmul.f32 %v2018, %v2039
  %2043 = vrot.lane.b32.xlu0 %v2041, 32
  %v2044 = vpop.permute.xlu0 %2043
  %2046 = vst.msk [vmem:[#allocation4] sm:$0xff] %vm190, %v2044
  %2048 = vrot.lane.b32.xlu0 %v2035, 96
  %v2049 = vpop.permute.xlu0 %2048
  %2051 = vst.msk [vmem:[#allocation5] sm:$0xff] %vm190, %v2049
  %2052 = vst.msk [vmem:[#allocation3 + $0x78] sm:$0xff] %vm190, %v2044
  %v2053 = vld [vmem:[#allocation3] sm:$0xff]
  %v2054 = vld [vmem:[#allocation3 + $0x8] sm:$0xff]
  %v2055 = vld [vmem:[#allocation3 + $0x10] sm:$0xff]
  %v2056 = vld [vmem:[#allocation3 + $0x18] sm:$0xff]
  %v2057 = vld [vmem:[#allocation3 + $0x20] sm:$0xff]
  %v2058 = vld [vmem:[#allocation3 + $0x28] sm:$0xff]
  %v2059 = vld [vmem:[#allocation3 + $0x30] sm:$0xff]
  %v2060 = vld [vmem:[#allocation3 + $0x38] sm:$0xff]
  %v2061 = vld [vmem:[#allocation3 + $0x40] sm:$0xff]
  %v2062 = vld [vmem:[#allocation3 + $0x48] sm:$0xff]
  %v2063 = vld [vmem:[#allocation3 + $0x50] sm:$0xff]
  %v2064 = vld [vmem:[#allocation3 + $0x58] sm:$0xff]
  %v2065 = vld [vmem:[#allocation3 + $0x60] sm:$0xff]
  %v2066 = vld [vmem:[#allocation3 + $0x68] sm:$0xff]
  %v2067 = vld [vmem:[#allocation3 + $0x70] sm:$0xff]
  %v2068 = vld [vmem:[#allocation3 + $0x78] sm:$0xff]
  %v2069 = vld [vmem:[%s4] sm:$0xff]
  %v2070 = vld [vmem:[%s4 + $0x8] sm:$0xff]
  %v2071 = vld [vmem:[%s4 + $0x10] sm:$0xff]
  %v2072 = vld [vmem:[%s4 + $0x18] sm:$0xff]
  %v2073 = vld [vmem:[%s5] sm:$0x1]
  %v2075 = vlaneseq
  %v2076 = vshrl.u32 %v2075, 7
  %v2077 = vsub.s32 0, %v2076
  %v2078 = vrot.slane %v2073, %v2077
  %v2081 = vsel %vm190, %v2053, 0
  %v2084 = vsel %vm190, %v2054, 0
  %v2087 = vsel %vm190, %v2055, 0
  %v2090 = vsel %vm190, %v2056, 0
  %v2093 = vsel %vm190, %v2057, 0
  %v2096 = vsel %vm190, %v2058, 0
  %v2099 = vsel %vm190, %v2059, 0
  %v2102 = vsel %vm190, %v2060, 0
  %v2105 = vsel %vm190, %v2061, 0
  %v2108 = vsel %vm190, %v2062, 0
  %v2111 = vsel %vm190, %v2063, 0
  %v2114 = vsel %vm190, %v2064, 0
  %v2117 = vsel %vm190, %v2065, 0
  %v2120 = vsel %vm190, %v2066, 0
  %v2123 = vsel %vm190, %v2067, 0
  %v2126 = vsel %vm190, %v2068, 0
  %2128 = vmatprep.subr.mxu0 0.0
  %2129 = vmatpush1.msra.mxu0 %v2069
  %2130 = vmatprep.subr.mxu0 0.0
  %2131 = vmatpush1.msra.mxu0 %v2070
  %2132 = vmatprep.subr.mxu0 0.0
  %2133 = vmatpush1.msra.mxu0 %v2071
  %2134 = vmatprep.subr.mxu0 0.0
  %2135 = vmatpush1.msra.mxu0 %v2072
  %2136 = vmatprep.subr.mxu0 0.0
  %2137 = vmatpush1.msra.mxu0 0.0
  %2138 = vmatprep.subr.mxu0 0.0
  %2139 = vmatpush1.msra.mxu0 0.0
  %2140 = vmatprep.subr.mxu0 0.0
  %2141 = vmatpush1.msra.mxu0 0.0
  %2142 = vmatprep.subr.mxu0 0.0
  %2143 = vmatpush1.msra.mxu0 0.0
  %2144 = vmatprep.subr.mxu0 0.0
  %2145 = vmatpush1.msra.mxu0 0.0
  %2146 = vmatprep.subr.mxu0 0.0
  %2147 = vmatpush1.msra.mxu0 0.0
  %2148 = vmatprep.subr.mxu0 0.0
  %2149 = vmatpush1.msra.mxu0 0.0
  %2150 = vmatprep.subr.mxu0 0.0
  %2151 = vmatpush1.msra.mxu0 0.0
  %2152 = vmatprep.subr.mxu0 0.0
  %2153 = vmatpush1.msra.mxu0 0.0
  %2154 = vmatprep.subr.mxu0 0.0
  %2155 = vmatpush1.msra.mxu0 0.0
  %2156 = vmatprep.subr.mxu0 0.0
  %2157 = vmatpush1.msra.mxu0 0.0
  %2158 = vmatprep.subr.mxu0 0.0
  %2159 = vmatpush1.msra.mxu0 0.0
  %2160 = vmatprep.subr.mxu0 0.0
  %2161 = vmatpush1.msra.mxu0 0.0
  %2162 = vmatprep.subr.mxu0 0.0
  %2163 = vmatpush1.msra.mxu0 0.0
  %2164 = vmatprep.subr.mxu0 0.0
  %2165 = vmatpush1.msra.mxu0 0.0
  %2166 = vmatprep.subr.mxu0 0.0
  %2167 = vmatpush1.msra.mxu0 0.0
  %2168 = vmatprep.subr.mxu0 0.0
  %2169 = vmatpush1.msra.mxu0 0.0
  %2170 = vmatprep.subr.mxu0 0.0
  %2171 = vmatpush1.msra.mxu0 0.0
  %2172 = vmatprep.subr.mxu0 0.0
  %2173 = vmatpush1.msra.mxu0 0.0
  %2174 = vmatprep.subr.mxu0 0.0
  %2175 = vmatpush1.msra.mxu0 0.0
  %2176 = vmatprep.subr.mxu0 0.0
  %2177 = vmatpush1.msra.mxu0 0.0
  %2178 = vmatprep.subr.mxu0 0.0
  %2179 = vmatpush1.msra.mxu0 0.0
  %2180 = vmatprep.subr.mxu0 0.0
  %2181 = vmatpush1.msra.mxu0 0.0
  %2182 = vmatprep.subr.mxu0 0.0
  %2183 = vmatpush1.msra.mxu0 0.0
  %2184 = vmatprep.subr.mxu0 0.0
  %2185 = vmatpush1.msra.mxu0 0.0
  %2186 = vmatprep.subr.mxu0 0.0
  %2187 = vmatpush1.msra.mxu0 0.0
  %2188 = vmatprep.subr.mxu0 0.0
  %2189 = vmatpush1.msra.mxu0 0.0
  %2190 = vmatprep.subr.mxu0 0.0
  %2191 = vmatpush1.msra.mxu0 0.0
  %2192 = vmatprep.mubr.f32.mxu0 0.0
  %2193 = vmatmul.mubr.f32.gmra.mrb[0].mxu0 %v2081
  %v2194 = vpop.f32.mrb[0].mxu0
  %v2195 = vadd.f32 %v2078, %v2194
  %v2196 = vpop.f32.mrb[0].mxu0
  %2197 = vmatprep.mubr.f32.mxu0 0.0
  %2198 = vmatmul.mubr.f32.gmra.mrb[0].mxu0 %v2084
  %v2199 = vpop.f32.mrb[0].mxu0
  %v2200 = vadd.f32 %v2078, %v2199
  %v2201 = vpop.f32.mrb[0].mxu0
  %2202 = vmatprep.mubr.f32.mxu0 0.0
  %2203 = vmatmul.mubr.f32.gmra.mrb[0].mxu0 %v2087
  %v2204 = vpop.f32.mrb[0].mxu0
  %v2205 = vadd.f32 %v2078, %v2204
  %v2206 = vpop.f32.mrb[0].mxu0
  %2207 = vmatprep.mubr.f32.mxu0 0.0
  %2208 = vmatmul.mubr.f32.gmra.mrb[0].mxu0 %v2090
  %v2209 = vpop.f32.mrb[0].mxu0
  %v2210 = vadd.f32 %v2078, %v2209
  %v2211 = vpop.f32.mrb[0].mxu0
  %2212 = vmatprep.mubr.f32.mxu0 0.0
  %2213 = vmatmul.mubr.f32.gmra.mrb[0].mxu0 %v2093
  %v2214 = vpop.f32.mrb[0].mxu0
  %v2215 = vadd.f32 %v2078, %v2214
  %v2216 = vpop.f32.mrb[0].mxu0
  %2217 = vmatprep.mubr.f32.mxu0 0.0
  %2218 = vmatmul.mubr.f32.gmra.mrb[0].mxu0 %v2096
  %v2219 = vpop.f32.mrb[0].mxu0
  %v2220 = vadd.f32 %v2078, %v2219
  %v2221 = vpop.f32.mrb[0].mxu0
  %2222 = vmatprep.mubr.f32.mxu0 0.0
  %2223 = vmatmul.mubr.f32.gmra.mrb[0].mxu0 %v2099
  %v2224 = vpop.f32.mrb[0].mxu0
  %v2225 = vadd.f32 %v2078, %v2224
  %v2226 = vpop.f32.mrb[0].mxu0
  %2227 = vmatprep.mubr.f32.mxu0 0.0
  %2228 = vmatmul.mubr.f32.gmra.mrb[0].mxu0 %v2102
  %v2229 = vpop.f32.mrb[0].mxu0
  %v2230 = vadd.f32 %v2078, %v2229
  %v2231 = vpop.f32.mrb[0].mxu0
  %2232 = vmatprep.mubr.f32.mxu0 0.0
  %2233 = vmatmul.mubr.f32.gmra.mrb[0].mxu0 %v2105
  %v2234 = vpop.f32.mrb[0].mxu0
  %v2235 = vadd.f32 %v2078, %v2234
  %v2236 = vpop.f32.mrb[0].mxu0
  %2237 = vmatprep.mubr.f32.mxu0 0.0
  %2238 = vmatmul.mubr.f32.gmra.mrb[0].mxu0 %v2108
  %v2239 = vpop.f32.mrb[0].mxu0
  %v2240 = vadd.f32 %v2078, %v2239
  %v2241 = vpop.f32.mrb[0].mxu0
  %2242 = vmatprep.mubr.f32.mxu0 0.0
  %2243 = vmatmul.mubr.f32.gmra.mrb[0].mxu0 %v2111
  %v2244 = vpop.f32.mrb[0].mxu0
  %v2245 = vadd.f32 %v2078, %v2244
  %v2246 = vpop.f32.mrb[0].mxu0
  %2247 = vmatprep.mubr.f32.mxu0 0.0
  %2248 = vmatmul.mubr.f32.gmra.mrb[0].mxu0 %v2114
  %v2249 = vpop.f32.mrb[0].mxu0
  %v2250 = vadd.f32 %v2078, %v2249
  %v2251 = vpop.f32.mrb[0].mxu0
  %2252 = vmatprep.mubr.f32.mxu0 0.0
  %2253 = vmatmul.mubr.f32.gmra.mrb[0].mxu0 %v2117
  %v2254 = vpop.f32.mrb[0].mxu0
  %v2255 = vadd.f32 %v2078, %v2254
  %v2256 = vpop.f32.mrb[0].mxu0
  %2257 = vmatprep.mubr.f32.mxu0 0.0
  %2258 = vmatmul.mubr.f32.gmra.mrb[0].mxu0 %v2120
  %v2259 = vpop.f32.mrb[0].mxu0
  %v2260 = vadd.f32 %v2078, %v2259
  %v2261 = vpop.f32.mrb[0].mxu0
  %2262 = vmatprep.mubr.f32.mxu0 0.0
  %2263 = vmatmul.mubr.f32.gmra.mrb[0].mxu0 %v2123
  %v2264 = vpop.f32.mrb[0].mxu0
  %v2265 = vadd.f32 %v2078, %v2264
  %v2266 = vpop.f32.mrb[0].mxu0
  %2267 = vmatprep.mubr.f32.mxu0 0.0
  %2268 = vmatmul.mubr.f32.gmra.mrb[0].mxu0 %v2126
  %v2269 = vpop.f32.mrb[0].mxu0
  %v2270 = vadd.f32 %v2078, %v2269
  %v2271 = vpop.f32.mrb[0].mxu0
  %2272 = vdwg.mxu0
  %2273 = vst [vmem:[#allocation2] sm:$0xff] %v2195
  %2274 = vst [vmem:[#allocation2 + $0x8] sm:$0xff] %v2200
  %2275 = vst [vmem:[#allocation2 + $0x10] sm:$0xff] %v2205
  %2276 = vst [vmem:[#allocation2 + $0x18] sm:$0xff] %v2210
  %2277 = vst [vmem:[#allocation2 + $0x20] sm:$0xff] %v2215
  %2278 = vst [vmem:[#allocation2 + $0x28] sm:$0xff] %v2220
  %2279 = vst [vmem:[#allocation2 + $0x30] sm:$0xff] %v2225
  %2280 = vst [vmem:[#allocation2 + $0x38] sm:$0xff] %v2230
  %2281 = vst [vmem:[#allocation2 + $0x40] sm:$0xff] %v2235
  %2282 = vst [vmem:[#allocation2 + $0x48] sm:$0xff] %v2240
  %2283 = vst [vmem:[#allocation2 + $0x50] sm:$0xff] %v2245
  %2284 = vst [vmem:[#allocation2 + $0x58] sm:$0xff] %v2250
  %2285 = vst [vmem:[#allocation2 + $0x60] sm:$0xff] %v2255
  %2286 = vst [vmem:[#allocation2 + $0x68] sm:$0xff] %v2260
  %2287 = vst [vmem:[#allocation2 + $0x70] sm:$0xff] %v2265
  %2288 = vst [vmem:[#allocation2 + $0x78] sm:$0xff] %v2270
  %v2289 = vld [vmem:[%s6] sm:$0xff]
  %v2290 = vld [vmem:[%s6 + $0x8] sm:$0xff]
  %v2291 = vld [vmem:[%s6 + $0x10] sm:$0xff]
  %v2292 = vld [vmem:[%s6 + $0x18] sm:$0xff]
  %v2293 = vld [vmem:[#allocation2] sm:$0xff]
  %v2294 = vld [vmem:[#allocation4] sm:$0xff]
  %v2296 = vsel %vm190, %v2294, 0
  %2298 = vmatprep.subr.mxu0 0.0
  %2299 = vmatpush1.msra.mxu0 %v2289
  %2300 = vmatprep.subr.mxu0 0.0
  %2301 = vmatpush1.msra.mxu0 %v2290
  %2302 = vmatprep.subr.mxu0 0.0
  %2303 = vmatpush1.msra.mxu0 %v2291
  %2304 = vmatprep.subr.mxu0 0.0
  %2305 = vmatpush1.msra.mxu0 %v2292
  %2306 = vmatprep.subr.mxu0 0.0
  %2307 = vmatpush1.msra.mxu0 0.0
  %2308 = vmatprep.subr.mxu0 0.0
  %2309 = vmatpush1.msra.mxu0 0.0
  %2310 = vmatprep.subr.mxu0 0.0
  %2311 = vmatpush1.msra.mxu0 0.0
  %2312 = vmatprep.subr.mxu0 0.0
  %2313 = vmatpush1.msra.mxu0 0.0
  %2314 = vmatprep.subr.mxu0 0.0
  %2315 = vmatpush1.msra.mxu0 0.0
  %2316 = vmatprep.subr.mxu0 0.0
  %2317 = vmatpush1.msra.mxu0 0.0
  %2318 = vmatprep.subr.mxu0 0.0
  %2319 = vmatpush1.msra.mxu0 0.0
  %2320 = vmatprep.subr.mxu0 0.0
  %2321 = vmatpush1.msra.mxu0 0.0
  %2322 = vmatprep.subr.mxu0 0.0
  %2323 = vmatpush1.msra.mxu0 0.0
  %2324 = vmatprep.subr.mxu0 0.0
  %2325 = vmatpush1.msra.mxu0 0.0
  %2326 = vmatprep.subr.mxu0 0.0
  %2327 = vmatpush1.msra.mxu0 0.0
  %2328 = vmatprep.subr.mxu0 0.0
  %2329 = vmatpush1.msra.mxu0 0.0
  %2330 = vmatprep.subr.mxu0 0.0
  %2331 = vmatpush1.msra.mxu0 0.0
  %2332 = vmatprep.subr.mxu0 0.0
  %2333 = vmatpush1.msra.mxu0 0.0
  %2334 = vmatprep.subr.mxu0 0.0
  %2335 = vmatpush1.msra.mxu0 0.0
  %2336 = vmatprep.subr.mxu0 0.0
  %2337 = vmatpush1.msra.mxu0 0.0
  %2338 = vmatprep.subr.mxu0 0.0
  %2339 = vmatpush1.msra.mxu0 0.0
  %2340 = vmatprep.subr.mxu0 0.0
  %2341 = vmatpush1.msra.mxu0 0.0
  %2342 = vmatprep.subr.mxu0 0.0
  %2343 = vmatpush1.msra.mxu0 0.0
  %2344 = vmatprep.subr.mxu0 0.0
  %2345 = vmatpush1.msra.mxu0 0.0
  %2346 = vmatprep.subr.mxu0 0.0
  %2347 = vmatpush1.msra.mxu0 0.0
  %2348 = vmatprep.subr.mxu0 0.0
  %2349 = vmatpush1.msra.mxu0 0.0
  %2350 = vmatprep.subr.mxu0 0.0
  %2351 = vmatpush1.msra.mxu0 0.0
  %2352 = vmatprep.subr.mxu0 0.0
  %2353 = vmatpush1.msra.mxu0 0.0
  %2354 = vmatprep.subr.mxu0 0.0
  %2355 = vmatpush1.msra.mxu0 0.0
  %2356 = vmatprep.subr.mxu0 0.0
  %2357 = vmatpush1.msra.mxu0 0.0
  %2358 = vmatprep.subr.mxu0 0.0
  %2359 = vmatpush1.msra.mxu0 0.0
  %2360 = vmatprep.subr.mxu0 0.0
  %2361 = vmatpush1.msra.mxu0 0.0
  %2362 = vmatprep.mubr.f32.mxu0 0.0
  %2363 = vmatmul.mubr.f32.gmra.mrb[0].mxu0 %v2296
  %v2364 = vpop.f32.mrb[0].mxu0
  %v2365 = vadd.f32 0.0, %v2364
  %v2366 = vpop.f32.mrb[0].mxu0
  %2367 = vdwg.mxu0
  %v2368 = vadd.f32 %v2293, %v2365
  %v2369 = vxor.u32 %v2368, 2147483648
  %v2370 = vmul.f32 %v2369, 1.442695
  %v2371 = vpow.pop %v2370
  %v2372 = vadd.f32 %v2371, 1.0
  %v2373 = vrcp.pop %v2372
  %v2374 = vmul.f32 1.0, %v2373
  %v2375 = vtanh.pop %v2368
  %v2376 = vld [vmem:[#allocation5] sm:$0xff]
  %2378 = vrot.lane.b32.xlu0 %v2376, 32
  %v2379 = vpop.permute.xlu0 %2378
  %v2381 = vmul.f32 %v2374, %v2379
  %2383 = vrot.lane.b32.xlu0 %v2375, 64
  %v2384 = vpop.permute.xlu0 %2383
  %v2386 = vmul.f32 %v2374, %v2384
  %2388 = vrot.lane.b32.xlu0 %v2386, 32
  %v2389 = vpop.permute.xlu0 %2388
  %v2391 = vadd.f32 %v2381, %v2389
  %v2392 = vtanh.pop %v2391
  %2394 = vrot.lane.b32.xlu0 %v2392, 64
  %v2395 = vpop.permute.xlu0 %2394
  %v2397 = vmul.f32 %v2374, %v2395
  %2399 = vrot.lane.b32.xlu0 %v2397, 32
  %v2400 = vpop.permute.xlu0 %2399
  %2402 = vst.msk [vmem:[#allocation4] sm:$0xff] %vm190, %v2400
  %2404 = vrot.lane.b32.xlu0 %v2391, 96
  %v2405 = vpop.permute.xlu0 %2404
  %2407 = vst.msk [vmem:[#allocation5] sm:$0xff] %vm190, %v2405
  %v2408 = vld [vmem:[#allocation2 + $0x8] sm:$0xff]
  %v2409 = vld [vmem:[#allocation4] sm:$0xff]
  %v2411 = vsel %vm190, %v2409, 0
  %2413 = vmatprep.subr.mxu0 0.0
  %2414 = vmatpush1.msra.mxu0 %v2289
  %2415 = vmatprep.subr.mxu0 0.0
  %2416 = vmatpush1.msra.mxu0 %v2290
  %2417 = vmatprep.subr.mxu0 0.0
  %2418 = vmatpush1.msra.mxu0 %v2291
  %2419 = vmatprep.subr.mxu0 0.0
  %2420 = vmatpush1.msra.mxu0 %v2292
  %2421 = vmatprep.subr.mxu0 0.0
  %2422 = vmatpush1.msra.mxu0 0.0
  %2423 = vmatprep.subr.mxu0 0.0
  %2424 = vmatpush1.msra.mxu0 0.0
  %2425 = vmatprep.subr.mxu0 0.0
  %2426 = vmatpush1.msra.mxu0 0.0
  %2427 = vmatprep.subr.mxu0 0.0
  %2428 = vmatpush1.msra.mxu0 0.0
  %2429 = vmatprep.subr.mxu0 0.0
  %2430 = vmatpush1.msra.mxu0 0.0
  %2431 = vmatprep.subr.mxu0 0.0
  %2432 = vmatpush1.msra.mxu0 0.0
  %2433 = vmatprep.subr.mxu0 0.0
  %2434 = vmatpush1.msra.mxu0 0.0
  %2435 = vmatprep.subr.mxu0 0.0
  %2436 = vmatpush1.msra.mxu0 0.0
  %2437 = vmatprep.subr.mxu0 0.0
  %2438 = vmatpush1.msra.mxu0 0.0
  %2439 = vmatprep.subr.mxu0 0.0
  %2440 = vmatpush1.msra.mxu0 0.0
  %2441 = vmatprep.subr.mxu0 0.0
  %2442 = vmatpush1.msra.mxu0 0.0
  %2443 = vmatprep.subr.mxu0 0.0
  %2444 = vmatpush1.msra.mxu0 0.0
  %2445 = vmatprep.subr.mxu0 0.0
  %2446 = vmatpush1.msra.mxu0 0.0
  %2447 = vmatprep.subr.mxu0 0.0
  %2448 = vmatpush1.msra.mxu0 0.0
  %2449 = vmatprep.subr.mxu0 0.0
  %2450 = vmatpush1.msra.mxu0 0.0
  %2451 = vmatprep.subr.mxu0 0.0
  %2452 = vmatpush1.msra.mxu0 0.0
  %2453 = vmatprep.subr.mxu0 0.0
  %2454 = vmatpush1.msra.mxu0 0.0
  %2455 = vmatprep.subr.mxu0 0.0
  %2456 = vmatpush1.msra.mxu0 0.0
  %2457 = vmatprep.subr.mxu0 0.0
  %2458 = vmatpush1.msra.mxu0 0.0
  %2459 = vmatprep.subr.mxu0 0.0
  %2460 = vmatpush1.msra.mxu0 0.0
  %2461 = vmatprep.subr.mxu0 0.0
  %2462 = vmatpush1.msra.mxu0 0.0
  %2463 = vmatprep.subr.mxu0 0.0
  %2464 = vmatpush1.msra.mxu0 0.0
  %2465 = vmatprep.subr.mxu0 0.0
  %2466 = vmatpush1.msra.mxu0 0.0
  %2467 = vmatprep.subr.mxu0 0.0
  %2468 = vmatpush1.msra.mxu0 0.0
  %2469 = vmatprep.subr.mxu0 0.0
  %2470 = vmatpush1.msra.mxu0 0.0
  %2471 = vmatprep.subr.mxu0 0.0
  %2472 = vmatpush1.msra.mxu0 0.0
  %2473 = vmatprep.subr.mxu0 0.0
  %2474 = vmatpush1.msra.mxu0 0.0
  %2475 = vmatprep.subr.mxu0 0.0
  %2476 = vmatpush1.msra.mxu0 0.0
  %2477 = vmatprep.mubr.f32.mxu0 0.0
  %2478 = vmatmul.mubr.f32.gmra.mrb[0].mxu0 %v2411
  %v2479 = vpop.f32.mrb[0].mxu0
  %v2480 = vadd.f32 0.0, %v2479
  %v2481 = vpop.f32.mrb[0].mxu0
  %2482 = vdwg.mxu0
  %v2483 = vadd.f32 %v2408, %v2480
  %v2484 = vxor.u32 %v2483, 2147483648
  %v2485 = vmul.f32 %v2484, 1.442695
  %v2486 = vpow.pop %v2485
  %v2487 = vadd.f32 %v2486, 1.0
  %v2488 = vrcp.pop %v2487
  %v2489 = vmul.f32 1.0, %v2488
  %v2490 = vtanh.pop %v2483
  %v2491 = vld [vmem:[#allocation5] sm:$0xff]
  %2493 = vrot.lane.b32.xlu0 %v2491, 32
  %v2494 = vpop.permute.xlu0 %2493
  %v2496 = vmul.f32 %v2489, %v2494
  %2498 = vrot.lane.b32.xlu0 %v2490, 64
  %v2499 = vpop.permute.xlu0 %2498
  %v2501 = vmul.f32 %v2489, %v2499
  %2503 = vrot.lane.b32.xlu0 %v2501, 32
  %v2504 = vpop.permute.xlu0 %2503
  %v2506 = vadd.f32 %v2496, %v2504
  %v2507 = vtanh.pop %v2506
  %2509 = vrot.lane.b32.xlu0 %v2507, 64
  %v2510 = vpop.permute.xlu0 %2509
  %v2512 = vmul.f32 %v2489, %v2510
  %2514 = vrot.lane.b32.xlu0 %v2512, 32
  %v2515 = vpop.permute.xlu0 %2514
  %2517 = vst.msk [vmem:[#allocation4] sm:$0xff] %vm190, %v2515
  %2519 = vrot.lane.b32.xlu0 %v2506, 96
  %v2520 = vpop.permute.xlu0 %2519
  %2522 = vst.msk [vmem:[#allocation5] sm:$0xff] %vm190, %v2520
  %v2523 = vld [vmem:[#allocation2 + $0x10] sm:$0xff]
  %v2524 = vld [vmem:[#allocation4] sm:$0xff]
  %v2526 = vsel %vm190, %v2524, 0
  %2528 = vmatprep.subr.mxu0 0.0
  %2529 = vmatpush1.msra.mxu0 %v2289
  %2530 = vmatprep.subr.mxu0 0.0
  %2531 = vmatpush1.msra.mxu0 %v2290
  %2532 = vmatprep.subr.mxu0 0.0
  %2533 = vmatpush1.msra.mxu0 %v2291
  %2534 = vmatprep.subr.mxu0 0.0
  %2535 = vmatpush1.msra.mxu0 %v2292
  %2536 = vmatprep.subr.mxu0 0.0
  %2537 = vmatpush1.msra.mxu0 0.0
  %2538 = vmatprep.subr.mxu0 0.0
  %2539 = vmatpush1.msra.mxu0 0.0
  %2540 = vmatprep.subr.mxu0 0.0
  %2541 = vmatpush1.msra.mxu0 0.0
  %2542 = vmatprep.subr.mxu0 0.0
  %2543 = vmatpush1.msra.mxu0 0.0
  %2544 = vmatprep.subr.mxu0 0.0
  %2545 = vmatpush1.msra.mxu0 0.0
  %2546 = vmatprep.subr.mxu0 0.0
  %2547 = vmatpush1.msra.mxu0 0.0
  %2548 = vmatprep.subr.mxu0 0.0
  %2549 = vmatpush1.msra.mxu0 0.0
  %2550 = vmatprep.subr.mxu0 0.0
  %2551 = vmatpush1.msra.mxu0 0.0
  %2552 = vmatprep.subr.mxu0 0.0
  %2553 = vmatpush1.msra.mxu0 0.0
  %2554 = vmatprep.subr.mxu0 0.0
  %2555 = vmatpush1.msra.mxu0 0.0
  %2556 = vmatprep.subr.mxu0 0.0
  %2557 = vmatpush1.msra.mxu0 0.0
  %2558 = vmatprep.subr.mxu0 0.0
  %2559 = vmatpush1.msra.mxu0 0.0
  %2560 = vmatprep.subr.mxu0 0.0
  %2561 = vmatpush1.msra.mxu0 0.0
  %2562 = vmatprep.subr.mxu0 0.0
  %2563 = vmatpush1.msra.mxu0 0.0
  %2564 = vmatprep.subr.mxu0 0.0
  %2565 = vmatpush1.msra.mxu0 0.0
  %2566 = vmatprep.subr.mxu0 0.0
  %2567 = vmatpush1.msra.mxu0 0.0
  %2568 = vmatprep.subr.mxu0 0.0
  %2569 = vmatpush1.msra.mxu0 0.0
  %2570 = vmatprep.subr.mxu0 0.0
  %2571 = vmatpush1.msra.mxu0 0.0
  %2572 = vmatprep.subr.mxu0 0.0
  %2573 = vmatpush1.msra.mxu0 0.0
  %2574 = vmatprep.subr.mxu0 0.0
  %2575 = vmatpush1.msra.mxu0 0.0
  %2576 = vmatprep.subr.mxu0 0.0
  %2577 = vmatpush1.msra.mxu0 0.0
  %2578 = vmatprep.subr.mxu0 0.0
  %2579 = vmatpush1.msra.mxu0 0.0
  %2580 = vmatprep.subr.mxu0 0.0
  %2581 = vmatpush1.msra.mxu0 0.0
  %2582 = vmatprep.subr.mxu0 0.0
  %2583 = vmatpush1.msra.mxu0 0.0
  %2584 = vmatprep.subr.mxu0 0.0
  %2585 = vmatpush1.msra.mxu0 0.0
  %2586 = vmatprep.subr.mxu0 0.0
  %2587 = vmatpush1.msra.mxu0 0.0
  %2588 = vmatprep.subr.mxu0 0.0
  %2589 = vmatpush1.msra.mxu0 0.0
  %2590 = vmatprep.subr.mxu0 0.0
  %2591 = vmatpush1.msra.mxu0 0.0
  %2592 = vmatprep.mubr.f32.mxu0 0.0
  %2593 = vmatmul.mubr.f32.gmra.mrb[0].mxu0 %v2526
  %v2594 = vpop.f32.mrb[0].mxu0
  %v2595 = vadd.f32 0.0, %v2594
  %v2596 = vpop.f32.mrb[0].mxu0
  %2597 = vdwg.mxu0
  %v2598 = vadd.f32 %v2523, %v2595
  %v2599 = vxor.u32 %v2598, 2147483648
  %v2600 = vmul.f32 %v2599, 1.442695
  %v2601 = vpow.pop %v2600
  %v2602 = vadd.f32 %v2601, 1.0
  %v2603 = vrcp.pop %v2602
  %v2604 = vmul.f32 1.0, %v2603
  %v2605 = vtanh.pop %v2598
  %v2606 = vld [vmem:[#allocation5] sm:$0xff]
  %2608 = vrot.lane.b32.xlu0 %v2606, 32
  %v2609 = vpop.permute.xlu0 %2608
  %v2611 = vmul.f32 %v2604, %v2609
  %2613 = vrot.lane.b32.xlu0 %v2605, 64
  %v2614 = vpop.permute.xlu0 %2613
  %v2616 = vmul.f32 %v2604, %v2614
  %2618 = vrot.lane.b32.xlu0 %v2616, 32
  %v2619 = vpop.permute.xlu0 %2618
  %v2621 = vadd.f32 %v2611, %v2619
  %v2622 = vtanh.pop %v2621
  %2624 = vrot.lane.b32.xlu0 %v2622, 64
  %v2625 = vpop.permute.xlu0 %2624
  %v2627 = vmul.f32 %v2604, %v2625
  %2629 = vrot.lane.b32.xlu0 %v2627, 32
  %v2630 = vpop.permute.xlu0 %2629
  %2632 = vst.msk [vmem:[#allocation4] sm:$0xff] %vm190, %v2630
  %2634 = vrot.lane.b32.xlu0 %v2621, 96
  %v2635 = vpop.permute.xlu0 %2634
  %2637 = vst.msk [vmem:[#allocation5] sm:$0xff] %vm190, %v2635
  %v2638 = vld [vmem:[#allocation2 + $0x18] sm:$0xff]
  %v2639 = vld [vmem:[#allocation4] sm:$0xff]
  %v2641 = vsel %vm190, %v2639, 0
  %2643 = vmatprep.subr.mxu0 0.0
  %2644 = vmatpush1.msra.mxu0 %v2289
  %2645 = vmatprep.subr.mxu0 0.0
  %2646 = vmatpush1.msra.mxu0 %v2290
  %2647 = vmatprep.subr.mxu0 0.0
  %2648 = vmatpush1.msra.mxu0 %v2291
  %2649 = vmatprep.subr.mxu0 0.0
  %2650 = vmatpush1.msra.mxu0 %v2292
  %2651 = vmatprep.subr.mxu0 0.0
  %2652 = vmatpush1.msra.mxu0 0.0
  %2653 = vmatprep.subr.mxu0 0.0
  %2654 = vmatpush1.msra.mxu0 0.0
  %2655 = vmatprep.subr.mxu0 0.0
  %2656 = vmatpush1.msra.mxu0 0.0
  %2657 = vmatprep.subr.mxu0 0.0
  %2658 = vmatpush1.msra.mxu0 0.0
  %2659 = vmatprep.subr.mxu0 0.0
  %2660 = vmatpush1.msra.mxu0 0.0
  %2661 = vmatprep.subr.mxu0 0.0
  %2662 = vmatpush1.msra.mxu0 0.0
  %2663 = vmatprep.subr.mxu0 0.0
  %2664 = vmatpush1.msra.mxu0 0.0
  %2665 = vmatprep.subr.mxu0 0.0
  %2666 = vmatpush1.msra.mxu0 0.0
  %2667 = vmatprep.subr.mxu0 0.0
  %2668 = vmatpush1.msra.mxu0 0.0
  %2669 = vmatprep.subr.mxu0 0.0
  %2670 = vmatpush1.msra.mxu0 0.0
  %2671 = vmatprep.subr.mxu0 0.0
  %2672 = vmatpush1.msra.mxu0 0.0
  %2673 = vmatprep.subr.mxu0 0.0
  %2674 = vmatpush1.msra.mxu0 0.0
  %2675 = vmatprep.subr.mxu0 0.0
  %2676 = vmatpush1.msra.mxu0 0.0
  %2677 = vmatprep.subr.mxu0 0.0
  %2678 = vmatpush1.msra.mxu0 0.0
  %2679 = vmatprep.subr.mxu0 0.0
  %2680 = vmatpush1.msra.mxu0 0.0
  %2681 = vmatprep.subr.mxu0 0.0
  %2682 = vmatpush1.msra.mxu0 0.0
  %2683 = vmatprep.subr.mxu0 0.0
  %2684 = vmatpush1.msra.mxu0 0.0
  %2685 = vmatprep.subr.mxu0 0.0
  %2686 = vmatpush1.msra.mxu0 0.0
  %2687 = vmatprep.subr.mxu0 0.0
  %2688 = vmatpush1.msra.mxu0 0.0
  %2689 = vmatprep.subr.mxu0 0.0
  %2690 = vmatpush1.msra.mxu0 0.0
  %2691 = vmatprep.subr.mxu0 0.0
  %2692 = vmatpush1.msra.mxu0 0.0
  %2693 = vmatprep.subr.mxu0 0.0
  %2694 = vmatpush1.msra.mxu0 0.0
  %2695 = vmatprep.subr.mxu0 0.0
  %2696 = vmatpush1.msra.mxu0 0.0
  %2697 = vmatprep.subr.mxu0 0.0
  %2698 = vmatpush1.msra.mxu0 0.0
  %2699 = vmatprep.subr.mxu0 0.0
  %2700 = vmatpush1.msra.mxu0 0.0
  %2701 = vmatprep.subr.mxu0 0.0
  %2702 = vmatpush1.msra.mxu0 0.0
  %2703 = vmatprep.subr.mxu0 0.0
  %2704 = vmatpush1.msra.mxu0 0.0
  %2705 = vmatprep.subr.mxu0 0.0
  %2706 = vmatpush1.msra.mxu0 0.0
  %2707 = vmatprep.mubr.f32.mxu0 0.0
  %2708 = vmatmul.mubr.f32.gmra.mrb[0].mxu0 %v2641
  %v2709 = vpop.f32.mrb[0].mxu0
  %v2710 = vadd.f32 0.0, %v2709
  %v2711 = vpop.f32.mrb[0].mxu0
  %2712 = vdwg.mxu0
  %v2713 = vadd.f32 %v2638, %v2710
  %v2714 = vxor.u32 %v2713, 2147483648
  %v2715 = vmul.f32 %v2714, 1.442695
  %v2716 = vpow.pop %v2715
  %v2717 = vadd.f32 %v2716, 1.0
  %v2718 = vrcp.pop %v2717
  %v2719 = vmul.f32 1.0, %v2718
  %v2720 = vtanh.pop %v2713
  %v2721 = vld [vmem:[#allocation5] sm:$0xff]
  %2723 = vrot.lane.b32.xlu0 %v2721, 32
  %v2724 = vpop.permute.xlu0 %2723
  %v2726 = vmul.f32 %v2719, %v2724
  %2728 = vrot.lane.b32.xlu0 %v2720, 64
  %v2729 = vpop.permute.xlu0 %2728
  %v2731 = vmul.f32 %v2719, %v2729
  %2733 = vrot.lane.b32.xlu0 %v2731, 32
  %v2734 = vpop.permute.xlu0 %2733
  %v2736 = vadd.f32 %v2726, %v2734
  %v2737 = vtanh.pop %v2736
  %2739 = vrot.lane.b32.xlu0 %v2737, 64
  %v2740 = vpop.permute.xlu0 %2739
  %v2742 = vmul.f32 %v2719, %v2740
  %2744 = vrot.lane.b32.xlu0 %v2742, 32
  %v2745 = vpop.permute.xlu0 %2744
  %2747 = vst.msk [vmem:[#allocation4] sm:$0xff] %vm190, %v2745
  %2749 = vrot.lane.b32.xlu0 %v2736, 96
  %v2750 = vpop.permute.xlu0 %2749
  %2752 = vst.msk [vmem:[#allocation5] sm:$0xff] %vm190, %v2750
  %v2753 = vld [vmem:[#allocation2 + $0x20] sm:$0xff]
  %v2754 = vld [vmem:[#allocation4] sm:$0xff]
  %v2756 = vsel %vm190, %v2754, 0
  %2758 = vmatprep.subr.mxu0 0.0
  %2759 = vmatpush1.msra.mxu0 %v2289
  %2760 = vmatprep.subr.mxu0 0.0
  %2761 = vmatpush1.msra.mxu0 %v2290
  %2762 = vmatprep.subr.mxu0 0.0
  %2763 = vmatpush1.msra.mxu0 %v2291
  %2764 = vmatprep.subr.mxu0 0.0
  %2765 = vmatpush1.msra.mxu0 %v2292
  %2766 = vmatprep.subr.mxu0 0.0
  %2767 = vmatpush1.msra.mxu0 0.0
  %2768 = vmatprep.subr.mxu0 0.0
  %2769 = vmatpush1.msra.mxu0 0.0
  %2770 = vmatprep.subr.mxu0 0.0
  %2771 = vmatpush1.msra.mxu0 0.0
  %2772 = vmatprep.subr.mxu0 0.0
  %2773 = vmatpush1.msra.mxu0 0.0
  %2774 = vmatprep.subr.mxu0 0.0
  %2775 = vmatpush1.msra.mxu0 0.0
  %2776 = vmatprep.subr.mxu0 0.0
  %2777 = vmatpush1.msra.mxu0 0.0
  %2778 = vmatprep.subr.mxu0 0.0
  %2779 = vmatpush1.msra.mxu0 0.0
  %2780 = vmatprep.subr.mxu0 0.0
  %2781 = vmatpush1.msra.mxu0 0.0
  %2782 = vmatprep.subr.mxu0 0.0
  %2783 = vmatpush1.msra.mxu0 0.0
  %2784 = vmatprep.subr.mxu0 0.0
  %2785 = vmatpush1.msra.mxu0 0.0
  %2786 = vmatprep.subr.mxu0 0.0
  %2787 = vmatpush1.msra.mxu0 0.0
  %2788 = vmatprep.subr.mxu0 0.0
  %2789 = vmatpush1.msra.mxu0 0.0
  %2790 = vmatprep.subr.mxu0 0.0
  %2791 = vmatpush1.msra.mxu0 0.0
  %2792 = vmatprep.subr.mxu0 0.0
  %2793 = vmatpush1.msra.mxu0 0.0
  %2794 = vmatprep.subr.mxu0 0.0
  %2795 = vmatpush1.msra.mxu0 0.0
  %2796 = vmatprep.subr.mxu0 0.0
  %2797 = vmatpush1.msra.mxu0 0.0
  %2798 = vmatprep.subr.mxu0 0.0
  %2799 = vmatpush1.msra.mxu0 0.0
  %2800 = vmatprep.subr.mxu0 0.0
  %2801 = vmatpush1.msra.mxu0 0.0
  %2802 = vmatprep.subr.mxu0 0.0
  %2803 = vmatpush1.msra.mxu0 0.0
  %2804 = vmatprep.subr.mxu0 0.0
  %2805 = vmatpush1.msra.mxu0 0.0
  %2806 = vmatprep.subr.mxu0 0.0
  %2807 = vmatpush1.msra.mxu0 0.0
  %2808 = vmatprep.subr.mxu0 0.0
  %2809 = vmatpush1.msra.mxu0 0.0
  %2810 = vmatprep.subr.mxu0 0.0
  %2811 = vmatpush1.msra.mxu0 0.0
  %2812 = vmatprep.subr.mxu0 0.0
  %2813 = vmatpush1.msra.mxu0 0.0
  %2814 = vmatprep.subr.mxu0 0.0
  %2815 = vmatpush1.msra.mxu0 0.0
  %2816 = vmatprep.subr.mxu0 0.0
  %2817 = vmatpush1.msra.mxu0 0.0
  %2818 = vmatprep.subr.mxu0 0.0
  %2819 = vmatpush1.msra.mxu0 0.0
  %2820 = vmatprep.subr.mxu0 0.0
  %2821 = vmatpush1.msra.mxu0 0.0
  %2822 = vmatprep.mubr.f32.mxu0 0.0
  %2823 = vmatmul.mubr.f32.gmra.mrb[0].mxu0 %v2756
  %v2824 = vpop.f32.mrb[0].mxu0
  %v2825 = vadd.f32 0.0, %v2824
  %v2826 = vpop.f32.mrb[0].mxu0
  %2827 = vdwg.mxu0
  %v2828 = vadd.f32 %v2753, %v2825
  %v2829 = vxor.u32 %v2828, 2147483648
  %v2830 = vmul.f32 %v2829, 1.442695
  %v2831 = vpow.pop %v2830
  %v2832 = vadd.f32 %v2831, 1.0
  %v2833 = vrcp.pop %v2832
  %v2834 = vmul.f32 1.0, %v2833
  %v2835 = vtanh.pop %v2828
  %v2836 = vld [vmem:[#allocation5] sm:$0xff]
  %2838 = vrot.lane.b32.xlu0 %v2836, 32
  %v2839 = vpop.permute.xlu0 %2838
  %v2841 = vmul.f32 %v2834, %v2839
  %2843 = vrot.lane.b32.xlu0 %v2835, 64
  %v2844 = vpop.permute.xlu0 %2843
  %v2846 = vmul.f32 %v2834, %v2844
  %2848 = vrot.lane.b32.xlu0 %v2846, 32
  %v2849 = vpop.permute.xlu0 %2848
  %v2851 = vadd.f32 %v2841, %v2849
  %v2852 = vtanh.pop %v2851
  %2854 = vrot.lane.b32.xlu0 %v2852, 64
  %v2855 = vpop.permute.xlu0 %2854
  %v2857 = vmul.f32 %v2834, %v2855
  %2859 = vrot.lane.b32.xlu0 %v2857, 32
  %v2860 = vpop.permute.xlu0 %2859
  %2862 = vst.msk [vmem:[#allocation4] sm:$0xff] %vm190, %v2860
  %2864 = vrot.lane.b32.xlu0 %v2851, 96
  %v2865 = vpop.permute.xlu0 %2864
  %2867 = vst.msk [vmem:[#allocation5] sm:$0xff] %vm190, %v2865
  %v2868 = vld [vmem:[#allocation2 + $0x28] sm:$0xff]
  %v2869 = vld [vmem:[#allocation4] sm:$0xff]
  %v2871 = vsel %vm190, %v2869, 0
  %2873 = vmatprep.subr.mxu0 0.0
  %2874 = vmatpush1.msra.mxu0 %v2289
  %2875 = vmatprep.subr.mxu0 0.0
  %2876 = vmatpush1.msra.mxu0 %v2290
  %2877 = vmatprep.subr.mxu0 0.0
  %2878 = vmatpush1.msra.mxu0 %v2291
  %2879 = vmatprep.subr.mxu0 0.0
  %2880 = vmatpush1.msra.mxu0 %v2292
  %2881 = vmatprep.subr.mxu0 0.0
  %2882 = vmatpush1.msra.mxu0 0.0
  %2883 = vmatprep.subr.mxu0 0.0
  %2884 = vmatpush1.msra.mxu0 0.0
  %2885 = vmatprep.subr.mxu0 0.0
  %2886 = vmatpush1.msra.mxu0 0.0
  %2887 = vmatprep.subr.mxu0 0.0
  %2888 = vmatpush1.msra.mxu0 0.0
  %2889 = vmatprep.subr.mxu0 0.0
  %2890 = vmatpush1.msra.mxu0 0.0
  %2891 = vmatprep.subr.mxu0 0.0
  %2892 = vmatpush1.msra.mxu0 0.0
  %2893 = vmatprep.subr.mxu0 0.0
  %2894 = vmatpush1.msra.mxu0 0.0
  %2895 = vmatprep.subr.mxu0 0.0
  %2896 = vmatpush1.msra.mxu0 0.0
  %2897 = vmatprep.subr.mxu0 0.0
  %2898 = vmatpush1.msra.mxu0 0.0
  %2899 = vmatprep.subr.mxu0 0.0
  %2900 = vmatpush1.msra.mxu0 0.0
  %2901 = vmatprep.subr.mxu0 0.0
  %2902 = vmatpush1.msra.mxu0 0.0
  %2903 = vmatprep.subr.mxu0 0.0
  %2904 = vmatpush1.msra.mxu0 0.0
  %2905 = vmatprep.subr.mxu0 0.0
  %2906 = vmatpush1.msra.mxu0 0.0
  %2907 = vmatprep.subr.mxu0 0.0
  %2908 = vmatpush1.msra.mxu0 0.0
  %2909 = vmatprep.subr.mxu0 0.0
  %2910 = vmatpush1.msra.mxu0 0.0
  %2911 = vmatprep.subr.mxu0 0.0
  %2912 = vmatpush1.msra.mxu0 0.0
  %2913 = vmatprep.subr.mxu0 0.0
  %2914 = vmatpush1.msra.mxu0 0.0
  %2915 = vmatprep.subr.mxu0 0.0
  %2916 = vmatpush1.msra.mxu0 0.0
  %2917 = vmatprep.subr.mxu0 0.0
  %2918 = vmatpush1.msra.mxu0 0.0
  %2919 = vmatprep.subr.mxu0 0.0
  %2920 = vmatpush1.msra.mxu0 0.0
  %2921 = vmatprep.subr.mxu0 0.0
  %2922 = vmatpush1.msra.mxu0 0.0
  %2923 = vmatprep.subr.mxu0 0.0
  %2924 = vmatpush1.msra.mxu0 0.0
  %2925 = vmatprep.subr.mxu0 0.0
  %2926 = vmatpush1.msra.mxu0 0.0
  %2927 = vmatprep.subr.mxu0 0.0
  %2928 = vmatpush1.msra.mxu0 0.0
  %2929 = vmatprep.subr.mxu0 0.0
  %2930 = vmatpush1.msra.mxu0 0.0
  %2931 = vmatprep.subr.mxu0 0.0
  %2932 = vmatpush1.msra.mxu0 0.0
  %2933 = vmatprep.subr.mxu0 0.0
  %2934 = vmatpush1.msra.mxu0 0.0
  %2935 = vmatprep.subr.mxu0 0.0
  %2936 = vmatpush1.msra.mxu0 0.0
  %2937 = vmatprep.mubr.f32.mxu0 0.0
  %2938 = vmatmul.mubr.f32.gmra.mrb[0].mxu0 %v2871
  %v2939 = vpop.f32.mrb[0].mxu0
  %v2940 = vadd.f32 0.0, %v2939
  %v2941 = vpop.f32.mrb[0].mxu0
  %2942 = vdwg.mxu0
  %v2943 = vadd.f32 %v2868, %v2940
  %v2944 = vxor.u32 %v2943, 2147483648
  %v2945 = vmul.f32 %v2944, 1.442695
  %v2946 = vpow.pop %v2945
  %v2947 = vadd.f32 %v2946, 1.0
  %v2948 = vrcp.pop %v2947
  %v2949 = vmul.f32 1.0, %v2948
  %v2950 = vtanh.pop %v2943
  %v2951 = vld [vmem:[#allocation5] sm:$0xff]
  %2953 = vrot.lane.b32.xlu0 %v2951, 32
  %v2954 = vpop.permute.xlu0 %2953
  %v2956 = vmul.f32 %v2949, %v2954
  %2958 = vrot.lane.b32.xlu0 %v2950, 64
  %v2959 = vpop.permute.xlu0 %2958
  %v2961 = vmul.f32 %v2949, %v2959
  %2963 = vrot.lane.b32.xlu0 %v2961, 32
  %v2964 = vpop.permute.xlu0 %2963
  %v2966 = vadd.f32 %v2956, %v2964
  %v2967 = vtanh.pop %v2966
  %2969 = vrot.lane.b32.xlu0 %v2967, 64
  %v2970 = vpop.permute.xlu0 %2969
  %v2972 = vmul.f32 %v2949, %v2970
  %2974 = vrot.lane.b32.xlu0 %v2972, 32
  %v2975 = vpop.permute.xlu0 %2974
  %2977 = vst.msk [vmem:[#allocation4] sm:$0xff] %vm190, %v2975
  %2979 = vrot.lane.b32.xlu0 %v2966, 96
  %v2980 = vpop.permute.xlu0 %2979
  %2982 = vst.msk [vmem:[#allocation5] sm:$0xff] %vm190, %v2980
  %v2983 = vld [vmem:[#allocation2 + $0x30] sm:$0xff]
  %v2984 = vld [vmem:[#allocation4] sm:$0xff]
  %v2986 = vsel %vm190, %v2984, 0
  %2988 = vmatprep.subr.mxu0 0.0
  %2989 = vmatpush1.msra.mxu0 %v2289
  %2990 = vmatprep.subr.mxu0 0.0
  %2991 = vmatpush1.msra.mxu0 %v2290
  %2992 = vmatprep.subr.mxu0 0.0
  %2993 = vmatpush1.msra.mxu0 %v2291
  %2994 = vmatprep.subr.mxu0 0.0
  %2995 = vmatpush1.msra.mxu0 %v2292
  %2996 = vmatprep.subr.mxu0 0.0
  %2997 = vmatpush1.msra.mxu0 0.0
  %2998 = vmatprep.subr.mxu0 0.0
  %2999 = vmatpush1.msra.mxu0 0.0
  %3000 = vmatprep.subr.mxu0 0.0
  %3001 = vmatpush1.msra.mxu0 0.0
  %3002 = vmatprep.subr.mxu0 0.0
  %3003 = vmatpush1.msra.mxu0 0.0
  %3004 = vmatprep.subr.mxu0 0.0
  %3005 = vmatpush1.msra.mxu0 0.0
  %3006 = vmatprep.subr.mxu0 0.0
  %3007 = vmatpush1.msra.mxu0 0.0
  %3008 = vmatprep.subr.mxu0 0.0
  %3009 = vmatpush1.msra.mxu0 0.0
  %3010 = vmatprep.subr.mxu0 0.0
  %3011 = vmatpush1.msra.mxu0 0.0
  %3012 = vmatprep.subr.mxu0 0.0
  %3013 = vmatpush1.msra.mxu0 0.0
  %3014 = vmatprep.subr.mxu0 0.0
  %3015 = vmatpush1.msra.mxu0 0.0
  %3016 = vmatprep.subr.mxu0 0.0
  %3017 = vmatpush1.msra.mxu0 0.0
  %3018 = vmatprep.subr.mxu0 0.0
  %3019 = vmatpush1.msra.mxu0 0.0
  %3020 = vmatprep.subr.mxu0 0.0
  %3021 = vmatpush1.msra.mxu0 0.0
  %3022 = vmatprep.subr.mxu0 0.0
  %3023 = vmatpush1.msra.mxu0 0.0
  %3024 = vmatprep.subr.mxu0 0.0
  %3025 = vmatpush1.msra.mxu0 0.0
  %3026 = vmatprep.subr.mxu0 0.0
  %3027 = vmatpush1.msra.mxu0 0.0
  %3028 = vmatprep.subr.mxu0 0.0
  %3029 = vmatpush1.msra.mxu0 0.0
  %3030 = vmatprep.subr.mxu0 0.0
  %3031 = vmatpush1.msra.mxu0 0.0
  %3032 = vmatprep.subr.mxu0 0.0
  %3033 = vmatpush1.msra.mxu0 0.0
  %3034 = vmatprep.subr.mxu0 0.0
  %3035 = vmatpush1.msra.mxu0 0.0
  %3036 = vmatprep.subr.mxu0 0.0
  %3037 = vmatpush1.msra.mxu0 0.0
  %3038 = vmatprep.subr.mxu0 0.0
  %3039 = vmatpush1.msra.mxu0 0.0
  %3040 = vmatprep.subr.mxu0 0.0
  %3041 = vmatpush1.msra.mxu0 0.0
  %3042 = vmatprep.subr.mxu0 0.0
  %3043 = vmatpush1.msra.mxu0 0.0
  %3044 = vmatprep.subr.mxu0 0.0
  %3045 = vmatpush1.msra.mxu0 0.0
  %3046 = vmatprep.subr.mxu0 0.0
  %3047 = vmatpush1.msra.mxu0 0.0
  %3048 = vmatprep.subr.mxu0 0.0
  %3049 = vmatpush1.msra.mxu0 0.0
  %3050 = vmatprep.subr.mxu0 0.0
  %3051 = vmatpush1.msra.mxu0 0.0
  %3052 = vmatprep.mubr.f32.mxu0 0.0
  %3053 = vmatmul.mubr.f32.gmra.mrb[0].mxu0 %v2986
  %v3054 = vpop.f32.mrb[0].mxu0
  %v3055 = vadd.f32 0.0, %v3054
  %v3056 = vpop.f32.mrb[0].mxu0
  %3057 = vdwg.mxu0
  %v3058 = vadd.f32 %v2983, %v3055
  %v3059 = vxor.u32 %v3058, 2147483648
  %v3060 = vmul.f32 %v3059, 1.442695
  %v3061 = vpow.pop %v3060
  %v3062 = vadd.f32 %v3061, 1.0
  %v3063 = vrcp.pop %v3062
  %v3064 = vmul.f32 1.0, %v3063
  %v3065 = vtanh.pop %v3058
  %v3066 = vld [vmem:[#allocation5] sm:$0xff]
  %3068 = vrot.lane.b32.xlu0 %v3066, 32
  %v3069 = vpop.permute.xlu0 %3068
  %v3071 = vmul.f32 %v3064, %v3069
  %3073 = vrot.lane.b32.xlu0 %v3065, 64
  %v3074 = vpop.permute.xlu0 %3073
  %v3076 = vmul.f32 %v3064, %v3074
  %3078 = vrot.lane.b32.xlu0 %v3076, 32
  %v3079 = vpop.permute.xlu0 %3078
  %v3081 = vadd.f32 %v3071, %v3079
  %v3082 = vtanh.pop %v3081
  %3084 = vrot.lane.b32.xlu0 %v3082, 64
  %v3085 = vpop.permute.xlu0 %3084
  %v3087 = vmul.f32 %v3064, %v3085
  %3089 = vrot.lane.b32.xlu0 %v3087, 32
  %v3090 = vpop.permute.xlu0 %3089
  %3092 = vst.msk [vmem:[#allocation4] sm:$0xff] %vm190, %v3090
  %3094 = vrot.lane.b32.xlu0 %v3081, 96
  %v3095 = vpop.permute.xlu0 %3094
  %3097 = vst.msk [vmem:[#allocation5] sm:$0xff] %vm190, %v3095
  %v3098 = vld [vmem:[#allocation2 + $0x38] sm:$0xff]
  %v3099 = vld [vmem:[#allocation4] sm:$0xff]
  %v3101 = vsel %vm190, %v3099, 0
  %3103 = vmatprep.subr.mxu0 0.0
  %3104 = vmatpush1.msra.mxu0 %v2289
  %3105 = vmatprep.subr.mxu0 0.0
  %3106 = vmatpush1.msra.mxu0 %v2290
  %3107 = vmatprep.subr.mxu0 0.0
  %3108 = vmatpush1.msra.mxu0 %v2291
  %3109 = vmatprep.subr.mxu0 0.0
  %3110 = vmatpush1.msra.mxu0 %v2292
  %3111 = vmatprep.subr.mxu0 0.0
  %3112 = vmatpush1.msra.mxu0 0.0
  %3113 = vmatprep.subr.mxu0 0.0
  %3114 = vmatpush1.msra.mxu0 0.0
  %3115 = vmatprep.subr.mxu0 0.0
  %3116 = vmatpush1.msra.mxu0 0.0
  %3117 = vmatprep.subr.mxu0 0.0
  %3118 = vmatpush1.msra.mxu0 0.0
  %3119 = vmatprep.subr.mxu0 0.0
  %3120 = vmatpush1.msra.mxu0 0.0
  %3121 = vmatprep.subr.mxu0 0.0
  %3122 = vmatpush1.msra.mxu0 0.0
  %3123 = vmatprep.subr.mxu0 0.0
  %3124 = vmatpush1.msra.mxu0 0.0
  %3125 = vmatprep.subr.mxu0 0.0
  %3126 = vmatpush1.msra.mxu0 0.0
  %3127 = vmatprep.subr.mxu0 0.0
  %3128 = vmatpush1.msra.mxu0 0.0
  %3129 = vmatprep.subr.mxu0 0.0
  %3130 = vmatpush1.msra.mxu0 0.0
  %3131 = vmatprep.subr.mxu0 0.0
  %3132 = vmatpush1.msra.mxu0 0.0
  %3133 = vmatprep.subr.mxu0 0.0
  %3134 = vmatpush1.msra.mxu0 0.0
  %3135 = vmatprep.subr.mxu0 0.0
  %3136 = vmatpush1.msra.mxu0 0.0
  %3137 = vmatprep.subr.mxu0 0.0
  %3138 = vmatpush1.msra.mxu0 0.0
  %3139 = vmatprep.subr.mxu0 0.0
  %3140 = vmatpush1.msra.mxu0 0.0
  %3141 = vmatprep.subr.mxu0 0.0
  %3142 = vmatpush1.msra.mxu0 0.0
  %3143 = vmatprep.subr.mxu0 0.0
  %3144 = vmatpush1.msra.mxu0 0.0
  %3145 = vmatprep.subr.mxu0 0.0
  %3146 = vmatpush1.msra.mxu0 0.0
  %3147 = vmatprep.subr.mxu0 0.0
  %3148 = vmatpush1.msra.mxu0 0.0
  %3149 = vmatprep.subr.mxu0 0.0
  %3150 = vmatpush1.msra.mxu0 0.0
  %3151 = vmatprep.subr.mxu0 0.0
  %3152 = vmatpush1.msra.mxu0 0.0
  %3153 = vmatprep.subr.mxu0 0.0
  %3154 = vmatpush1.msra.mxu0 0.0
  %3155 = vmatprep.subr.mxu0 0.0
  %3156 = vmatpush1.msra.mxu0 0.0
  %3157 = vmatprep.subr.mxu0 0.0
  %3158 = vmatpush1.msra.mxu0 0.0
  %3159 = vmatprep.subr.mxu0 0.0
  %3160 = vmatpush1.msra.mxu0 0.0
  %3161 = vmatprep.subr.mxu0 0.0
  %3162 = vmatpush1.msra.mxu0 0.0
  %3163 = vmatprep.subr.mxu0 0.0
  %3164 = vmatpush1.msra.mxu0 0.0
  %3165 = vmatprep.subr.mxu0 0.0
  %3166 = vmatpush1.msra.mxu0 0.0
  %3167 = vmatprep.mubr.f32.mxu0 0.0
  %3168 = vmatmul.mubr.f32.gmra.mrb[0].mxu0 %v3101
  %v3169 = vpop.f32.mrb[0].mxu0
  %v3170 = vadd.f32 0.0, %v3169
  %v3171 = vpop.f32.mrb[0].mxu0
  %3172 = vdwg.mxu0
  %v3173 = vadd.f32 %v3098, %v3170
  %v3174 = vxor.u32 %v3173, 2147483648
  %v3175 = vmul.f32 %v3174, 1.442695
  %v3176 = vpow.pop %v3175
  %v3177 = vadd.f32 %v3176, 1.0
  %v3178 = vrcp.pop %v3177
  %v3179 = vmul.f32 1.0, %v3178
  %v3180 = vtanh.pop %v3173
  %v3181 = vld [vmem:[#allocation5] sm:$0xff]
  %3183 = vrot.lane.b32.xlu0 %v3181, 32
  %v3184 = vpop.permute.xlu0 %3183
  %v3186 = vmul.f32 %v3179, %v3184
  %3188 = vrot.lane.b32.xlu0 %v3180, 64
  %v3189 = vpop.permute.xlu0 %3188
  %v3191 = vmul.f32 %v3179, %v3189
  %3193 = vrot.lane.b32.xlu0 %v3191, 32
  %v3194 = vpop.permute.xlu0 %3193
  %v3196 = vadd.f32 %v3186, %v3194
  %v3197 = vtanh.pop %v3196
  %3199 = vrot.lane.b32.xlu0 %v3197, 64
  %v3200 = vpop.permute.xlu0 %3199
  %v3202 = vmul.f32 %v3179, %v3200
  %3204 = vrot.lane.b32.xlu0 %v3202, 32
  %v3205 = vpop.permute.xlu0 %3204
  %3207 = vst.msk [vmem:[#allocation4] sm:$0xff] %vm190, %v3205
  %3209 = vrot.lane.b32.xlu0 %v3196, 96
  %v3210 = vpop.permute.xlu0 %3209
  %3212 = vst.msk [vmem:[#allocation5] sm:$0xff] %vm190, %v3210
  %v3213 = vld [vmem:[#allocation2 + $0x40] sm:$0xff]
  %v3214 = vld [vmem:[#allocation4] sm:$0xff]
  %v3216 = vsel %vm190, %v3214, 0
  %3218 = vmatprep.subr.mxu0 0.0
  %3219 = vmatpush1.msra.mxu0 %v2289
  %3220 = vmatprep.subr.mxu0 0.0
  %3221 = vmatpush1.msra.mxu0 %v2290
  %3222 = vmatprep.subr.mxu0 0.0
  %3223 = vmatpush1.msra.mxu0 %v2291
  %3224 = vmatprep.subr.mxu0 0.0
  %3225 = vmatpush1.msra.mxu0 %v2292
  %3226 = vmatprep.subr.mxu0 0.0
  %3227 = vmatpush1.msra.mxu0 0.0
  %3228 = vmatprep.subr.mxu0 0.0
  %3229 = vmatpush1.msra.mxu0 0.0
  %3230 = vmatprep.subr.mxu0 0.0
  %3231 = vmatpush1.msra.mxu0 0.0
  %3232 = vmatprep.subr.mxu0 0.0
  %3233 = vmatpush1.msra.mxu0 0.0
  %3234 = vmatprep.subr.mxu0 0.0
  %3235 = vmatpush1.msra.mxu0 0.0
  %3236 = vmatprep.subr.mxu0 0.0
  %3237 = vmatpush1.msra.mxu0 0.0
  %3238 = vmatprep.subr.mxu0 0.0
  %3239 = vmatpush1.msra.mxu0 0.0
  %3240 = vmatprep.subr.mxu0 0.0
  %3241 = vmatpush1.msra.mxu0 0.0
  %3242 = vmatprep.subr.mxu0 0.0
  %3243 = vmatpush1.msra.mxu0 0.0
  %3244 = vmatprep.subr.mxu0 0.0
  %3245 = vmatpush1.msra.mxu0 0.0
  %3246 = vmatprep.subr.mxu0 0.0
  %3247 = vmatpush1.msra.mxu0 0.0
  %3248 = vmatprep.subr.mxu0 0.0
  %3249 = vmatpush1.msra.mxu0 0.0
  %3250 = vmatprep.subr.mxu0 0.0
  %3251 = vmatpush1.msra.mxu0 0.0
  %3252 = vmatprep.subr.mxu0 0.0
  %3253 = vmatpush1.msra.mxu0 0.0
  %3254 = vmatprep.subr.mxu0 0.0
  %3255 = vmatpush1.msra.mxu0 0.0
  %3256 = vmatprep.subr.mxu0 0.0
  %3257 = vmatpush1.msra.mxu0 0.0
  %3258 = vmatprep.subr.mxu0 0.0
  %3259 = vmatpush1.msra.mxu0 0.0
  %3260 = vmatprep.subr.mxu0 0.0
  %3261 = vmatpush1.msra.mxu0 0.0
  %3262 = vmatprep.subr.mxu0 0.0
  %3263 = vmatpush1.msra.mxu0 0.0
  %3264 = vmatprep.subr.mxu0 0.0
  %3265 = vmatpush1.msra.mxu0 0.0
  %3266 = vmatprep.subr.mxu0 0.0
  %3267 = vmatpush1.msra.mxu0 0.0
  %3268 = vmatprep.subr.mxu0 0.0
  %3269 = vmatpush1.msra.mxu0 0.0
  %3270 = vmatprep.subr.mxu0 0.0
  %3271 = vmatpush1.msra.mxu0 0.0
  %3272 = vmatprep.subr.mxu0 0.0
  %3273 = vmatpush1.msra.mxu0 0.0
  %3274 = vmatprep.subr.mxu0 0.0
  %3275 = vmatpush1.msra.mxu0 0.0
  %3276 = vmatprep.subr.mxu0 0.0
  %3277 = vmatpush1.msra.mxu0 0.0
  %3278 = vmatprep.subr.mxu0 0.0
  %3279 = vmatpush1.msra.mxu0 0.0
  %3280 = vmatprep.subr.mxu0 0.0
  %3281 = vmatpush1.msra.mxu0 0.0
  %3282 = vmatprep.mubr.f32.mxu0 0.0
  %3283 = vmatmul.mubr.f32.gmra.mrb[0].mxu0 %v3216
  %v3284 = vpop.f32.mrb[0].mxu0
  %v3285 = vadd.f32 0.0, %v3284
  %v3286 = vpop.f32.mrb[0].mxu0
  %3287 = vdwg.mxu0
  %v3288 = vadd.f32 %v3213, %v3285
  %v3289 = vxor.u32 %v3288, 2147483648
  %v3290 = vmul.f32 %v3289, 1.442695
  %v3291 = vpow.pop %v3290
  %v3292 = vadd.f32 %v3291, 1.0
  %v3293 = vrcp.pop %v3292
  %v3294 = vmul.f32 1.0, %v3293
  %v3295 = vtanh.pop %v3288
  %v3296 = vld [vmem:[#allocation5] sm:$0xff]
  %3298 = vrot.lane.b32.xlu0 %v3296, 32
  %v3299 = vpop.permute.xlu0 %3298
  %v3301 = vmul.f32 %v3294, %v3299
  %3303 = vrot.lane.b32.xlu0 %v3295, 64
  %v3304 = vpop.permute.xlu0 %3303
  %v3306 = vmul.f32 %v3294, %v3304
  %3308 = vrot.lane.b32.xlu0 %v3306, 32
  %v3309 = vpop.permute.xlu0 %3308
  %v3311 = vadd.f32 %v3301, %v3309
  %v3312 = vtanh.pop %v3311
  %3314 = vrot.lane.b32.xlu0 %v3312, 64
  %v3315 = vpop.permute.xlu0 %3314
  %v3317 = vmul.f32 %v3294, %v3315
  %3319 = vrot.lane.b32.xlu0 %v3317, 32
  %v3320 = vpop.permute.xlu0 %3319
  %3322 = vst.msk [vmem:[#allocation4] sm:$0xff] %vm190, %v3320
  %3324 = vrot.lane.b32.xlu0 %v3311, 96
  %v3325 = vpop.permute.xlu0 %3324
  %3327 = vst.msk [vmem:[#allocation5] sm:$0xff] %vm190, %v3325
  %v3328 = vld [vmem:[#allocation2 + $0x48] sm:$0xff]
  %v3329 = vld [vmem:[#allocation4] sm:$0xff]
  %v3331 = vsel %vm190, %v3329, 0
  %3333 = vmatprep.subr.mxu0 0.0
  %3334 = vmatpush1.msra.mxu0 %v2289
  %3335 = vmatprep.subr.mxu0 0.0
  %3336 = vmatpush1.msra.mxu0 %v2290
  %3337 = vmatprep.subr.mxu0 0.0
  %3338 = vmatpush1.msra.mxu0 %v2291
  %3339 = vmatprep.subr.mxu0 0.0
  %3340 = vmatpush1.msra.mxu0 %v2292
  %3341 = vmatprep.subr.mxu0 0.0
  %3342 = vmatpush1.msra.mxu0 0.0
  %3343 = vmatprep.subr.mxu0 0.0
  %3344 = vmatpush1.msra.mxu0 0.0
  %3345 = vmatprep.subr.mxu0 0.0
  %3346 = vmatpush1.msra.mxu0 0.0
  %3347 = vmatprep.subr.mxu0 0.0
  %3348 = vmatpush1.msra.mxu0 0.0
  %3349 = vmatprep.subr.mxu0 0.0
  %3350 = vmatpush1.msra.mxu0 0.0
  %3351 = vmatprep.subr.mxu0 0.0
  %3352 = vmatpush1.msra.mxu0 0.0
  %3353 = vmatprep.subr.mxu0 0.0
  %3354 = vmatpush1.msra.mxu0 0.0
  %3355 = vmatprep.subr.mxu0 0.0
  %3356 = vmatpush1.msra.mxu0 0.0
  %3357 = vmatprep.subr.mxu0 0.0
  %3358 = vmatpush1.msra.mxu0 0.0
  %3359 = vmatprep.subr.mxu0 0.0
  %3360 = vmatpush1.msra.mxu0 0.0
  %3361 = vmatprep.subr.mxu0 0.0
  %3362 = vmatpush1.msra.mxu0 0.0
  %3363 = vmatprep.subr.mxu0 0.0
  %3364 = vmatpush1.msra.mxu0 0.0
  %3365 = vmatprep.subr.mxu0 0.0
  %3366 = vmatpush1.msra.mxu0 0.0
  %3367 = vmatprep.subr.mxu0 0.0
  %3368 = vmatpush1.msra.mxu0 0.0
  %3369 = vmatprep.subr.mxu0 0.0
  %3370 = vmatpush1.msra.mxu0 0.0
  %3371 = vmatprep.subr.mxu0 0.0
  %3372 = vmatpush1.msra.mxu0 0.0
  %3373 = vmatprep.subr.mxu0 0.0
  %3374 = vmatpush1.msra.mxu0 0.0
  %3375 = vmatprep.subr.mxu0 0.0
  %3376 = vmatpush1.msra.mxu0 0.0
  %3377 = vmatprep.subr.mxu0 0.0
  %3378 = vmatpush1.msra.mxu0 0.0
  %3379 = vmatprep.subr.mxu0 0.0
  %3380 = vmatpush1.msra.mxu0 0.0
  %3381 = vmatprep.subr.mxu0 0.0
  %3382 = vmatpush1.msra.mxu0 0.0
  %3383 = vmatprep.subr.mxu0 0.0
  %3384 = vmatpush1.msra.mxu0 0.0
  %3385 = vmatprep.subr.mxu0 0.0
  %3386 = vmatpush1.msra.mxu0 0.0
  %3387 = vmatprep.subr.mxu0 0.0
  %3388 = vmatpush1.msra.mxu0 0.0
  %3389 = vmatprep.subr.mxu0 0.0
  %3390 = vmatpush1.msra.mxu0 0.0
  %3391 = vmatprep.subr.mxu0 0.0
  %3392 = vmatpush1.msra.mxu0 0.0
  %3393 = vmatprep.subr.mxu0 0.0
  %3394 = vmatpush1.msra.mxu0 0.0
  %3395 = vmatprep.subr.mxu0 0.0
  %3396 = vmatpush1.msra.mxu0 0.0
  %3397 = vmatprep.mubr.f32.mxu0 0.0
  %3398 = vmatmul.mubr.f32.gmra.mrb[0].mxu0 %v3331
  %v3399 = vpop.f32.mrb[0].mxu0
  %v3400 = vadd.f32 0.0, %v3399
  %v3401 = vpop.f32.mrb[0].mxu0
  %3402 = vdwg.mxu0
  %v3403 = vadd.f32 %v3328, %v3400
  %v3404 = vxor.u32 %v3403, 2147483648
  %v3405 = vmul.f32 %v3404, 1.442695
  %v3406 = vpow.pop %v3405
  %v3407 = vadd.f32 %v3406, 1.0
  %v3408 = vrcp.pop %v3407
  %v3409 = vmul.f32 1.0, %v3408
  %v3410 = vtanh.pop %v3403
  %v3411 = vld [vmem:[#allocation5] sm:$0xff]
  %3413 = vrot.lane.b32.xlu0 %v3411, 32
  %v3414 = vpop.permute.xlu0 %3413
  %v3416 = vmul.f32 %v3409, %v3414
  %3418 = vrot.lane.b32.xlu0 %v3410, 64
  %v3419 = vpop.permute.xlu0 %3418
  %v3421 = vmul.f32 %v3409, %v3419
  %3423 = vrot.lane.b32.xlu0 %v3421, 32
  %v3424 = vpop.permute.xlu0 %3423
  %v3426 = vadd.f32 %v3416, %v3424
  %v3427 = vtanh.pop %v3426
  %3429 = vrot.lane.b32.xlu0 %v3427, 64
  %v3430 = vpop.permute.xlu0 %3429
  %v3432 = vmul.f32 %v3409, %v3430
  %3434 = vrot.lane.b32.xlu0 %v3432, 32
  %v3435 = vpop.permute.xlu0 %3434
  %3437 = vst.msk [vmem:[#allocation4] sm:$0xff] %vm190, %v3435
  %3439 = vrot.lane.b32.xlu0 %v3426, 96
  %v3440 = vpop.permute.xlu0 %3439
  %3442 = vst.msk [vmem:[#allocation5] sm:$0xff] %vm190, %v3440
  %v3443 = vld [vmem:[#allocation2 + $0x50] sm:$0xff]
  %v3444 = vld [vmem:[#allocation4] sm:$0xff]
  %v3446 = vsel %vm190, %v3444, 0
  %3448 = vmatprep.subr.mxu0 0.0
  %3449 = vmatpush1.msra.mxu0 %v2289
  %3450 = vmatprep.subr.mxu0 0.0
  %3451 = vmatpush1.msra.mxu0 %v2290
  %3452 = vmatprep.subr.mxu0 0.0
  %3453 = vmatpush1.msra.mxu0 %v2291
  %3454 = vmatprep.subr.mxu0 0.0
  %3455 = vmatpush1.msra.mxu0 %v2292
  %3456 = vmatprep.subr.mxu0 0.0
  %3457 = vmatpush1.msra.mxu0 0.0
  %3458 = vmatprep.subr.mxu0 0.0
  %3459 = vmatpush1.msra.mxu0 0.0
  %3460 = vmatprep.subr.mxu0 0.0
  %3461 = vmatpush1.msra.mxu0 0.0
  %3462 = vmatprep.subr.mxu0 0.0
  %3463 = vmatpush1.msra.mxu0 0.0
  %3464 = vmatprep.subr.mxu0 0.0
  %3465 = vmatpush1.msra.mxu0 0.0
  %3466 = vmatprep.subr.mxu0 0.0
  %3467 = vmatpush1.msra.mxu0 0.0
  %3468 = vmatprep.subr.mxu0 0.0
  %3469 = vmatpush1.msra.mxu0 0.0
  %3470 = vmatprep.subr.mxu0 0.0
  %3471 = vmatpush1.msra.mxu0 0.0
  %3472 = vmatprep.subr.mxu0 0.0
  %3473 = vmatpush1.msra.mxu0 0.0
  %3474 = vmatprep.subr.mxu0 0.0
  %3475 = vmatpush1.msra.mxu0 0.0
  %3476 = vmatprep.subr.mxu0 0.0
  %3477 = vmatpush1.msra.mxu0 0.0
  %3478 = vmatprep.subr.mxu0 0.0
  %3479 = vmatpush1.msra.mxu0 0.0
  %3480 = vmatprep.subr.mxu0 0.0
  %3481 = vmatpush1.msra.mxu0 0.0
  %3482 = vmatprep.subr.mxu0 0.0
  %3483 = vmatpush1.msra.mxu0 0.0
  %3484 = vmatprep.subr.mxu0 0.0
  %3485 = vmatpush1.msra.mxu0 0.0
  %3486 = vmatprep.subr.mxu0 0.0
  %3487 = vmatpush1.msra.mxu0 0.0
  %3488 = vmatprep.subr.mxu0 0.0
  %3489 = vmatpush1.msra.mxu0 0.0
  %3490 = vmatprep.subr.mxu0 0.0
  %3491 = vmatpush1.msra.mxu0 0.0
  %3492 = vmatprep.subr.mxu0 0.0
  %3493 = vmatpush1.msra.mxu0 0.0
  %3494 = vmatprep.subr.mxu0 0.0
  %3495 = vmatpush1.msra.mxu0 0.0
  %3496 = vmatprep.subr.mxu0 0.0
  %3497 = vmatpush1.msra.mxu0 0.0
  %3498 = vmatprep.subr.mxu0 0.0
  %3499 = vmatpush1.msra.mxu0 0.0
  %3500 = vmatprep.subr.mxu0 0.0
  %3501 = vmatpush1.msra.mxu0 0.0
  %3502 = vmatprep.subr.mxu0 0.0
  %3503 = vmatpush1.msra.mxu0 0.0
  %3504 = vmatprep.subr.mxu0 0.0
  %3505 = vmatpush1.msra.mxu0 0.0
  %3506 = vmatprep.subr.mxu0 0.0
  %3507 = vmatpush1.msra.mxu0 0.0
  %3508 = vmatprep.subr.mxu0 0.0
  %3509 = vmatpush1.msra.mxu0 0.0
  %3510 = vmatprep.subr.mxu0 0.0
  %3511 = vmatpush1.msra.mxu0 0.0
  %3512 = vmatprep.mubr.f32.mxu0 0.0
  %3513 = vmatmul.mubr.f32.gmra.mrb[0].mxu0 %v3446
  %v3514 = vpop.f32.mrb[0].mxu0
  %v3515 = vadd.f32 0.0, %v3514
  %v3516 = vpop.f32.mrb[0].mxu0
  %3517 = vdwg.mxu0
  %v3518 = vadd.f32 %v3443, %v3515
  %v3519 = vxor.u32 %v3518, 2147483648
  %v3520 = vmul.f32 %v3519, 1.442695
  %v3521 = vpow.pop %v3520
  %v3522 = vadd.f32 %v3521, 1.0
  %v3523 = vrcp.pop %v3522
  %v3524 = vmul.f32 1.0, %v3523
  %v3525 = vtanh.pop %v3518
  %v3526 = vld [vmem:[#allocation5] sm:$0xff]
  %3528 = vrot.lane.b32.xlu0 %v3526, 32
  %v3529 = vpop.permute.xlu0 %3528
  %v3531 = vmul.f32 %v3524, %v3529
  %3533 = vrot.lane.b32.xlu0 %v3525, 64
  %v3534 = vpop.permute.xlu0 %3533
  %v3536 = vmul.f32 %v3524, %v3534
  %3538 = vrot.lane.b32.xlu0 %v3536, 32
  %v3539 = vpop.permute.xlu0 %3538
  %v3541 = vadd.f32 %v3531, %v3539
  %v3542 = vtanh.pop %v3541
  %3544 = vrot.lane.b32.xlu0 %v3542, 64
  %v3545 = vpop.permute.xlu0 %3544
  %v3547 = vmul.f32 %v3524, %v3545
  %3549 = vrot.lane.b32.xlu0 %v3547, 32
  %v3550 = vpop.permute.xlu0 %3549
  %3552 = vst.msk [vmem:[#allocation4] sm:$0xff] %vm190, %v3550
  %3554 = vrot.lane.b32.xlu0 %v3541, 96
  %v3555 = vpop.permute.xlu0 %3554
  %3557 = vst.msk [vmem:[#allocation5] sm:$0xff] %vm190, %v3555
  %v3558 = vld [vmem:[#allocation2 + $0x58] sm:$0xff]
  %v3559 = vld [vmem:[#allocation4] sm:$0xff]
  %v3561 = vsel %vm190, %v3559, 0
  %3563 = vmatprep.subr.mxu0 0.0
  %3564 = vmatpush1.msra.mxu0 %v2289
  %3565 = vmatprep.subr.mxu0 0.0
  %3566 = vmatpush1.msra.mxu0 %v2290
  %3567 = vmatprep.subr.mxu0 0.0
  %3568 = vmatpush1.msra.mxu0 %v2291
  %3569 = vmatprep.subr.mxu0 0.0
  %3570 = vmatpush1.msra.mxu0 %v2292
  %3571 = vmatprep.subr.mxu0 0.0
  %3572 = vmatpush1.msra.mxu0 0.0
  %3573 = vmatprep.subr.mxu0 0.0
  %3574 = vmatpush1.msra.mxu0 0.0
  %3575 = vmatprep.subr.mxu0 0.0
  %3576 = vmatpush1.msra.mxu0 0.0
  %3577 = vmatprep.subr.mxu0 0.0
  %3578 = vmatpush1.msra.mxu0 0.0
  %3579 = vmatprep.subr.mxu0 0.0
  %3580 = vmatpush1.msra.mxu0 0.0
  %3581 = vmatprep.subr.mxu0 0.0
  %3582 = vmatpush1.msra.mxu0 0.0
  %3583 = vmatprep.subr.mxu0 0.0
  %3584 = vmatpush1.msra.mxu0 0.0
  %3585 = vmatprep.subr.mxu0 0.0
  %3586 = vmatpush1.msra.mxu0 0.0
  %3587 = vmatprep.subr.mxu0 0.0
  %3588 = vmatpush1.msra.mxu0 0.0
  %3589 = vmatprep.subr.mxu0 0.0
  %3590 = vmatpush1.msra.mxu0 0.0
  %3591 = vmatprep.subr.mxu0 0.0
  %3592 = vmatpush1.msra.mxu0 0.0
  %3593 = vmatprep.subr.mxu0 0.0
  %3594 = vmatpush1.msra.mxu0 0.0
  %3595 = vmatprep.subr.mxu0 0.0
  %3596 = vmatpush1.msra.mxu0 0.0
  %3597 = vmatprep.subr.mxu0 0.0
  %3598 = vmatpush1.msra.mxu0 0.0
  %3599 = vmatprep.subr.mxu0 0.0
  %3600 = vmatpush1.msra.mxu0 0.0
  %3601 = vmatprep.subr.mxu0 0.0
  %3602 = vmatpush1.msra.mxu0 0.0
  %3603 = vmatprep.subr.mxu0 0.0
  %3604 = vmatpush1.msra.mxu0 0.0
  %3605 = vmatprep.subr.mxu0 0.0
  %3606 = vmatpush1.msra.mxu0 0.0
  %3607 = vmatprep.subr.mxu0 0.0
  %3608 = vmatpush1.msra.mxu0 0.0
  %3609 = vmatprep.subr.mxu0 0.0
  %3610 = vmatpush1.msra.mxu0 0.0
  %3611 = vmatprep.subr.mxu0 0.0
  %3612 = vmatpush1.msra.mxu0 0.0
  %3613 = vmatprep.subr.mxu0 0.0
  %3614 = vmatpush1.msra.mxu0 0.0
  %3615 = vmatprep.subr.mxu0 0.0
  %3616 = vmatpush1.msra.mxu0 0.0
  %3617 = vmatprep.subr.mxu0 0.0
  %3618 = vmatpush1.msra.mxu0 0.0
  %3619 = vmatprep.subr.mxu0 0.0
  %3620 = vmatpush1.msra.mxu0 0.0
  %3621 = vmatprep.subr.mxu0 0.0
  %3622 = vmatpush1.msra.mxu0 0.0
  %3623 = vmatprep.subr.mxu0 0.0
  %3624 = vmatpush1.msra.mxu0 0.0
  %3625 = vmatprep.subr.mxu0 0.0
  %3626 = vmatpush1.msra.mxu0 0.0
  %3627 = vmatprep.mubr.f32.mxu0 0.0
  %3628 = vmatmul.mubr.f32.gmra.mrb[0].mxu0 %v3561
  %v3629 = vpop.f32.mrb[0].mxu0
  %v3630 = vadd.f32 0.0, %v3629
  %v3631 = vpop.f32.mrb[0].mxu0
  %3632 = vdwg.mxu0
  %v3633 = vadd.f32 %v3558, %v3630
  %v3634 = vxor.u32 %v3633, 2147483648
  %v3635 = vmul.f32 %v3634, 1.442695
  %v3636 = vpow.pop %v3635
  %v3637 = vadd.f32 %v3636, 1.0
  %v3638 = vrcp.pop %v3637
  %v3639 = vmul.f32 1.0, %v3638
  %v3640 = vtanh.pop %v3633
  %v3641 = vld [vmem:[#allocation5] sm:$0xff]
  %3643 = vrot.lane.b32.xlu0 %v3641, 32
  %v3644 = vpop.permute.xlu0 %3643
  %v3646 = vmul.f32 %v3639, %v3644
  %3648 = vrot.lane.b32.xlu0 %v3640, 64
  %v3649 = vpop.permute.xlu0 %3648
  %v3651 = vmul.f32 %v3639, %v3649
  %3653 = vrot.lane.b32.xlu0 %v3651, 32
  %v3654 = vpop.permute.xlu0 %3653
  %v3656 = vadd.f32 %v3646, %v3654
  %v3657 = vtanh.pop %v3656
  %3659 = vrot.lane.b32.xlu0 %v3657, 64
  %v3660 = vpop.permute.xlu0 %3659
  %v3662 = vmul.f32 %v3639, %v3660
  %3664 = vrot.lane.b32.xlu0 %v3662, 32
  %v3665 = vpop.permute.xlu0 %3664
  %3667 = vst.msk [vmem:[#allocation4] sm:$0xff] %vm190, %v3665
  %3669 = vrot.lane.b32.xlu0 %v3656, 96
  %v3670 = vpop.permute.xlu0 %3669
  %3672 = vst.msk [vmem:[#allocation5] sm:$0xff] %vm190, %v3670
  %v3673 = vld [vmem:[#allocation2 + $0x60] sm:$0xff]
  %v3674 = vld [vmem:[#allocation4] sm:$0xff]
  %v3676 = vsel %vm190, %v3674, 0
  %3678 = vmatprep.subr.mxu0 0.0
  %3679 = vmatpush1.msra.mxu0 %v2289
  %3680 = vmatprep.subr.mxu0 0.0
  %3681 = vmatpush1.msra.mxu0 %v2290
  %3682 = vmatprep.subr.mxu0 0.0
  %3683 = vmatpush1.msra.mxu0 %v2291
  %3684 = vmatprep.subr.mxu0 0.0
  %3685 = vmatpush1.msra.mxu0 %v2292
  %3686 = vmatprep.subr.mxu0 0.0
  %3687 = vmatpush1.msra.mxu0 0.0
  %3688 = vmatprep.subr.mxu0 0.0
  %3689 = vmatpush1.msra.mxu0 0.0
  %3690 = vmatprep.subr.mxu0 0.0
  %3691 = vmatpush1.msra.mxu0 0.0
  %3692 = vmatprep.subr.mxu0 0.0
  %3693 = vmatpush1.msra.mxu0 0.0
  %3694 = vmatprep.subr.mxu0 0.0
  %3695 = vmatpush1.msra.mxu0 0.0
  %3696 = vmatprep.subr.mxu0 0.0
  %3697 = vmatpush1.msra.mxu0 0.0
  %3698 = vmatprep.subr.mxu0 0.0
  %3699 = vmatpush1.msra.mxu0 0.0
  %3700 = vmatprep.subr.mxu0 0.0
  %3701 = vmatpush1.msra.mxu0 0.0
  %3702 = vmatprep.subr.mxu0 0.0
  %3703 = vmatpush1.msra.mxu0 0.0
  %3704 = vmatprep.subr.mxu0 0.0
  %3705 = vmatpush1.msra.mxu0 0.0
  %3706 = vmatprep.subr.mxu0 0.0
  %3707 = vmatpush1.msra.mxu0 0.0
  %3708 = vmatprep.subr.mxu0 0.0
  %3709 = vmatpush1.msra.mxu0 0.0
  %3710 = vmatprep.subr.mxu0 0.0
  %3711 = vmatpush1.msra.mxu0 0.0
  %3712 = vmatprep.subr.mxu0 0.0
  %3713 = vmatpush1.msra.mxu0 0.0
  %3714 = vmatprep.subr.mxu0 0.0
  %3715 = vmatpush1.msra.mxu0 0.0
  %3716 = vmatprep.subr.mxu0 0.0
  %3717 = vmatpush1.msra.mxu0 0.0
  %3718 = vmatprep.subr.mxu0 0.0
  %3719 = vmatpush1.msra.mxu0 0.0
  %3720 = vmatprep.subr.mxu0 0.0
  %3721 = vmatpush1.msra.mxu0 0.0
  %3722 = vmatprep.subr.mxu0 0.0
  %3723 = vmatpush1.msra.mxu0 0.0
  %3724 = vmatprep.subr.mxu0 0.0
  %3725 = vmatpush1.msra.mxu0 0.0
  %3726 = vmatprep.subr.mxu0 0.0
  %3727 = vmatpush1.msra.mxu0 0.0
  %3728 = vmatprep.subr.mxu0 0.0
  %3729 = vmatpush1.msra.mxu0 0.0
  %3730 = vmatprep.subr.mxu0 0.0
  %3731 = vmatpush1.msra.mxu0 0.0
  %3732 = vmatprep.subr.mxu0 0.0
  %3733 = vmatpush1.msra.mxu0 0.0
  %3734 = vmatprep.subr.mxu0 0.0
  %3735 = vmatpush1.msra.mxu0 0.0
  %3736 = vmatprep.subr.mxu0 0.0
  %3737 = vmatpush1.msra.mxu0 0.0
  %3738 = vmatprep.subr.mxu0 0.0
  %3739 = vmatpush1.msra.mxu0 0.0
  %3740 = vmatprep.subr.mxu0 0.0
  %3741 = vmatpush1.msra.mxu0 0.0
  %3742 = vmatprep.mubr.f32.mxu0 0.0
  %3743 = vmatmul.mubr.f32.gmra.mrb[0].mxu0 %v3676
  %v3744 = vpop.f32.mrb[0].mxu0
  %v3745 = vadd.f32 0.0, %v3744
  %v3746 = vpop.f32.mrb[0].mxu0
  %3747 = vdwg.mxu0
  %v3748 = vadd.f32 %v3673, %v3745
  %v3749 = vxor.u32 %v3748, 2147483648
  %v3750 = vmul.f32 %v3749, 1.442695
  %v3751 = vpow.pop %v3750
  %v3752 = vadd.f32 %v3751, 1.0
  %v3753 = vrcp.pop %v3752
  %v3754 = vmul.f32 1.0, %v3753
  %v3755 = vtanh.pop %v3748
  %v3756 = vld [vmem:[#allocation5] sm:$0xff]
  %3758 = vrot.lane.b32.xlu0 %v3756, 32
  %v3759 = vpop.permute.xlu0 %3758
  %v3761 = vmul.f32 %v3754, %v3759
  %3763 = vrot.lane.b32.xlu0 %v3755, 64
  %v3764 = vpop.permute.xlu0 %3763
  %v3766 = vmul.f32 %v3754, %v3764
  %3768 = vrot.lane.b32.xlu0 %v3766, 32
  %v3769 = vpop.permute.xlu0 %3768
  %v3771 = vadd.f32 %v3761, %v3769
  %v3772 = vtanh.pop %v3771
  %3774 = vrot.lane.b32.xlu0 %v3772, 64
  %v3775 = vpop.permute.xlu0 %3774
  %v3777 = vmul.f32 %v3754, %v3775
  %3779 = vrot.lane.b32.xlu0 %v3777, 32
  %v3780 = vpop.permute.xlu0 %3779
  %3782 = vst.msk [vmem:[#allocation4] sm:$0xff] %vm190, %v3780
  %3784 = vrot.lane.b32.xlu0 %v3771, 96
  %v3785 = vpop.permute.xlu0 %3784
  %3787 = vst.msk [vmem:[#allocation5] sm:$0xff] %vm190, %v3785
  %v3788 = vld [vmem:[#allocation2 + $0x68] sm:$0xff]
  %v3789 = vld [vmem:[#allocation4] sm:$0xff]
  %v3791 = vsel %vm190, %v3789, 0
  %3793 = vmatprep.subr.mxu0 0.0
  %3794 = vmatpush1.msra.mxu0 %v2289
  %3795 = vmatprep.subr.mxu0 0.0
  %3796 = vmatpush1.msra.mxu0 %v2290
  %3797 = vmatprep.subr.mxu0 0.0
  %3798 = vmatpush1.msra.mxu0 %v2291
  %3799 = vmatprep.subr.mxu0 0.0
  %3800 = vmatpush1.msra.mxu0 %v2292
  %3801 = vmatprep.subr.mxu0 0.0
  %3802 = vmatpush1.msra.mxu0 0.0
  %3803 = vmatprep.subr.mxu0 0.0
  %3804 = vmatpush1.msra.mxu0 0.0
  %3805 = vmatprep.subr.mxu0 0.0
  %3806 = vmatpush1.msra.mxu0 0.0
  %3807 = vmatprep.subr.mxu0 0.0
  %3808 = vmatpush1.msra.mxu0 0.0
  %3809 = vmatprep.subr.mxu0 0.0
  %3810 = vmatpush1.msra.mxu0 0.0
  %3811 = vmatprep.subr.mxu0 0.0
  %3812 = vmatpush1.msra.mxu0 0.0
  %3813 = vmatprep.subr.mxu0 0.0
  %3814 = vmatpush1.msra.mxu0 0.0
  %3815 = vmatprep.subr.mxu0 0.0
  %3816 = vmatpush1.msra.mxu0 0.0
  %3817 = vmatprep.subr.mxu0 0.0
  %3818 = vmatpush1.msra.mxu0 0.0
  %3819 = vmatprep.subr.mxu0 0.0
  %3820 = vmatpush1.msra.mxu0 0.0
  %3821 = vmatprep.subr.mxu0 0.0
  %3822 = vmatpush1.msra.mxu0 0.0
  %3823 = vmatprep.subr.mxu0 0.0
  %3824 = vmatpush1.msra.mxu0 0.0
  %3825 = vmatprep.subr.mxu0 0.0
  %3826 = vmatpush1.msra.mxu0 0.0
  %3827 = vmatprep.subr.mxu0 0.0
  %3828 = vmatpush1.msra.mxu0 0.0
  %3829 = vmatprep.subr.mxu0 0.0
  %3830 = vmatpush1.msra.mxu0 0.0
  %3831 = vmatprep.subr.mxu0 0.0
  %3832 = vmatpush1.msra.mxu0 0.0
  %3833 = vmatprep.subr.mxu0 0.0
  %3834 = vmatpush1.msra.mxu0 0.0
  %3835 = vmatprep.subr.mxu0 0.0
  %3836 = vmatpush1.msra.mxu0 0.0
  %3837 = vmatprep.subr.mxu0 0.0
  %3838 = vmatpush1.msra.mxu0 0.0
  %3839 = vmatprep.subr.mxu0 0.0
  %3840 = vmatpush1.msra.mxu0 0.0
  %3841 = vmatprep.subr.mxu0 0.0
  %3842 = vmatpush1.msra.mxu0 0.0
  %3843 = vmatprep.subr.mxu0 0.0
  %3844 = vmatpush1.msra.mxu0 0.0
  %3845 = vmatprep.subr.mxu0 0.0
  %3846 = vmatpush1.msra.mxu0 0.0
  %3847 = vmatprep.subr.mxu0 0.0
  %3848 = vmatpush1.msra.mxu0 0.0
  %3849 = vmatprep.subr.mxu0 0.0
  %3850 = vmatpush1.msra.mxu0 0.0
  %3851 = vmatprep.subr.mxu0 0.0
  %3852 = vmatpush1.msra.mxu0 0.0
  %3853 = vmatprep.subr.mxu0 0.0
  %3854 = vmatpush1.msra.mxu0 0.0
  %3855 = vmatprep.subr.mxu0 0.0
  %3856 = vmatpush1.msra.mxu0 0.0
  %3857 = vmatprep.mubr.f32.mxu0 0.0
  %3858 = vmatmul.mubr.f32.gmra.mrb[0].mxu0 %v3791
  %v3859 = vpop.f32.mrb[0].mxu0
  %v3860 = vadd.f32 0.0, %v3859
  %v3861 = vpop.f32.mrb[0].mxu0
  %3862 = vdwg.mxu0
  %v3863 = vadd.f32 %v3788, %v3860
  %v3864 = vxor.u32 %v3863, 2147483648
  %v3865 = vmul.f32 %v3864, 1.442695
  %v3866 = vpow.pop %v3865
  %v3867 = vadd.f32 %v3866, 1.0
  %v3868 = vrcp.pop %v3867
  %v3869 = vmul.f32 1.0, %v3868
  %v3870 = vtanh.pop %v3863
  %v3871 = vld [vmem:[#allocation5] sm:$0xff]
  %3873 = vrot.lane.b32.xlu0 %v3871, 32
  %v3874 = vpop.permute.xlu0 %3873
  %v3876 = vmul.f32 %v3869, %v3874
  %3878 = vrot.lane.b32.xlu0 %v3870, 64
  %v3879 = vpop.permute.xlu0 %3878
  %v3881 = vmul.f32 %v3869, %v3879
  %3883 = vrot.lane.b32.xlu0 %v3881, 32
  %v3884 = vpop.permute.xlu0 %3883
  %v3886 = vadd.f32 %v3876, %v3884
  %v3887 = vtanh.pop %v3886
  %3889 = vrot.lane.b32.xlu0 %v3887, 64
  %v3890 = vpop.permute.xlu0 %3889
  %v3892 = vmul.f32 %v3869, %v3890
  %3894 = vrot.lane.b32.xlu0 %v3892, 32
  %v3895 = vpop.permute.xlu0 %3894
  %3897 = vst.msk [vmem:[#allocation4] sm:$0xff] %vm190, %v3895
  %3899 = vrot.lane.b32.xlu0 %v3886, 96
  %v3900 = vpop.permute.xlu0 %3899
  %3902 = vst.msk [vmem:[#allocation5] sm:$0xff] %vm190, %v3900
  %v3903 = vld [vmem:[#allocation2 + $0x70] sm:$0xff]
  %v3904 = vld [vmem:[#allocation4] sm:$0xff]
  %v3906 = vsel %vm190, %v3904, 0
  %3908 = vmatprep.subr.mxu0 0.0
  %3909 = vmatpush1.msra.mxu0 %v2289
  %3910 = vmatprep.subr.mxu0 0.0
  %3911 = vmatpush1.msra.mxu0 %v2290
  %3912 = vmatprep.subr.mxu0 0.0
  %3913 = vmatpush1.msra.mxu0 %v2291
  %3914 = vmatprep.subr.mxu0 0.0
  %3915 = vmatpush1.msra.mxu0 %v2292
  %3916 = vmatprep.subr.mxu0 0.0
  %3917 = vmatpush1.msra.mxu0 0.0
  %3918 = vmatprep.subr.mxu0 0.0
  %3919 = vmatpush1.msra.mxu0 0.0
  %3920 = vmatprep.subr.mxu0 0.0
  %3921 = vmatpush1.msra.mxu0 0.0
  %3922 = vmatprep.subr.mxu0 0.0
  %3923 = vmatpush1.msra.mxu0 0.0
  %3924 = vmatprep.subr.mxu0 0.0
  %3925 = vmatpush1.msra.mxu0 0.0
  %3926 = vmatprep.subr.mxu0 0.0
  %3927 = vmatpush1.msra.mxu0 0.0
  %3928 = vmatprep.subr.mxu0 0.0
  %3929 = vmatpush1.msra.mxu0 0.0
  %3930 = vmatprep.subr.mxu0 0.0
  %3931 = vmatpush1.msra.mxu0 0.0
  %3932 = vmatprep.subr.mxu0 0.0
  %3933 = vmatpush1.msra.mxu0 0.0
  %3934 = vmatprep.subr.mxu0 0.0
  %3935 = vmatpush1.msra.mxu0 0.0
  %3936 = vmatprep.subr.mxu0 0.0
  %3937 = vmatpush1.msra.mxu0 0.0
  %3938 = vmatprep.subr.mxu0 0.0
  %3939 = vmatpush1.msra.mxu0 0.0
  %3940 = vmatprep.subr.mxu0 0.0
  %3941 = vmatpush1.msra.mxu0 0.0
  %3942 = vmatprep.subr.mxu0 0.0
  %3943 = vmatpush1.msra.mxu0 0.0
  %3944 = vmatprep.subr.mxu0 0.0
  %3945 = vmatpush1.msra.mxu0 0.0
  %3946 = vmatprep.subr.mxu0 0.0
  %3947 = vmatpush1.msra.mxu0 0.0
  %3948 = vmatprep.subr.mxu0 0.0
  %3949 = vmatpush1.msra.mxu0 0.0
  %3950 = vmatprep.subr.mxu0 0.0
  %3951 = vmatpush1.msra.mxu0 0.0
  %3952 = vmatprep.subr.mxu0 0.0
  %3953 = vmatpush1.msra.mxu0 0.0
  %3954 = vmatprep.subr.mxu0 0.0
  %3955 = vmatpush1.msra.mxu0 0.0
  %3956 = vmatprep.subr.mxu0 0.0
  %3957 = vmatpush1.msra.mxu0 0.0
  %3958 = vmatprep.subr.mxu0 0.0
  %3959 = vmatpush1.msra.mxu0 0.0
  %3960 = vmatprep.subr.mxu0 0.0
  %3961 = vmatpush1.msra.mxu0 0.0
  %3962 = vmatprep.subr.mxu0 0.0
  %3963 = vmatpush1.msra.mxu0 0.0
  %3964 = vmatprep.subr.mxu0 0.0
  %3965 = vmatpush1.msra.mxu0 0.0
  %3966 = vmatprep.subr.mxu0 0.0
  %3967 = vmatpush1.msra.mxu0 0.0
  %3968 = vmatprep.subr.mxu0 0.0
  %3969 = vmatpush1.msra.mxu0 0.0
  %3970 = vmatprep.subr.mxu0 0.0
  %3971 = vmatpush1.msra.mxu0 0.0
  %3972 = vmatprep.mubr.f32.mxu0 0.0
  %3973 = vmatmul.mubr.f32.gmra.mrb[0].mxu0 %v3906
  %v3974 = vpop.f32.mrb[0].mxu0
  %v3975 = vadd.f32 0.0, %v3974
  %v3976 = vpop.f32.mrb[0].mxu0
  %3977 = vdwg.mxu0
  %v3978 = vadd.f32 %v3903, %v3975
  %v3979 = vxor.u32 %v3978, 2147483648
  %v3980 = vmul.f32 %v3979, 1.442695
  %v3981 = vpow.pop %v3980
  %v3982 = vadd.f32 %v3981, 1.0
  %v3983 = vrcp.pop %v3982
  %v3984 = vmul.f32 1.0, %v3983
  %v3985 = vtanh.pop %v3978
  %v3986 = vld [vmem:[#allocation5] sm:$0xff]
  %3988 = vrot.lane.b32.xlu0 %v3986, 32
  %v3989 = vpop.permute.xlu0 %3988
  %v3991 = vmul.f32 %v3984, %v3989
  %3993 = vrot.lane.b32.xlu0 %v3985, 64
  %v3994 = vpop.permute.xlu0 %3993
  %v3996 = vmul.f32 %v3984, %v3994
  %3998 = vrot.lane.b32.xlu0 %v3996, 32
  %v3999 = vpop.permute.xlu0 %3998
  %v4001 = vadd.f32 %v3991, %v3999
  %v4002 = vtanh.pop %v4001
  %4004 = vrot.lane.b32.xlu0 %v4002, 64
  %v4005 = vpop.permute.xlu0 %4004
  %v4007 = vmul.f32 %v3984, %v4005
  %4009 = vrot.lane.b32.xlu0 %v4007, 32
  %v4010 = vpop.permute.xlu0 %4009
  %4012 = vst.msk [vmem:[#allocation4] sm:$0xff] %vm190, %v4010
  %4014 = vrot.lane.b32.xlu0 %v4001, 96
  %v4015 = vpop.permute.xlu0 %4014
  %4017 = vst.msk [vmem:[#allocation5] sm:$0xff] %vm190, %v4015
  %v4018 = vld [vmem:[#allocation2 + $0x78] sm:$0xff]
  %v4019 = vld [vmem:[#allocation4] sm:$0xff]
  %v4021 = vsel %vm190, %v4019, 0
  %4023 = vmatprep.subr.mxu0 0.0
  %4024 = vmatpush1.msra.mxu0 %v2289
  %4025 = vmatprep.subr.mxu0 0.0
  %4026 = vmatpush1.msra.mxu0 %v2290
  %4027 = vmatprep.subr.mxu0 0.0
  %4028 = vmatpush1.msra.mxu0 %v2291
  %4029 = vmatprep.subr.mxu0 0.0
  %4030 = vmatpush1.msra.mxu0 %v2292
  %4031 = vmatprep.subr.mxu0 0.0
  %4032 = vmatpush1.msra.mxu0 0.0
  %4033 = vmatprep.subr.mxu0 0.0
  %4034 = vmatpush1.msra.mxu0 0.0
  %4035 = vmatprep.subr.mxu0 0.0
  %4036 = vmatpush1.msra.mxu0 0.0
  %4037 = vmatprep.subr.mxu0 0.0
  %4038 = vmatpush1.msra.mxu0 0.0
  %4039 = vmatprep.subr.mxu0 0.0
  %4040 = vmatpush1.msra.mxu0 0.0
  %4041 = vmatprep.subr.mxu0 0.0
  %4042 = vmatpush1.msra.mxu0 0.0
  %4043 = vmatprep.subr.mxu0 0.0
  %4044 = vmatpush1.msra.mxu0 0.0
  %4045 = vmatprep.subr.mxu0 0.0
  %4046 = vmatpush1.msra.mxu0 0.0
  %4047 = vmatprep.subr.mxu0 0.0
  %4048 = vmatpush1.msra.mxu0 0.0
  %4049 = vmatprep.subr.mxu0 0.0
  %4050 = vmatpush1.msra.mxu0 0.0
  %4051 = vmatprep.subr.mxu0 0.0
  %4052 = vmatpush1.msra.mxu0 0.0
  %4053 = vmatprep.subr.mxu0 0.0
  %4054 = vmatpush1.msra.mxu0 0.0
  %4055 = vmatprep.subr.mxu0 0.0
  %4056 = vmatpush1.msra.mxu0 0.0
  %4057 = vmatprep.subr.mxu0 0.0
  %4058 = vmatpush1.msra.mxu0 0.0
  %4059 = vmatprep.subr.mxu0 0.0
  %4060 = vmatpush1.msra.mxu0 0.0
  %4061 = vmatprep.subr.mxu0 0.0
  %4062 = vmatpush1.msra.mxu0 0.0
  %4063 = vmatprep.subr.mxu0 0.0
  %4064 = vmatpush1.msra.mxu0 0.0
  %4065 = vmatprep.subr.mxu0 0.0
  %4066 = vmatpush1.msra.mxu0 0.0
  %4067 = vmatprep.subr.mxu0 0.0
  %4068 = vmatpush1.msra.mxu0 0.0
  %4069 = vmatprep.subr.mxu0 0.0
  %4070 = vmatpush1.msra.mxu0 0.0
  %4071 = vmatprep.subr.mxu0 0.0
  %4072 = vmatpush1.msra.mxu0 0.0
  %4073 = vmatprep.subr.mxu0 0.0
  %4074 = vmatpush1.msra.mxu0 0.0
  %4075 = vmatprep.subr.mxu0 0.0
  %4076 = vmatpush1.msra.mxu0 0.0
  %4077 = vmatprep.subr.mxu0 0.0
  %4078 = vmatpush1.msra.mxu0 0.0
  %4079 = vmatprep.subr.mxu0 0.0
  %4080 = vmatpush1.msra.mxu0 0.0
  %4081 = vmatprep.subr.mxu0 0.0
  %4082 = vmatpush1.msra.mxu0 0.0
  %4083 = vmatprep.subr.mxu0 0.0
  %4084 = vmatpush1.msra.mxu0 0.0
  %4085 = vmatprep.subr.mxu0 0.0
  %4086 = vmatpush1.msra.mxu0 0.0
  %4087 = vmatprep.mubr.f32.mxu0 0.0
  %4088 = vmatmul.mubr.f32.gmra.mrb[0].mxu0 %v4021
  %v4089 = vpop.f32.mrb[0].mxu0
  %v4090 = vadd.f32 0.0, %v4089
  %v4091 = vpop.f32.mrb[0].mxu0
  %4092 = vdwg.mxu0
  %v4093 = vadd.f32 %v4018, %v4090
  %v4094 = vxor.u32 %v4093, 2147483648
  %v4095 = vmul.f32 %v4094, 1.442695
  %v4096 = vpow.pop %v4095
  %v4097 = vadd.f32 %v4096, 1.0
  %v4098 = vrcp.pop %v4097
  %v4099 = vmul.f32 1.0, %v4098
  %v4100 = vtanh.pop %v4093
  %v4101 = vld [vmem:[#allocation5] sm:$0xff]
  %4103 = vrot.lane.b32.xlu0 %v4101, 32
  %v4104 = vpop.permute.xlu0 %4103
  %v4106 = vmul.f32 %v4099, %v4104
  %4108 = vrot.lane.b32.xlu0 %v4100, 64
  %v4109 = vpop.permute.xlu0 %4108
  %v4111 = vmul.f32 %v4099, %v4109
  %4113 = vrot.lane.b32.xlu0 %v4111, 32
  %v4114 = vpop.permute.xlu0 %4113
  %v4116 = vadd.f32 %v4106, %v4114
  %v4117 = vtanh.pop %v4116
  %4119 = vrot.lane.b32.xlu0 %v4117, 64
  %v4120 = vpop.permute.xlu0 %4119
  %v4122 = vmul.f32 %v4099, %v4120
  %4124 = vrot.lane.b32.xlu0 %v4122, 32
  %v4125 = vpop.permute.xlu0 %4124
  %4127 = vst.msk [vmem:[#allocation4] sm:$0xff] %vm190, %v4125
  %4129 = vrot.lane.b32.xlu0 %v4116, 96
  %v4130 = vpop.permute.xlu0 %4129
  %4132 = vst.msk [vmem:[#allocation5] sm:$0xff] %vm190, %v4130
  %v4133 = vld [vmem:[#allocation4] sm:$0xff]
  %v4134 = vld [vmem:[%s7] sm:$0xff]
  %v4135 = vld [vmem:[%s7 + $0x8] sm:$0xff]
  %v4136 = vld [vmem:[%s7 + $0x10] sm:$0xff]
  %v4137 = vld [vmem:[%s7 + $0x18] sm:$0xff]
  %v4138 = vld [vmem:[%s8] sm:$0x1]
  %v4140 = vlaneseq
  %v4141 = vshrl.u32 %v4140, 7
  %v4142 = vsub.s32 0, %v4141
  %v4143 = vrot.slane %v4138, %v4142
  %v4146 = vsel %vm190, %v4133, 0
  %4148 = vmatprep.subr.mxu0 0.0
  %4149 = vmatpush1.msra.mxu0 %v4134
  %4150 = vmatprep.subr.mxu0 0.0
  %4151 = vmatpush1.msra.mxu0 %v4135
  %4152 = vmatprep.subr.mxu0 0.0
  %4153 = vmatpush1.msra.mxu0 %v4136
  %4154 = vmatprep.subr.mxu0 0.0
  %4155 = vmatpush1.msra.mxu0 %v4137
  %4156 = vmatprep.subr.mxu0 0.0
  %4157 = vmatpush1.msra.mxu0 0.0
  %4158 = vmatprep.subr.mxu0 0.0
  %4159 = vmatpush1.msra.mxu0 0.0
  %4160 = vmatprep.subr.mxu0 0.0
  %4161 = vmatpush1.msra.mxu0 0.0
  %4162 = vmatprep.subr.mxu0 0.0
  %4163 = vmatpush1.msra.mxu0 0.0
  %4164 = vmatprep.subr.mxu0 0.0
  %4165 = vmatpush1.msra.mxu0 0.0
  %4166 = vmatprep.subr.mxu0 0.0
  %4167 = vmatpush1.msra.mxu0 0.0
  %4168 = vmatprep.subr.mxu0 0.0
  %4169 = vmatpush1.msra.mxu0 0.0
  %4170 = vmatprep.subr.mxu0 0.0
  %4171 = vmatpush1.msra.mxu0 0.0
  %4172 = vmatprep.subr.mxu0 0.0
  %4173 = vmatpush1.msra.mxu0 0.0
  %4174 = vmatprep.subr.mxu0 0.0
  %4175 = vmatpush1.msra.mxu0 0.0
  %4176 = vmatprep.subr.mxu0 0.0
  %4177 = vmatpush1.msra.mxu0 0.0
  %4178 = vmatprep.subr.mxu0 0.0
  %4179 = vmatpush1.msra.mxu0 0.0
  %4180 = vmatprep.subr.mxu0 0.0
  %4181 = vmatpush1.msra.mxu0 0.0
  %4182 = vmatprep.subr.mxu0 0.0
  %4183 = vmatpush1.msra.mxu0 0.0
  %4184 = vmatprep.subr.mxu0 0.0
  %4185 = vmatpush1.msra.mxu0 0.0
  %4186 = vmatprep.subr.mxu0 0.0
  %4187 = vmatpush1.msra.mxu0 0.0
  %4188 = vmatprep.subr.mxu0 0.0
  %4189 = vmatpush1.msra.mxu0 0.0
  %4190 = vmatprep.subr.mxu0 0.0
  %4191 = vmatpush1.msra.mxu0 0.0
  %4192 = vmatprep.subr.mxu0 0.0
  %4193 = vmatpush1.msra.mxu0 0.0
  %4194 = vmatprep.subr.mxu0 0.0
  %4195 = vmatpush1.msra.mxu0 0.0
  %4196 = vmatprep.subr.mxu0 0.0
  %4197 = vmatpush1.msra.mxu0 0.0
  %4198 = vmatprep.subr.mxu0 0.0
  %4199 = vmatpush1.msra.mxu0 0.0
  %4200 = vmatprep.subr.mxu0 0.0
  %4201 = vmatpush1.msra.mxu0 0.0
  %4202 = vmatprep.subr.mxu0 0.0
  %4203 = vmatpush1.msra.mxu0 0.0
  %4204 = vmatprep.subr.mxu0 0.0
  %4205 = vmatpush1.msra.mxu0 0.0
  %4206 = vmatprep.subr.mxu0 0.0
  %4207 = vmatpush1.msra.mxu0 0.0
  %4208 = vmatprep.subr.mxu0 0.0
  %4209 = vmatpush1.msra.mxu0 0.0
  %4210 = vmatprep.subr.mxu0 0.0
  %4211 = vmatpush1.msra.mxu0 0.0
  %4212 = vmatprep.mubr.f32.mxu0 0.0
  %4213 = vmatmul.mubr.f32.gmra.mrb[0].mxu0 %v4146
  %v4214 = vpop.f32.mrb[0].mxu0
  %v4215 = vadd.f32 %v4143, %v4214
  %v4216 = vpop.f32.mrb[0].mxu0
  %4217 = vdwg.mxu0
  %vm4218 = vcmask 64512
  %4219 = vst.msk [vmem:[%s9] sm:$0xff] %vm4218, %v4215
  // Predicated region
  $region38: #{lstm_with_scalar2vec_forward.1} parent=0 // pred_check
    _
  $region39: #{lstm_with_scalar2vec_forward.1} parent=0 // pred_check_branch
    %4221 = sbr.rel (0) target = $region41
  $region40: #{lstm_with_scalar2vec_forward.1} parent=0 // pred_region
    _
  $region41: #{lstm_with_scalar2vec_forward.1} parent=0 // pred_fallthru
    _
  // Predicated region
  $region42: #{lstm_with_scalar2vec_forward.1} parent=0 // pred_check
    _
  $region43: #{lstm_with_scalar2vec_forward.1} parent=0 // pred_check_branch
    %4223 = sbr.rel (0) target = $region45
  $region44: #{lstm_with_scalar2vec_forward.1} parent=0 // pred_region
    _
  $region45: #{lstm_with_scalar2vec_forward.1} parent=0 // pred_fallthru
    _

</llo_original>
